<compile_context>
chip_gen: v6e
topology: v6e:2x2x1
jax: 0.10.0
libtpu: 0.0.40
codegen_flags: <defaults>
</compile_context>

<pallas_src>
import functools

import jax
import jax.numpy as jnp
from jax.experimental import pallas as pl
from jax.experimental.pallas import tpu as pltpu


# ----------------------------------------------------------------------------
# Per-generation budgets / tile pickers
# ----------------------------------------------------------------------------
def _default_vmem_limit():
    """Scoped-VMEM budget ~= 3/4 of the chip's VMEM (v5e/v6e: 96 MiB, v7x: 48 MiB)."""
    try:
        cap = int(pltpu.get_tpu_info().vmem_capacity_bytes)
    except Exception:                       # conservative, v7x-safe fallback
        cap = 64 * 1024 * 1024
    return max(32 * 1024 * 1024, (cap * 3) // 4)


_VMEM_LIMIT = _default_vmem_limit()


def _pick_time_chunk(T, B, H, budget):
    """Largest time chunk in {8,16,32} whose recurrence working set fits the budget."""
    tc = 8
    for cand in (16, 32):
        need = (2 * cand * B * 4 * H * 2    # bf16 pregates blocks (double buffered)
                + 2 * cand * B * H * 4      # y blocks (worst case f32, double buffered)
                + 2 * H * 4 * H * 2         # resident W_hh^T (double buffered)
                + 2 * B * H * 4)            # f32 h/c scratch
        if cand <= max(T, 8) and need <= (budget * 7) // 10:
            tc = cand
    return tc


def _pick_input_tiles(n_rows, k_in, n_in, G, budget):
    """(row chunk, gate tile) for the input projection, bounded by the VMEM budget."""
    GT = next((c for c in (512, 256, 128) if G % c == 0), G)
    fixed = 2 * (n_in * k_in * GT * 2 + GT * 4)          # weight + bias blocks (x2 buffers)
    for RN in (1024, 512, 256, 128, 64):
        if n_rows % RN:
            continue
        need = fixed + 2 * (n_in * RN * k_in * 2 + RN * GT * 2)
        if need <= (budget * 8) // 10:
            return RN, GT
    return (64 if n_rows % 64 == 0 else n_rows), GT


# ----------------------------------------------------------------------------
# Kernel 1: hoisted input projection (both directions, gate-tiled, bf16 output)
# ----------------------------------------------------------------------------
def _input_projection(x, w, bias):
    """pregates = sum_i x_i @ W_i + (b_ih + b_hh) for both directions.

    x    (n_in, N, K)     bf16   n_in = 1 (layer 0) or 2 (fwd/bwd feature halves)
    w    (n_in, 2, K, 4H) bf16   axis 1 = output direction
    bias (2, 1, 4H)       f32
    ->   pregates (2, N, 4H) bf16 (f32 accumulation, cast on store)
    """
    n_in, N, K = x.shape
    G = w.shape[-1]
    RN, GT = _pick_input_tiles(N, K, n_in, G, _VMEM_LIMIT)

    def kernel(x_ref, w_ref, b_ref, o_ref):
        acc = jnp.dot(x_ref[0], w_ref[0],
                      preferred_element_type=jnp.float32) + b_ref[...]
        for i in range(1, n_in):
            acc = acc + jnp.dot(x_ref[i], w_ref[i],
                                preferred_element_type=jnp.float32)
        o_ref[...] = acc.astype(o_ref.dtype)

    grid_spec = pltpu.PrefetchScalarGridSpec(
        num_scalar_prefetch=0,
        # rows outer -> the X block is revisited (DMA'd once) across (d, g).
        grid=(N // RN, 2, G // GT),
        in_specs=[
            pl.BlockSpec((n_in, RN, K), lambda r, d, g: (0, r, 0)),
            pl.BlockSpec((n_in, None, K, GT), lambda r, d, g: (0, d, 0, g)),
            pl.BlockSpec((None, 1, GT), lambda r, d, g: (d, 0, g)),
        ],
        out_specs=pl.BlockSpec((None, RN, GT), lambda r, d, g: (d, r, g)),
    )
    return pl.pallas_call(
        kernel,
        out_shape=jax.ShapeDtypeStruct((2, N, G), jnp.bfloat16),
        grid_spec=grid_spec,
        compiler_params=pltpu.CompilerParams(
            dimension_semantics=("parallel", "parallel", "parallel"),
            vmem_limit_bytes=_VMEM_LIMIT),
    )(x, w, bias)


# ----------------------------------------------------------------------------
# Kernel 2: fused bidirectional recurrence over time chunks
# ----------------------------------------------------------------------------
def _bidir_lstm_kernel(len_ref, pg_ref, whh_ref, y_ref, hN_ref, cN_ref,
                       h_sc, c_sc):
    d = pl.program_id(0)                  # 0 = forward, 1 = backward
    tb = pl.program_id(1)                 # time-chunk grid index
    n_tb = pl.num_programs(1)

    @pl.when(tb == 0)
    def _():
        h_sc[...] = jnp.zeros_like(h_sc)
        c_sc[...] = jnp.zeros_like(c_sc)

    lengths = len_ref[...]                # (B, 1) int32, resident
    whh = whh_ref[...]                    # (H, 4H) bf16, resident per direction
    Tc, _, H = y_ref.shape

    reverse = d == 1
    chunk = jnp.where(reverse, n_tb - 1 - tb, tb)   # chunk selected by the index_map
    base = chunk * Tc                               # its global start time

    # NOTE(perf): for tiny padded batches (<=64 rows) a reoriented
    # gates^T = W_hh @ h^T formulation (or explicit matmul_push_rhs staging)
    # would reduce MXU weight pushes on this serial path; not done here.
    def step_fn(step, carry):
        l = jnp.where(reverse, Tc - 1 - step, step)     # local time index
        pg = pg_ref[l]                                  # (B, 4H) bf16 pregates
        h = h_sc[...]
        c = c_sc[...]
        gates = pg + jnp.dot(h.astype(whh.dtype), whh,
                             preferred_element_type=jnp.float32)   # f32
        i_g = jax.nn.sigmoid(gates[:, 0 * H:1 * H])
        f_g = jax.nn.sigmoid(gates[:, 1 * H:2 * H])
        g_g = jnp.tanh(gates[:, 2 * H:3 * H])
        o_g = jax.nn.sigmoid(gates[:, 3 * H:4 * H])
        c_new = f_g * c + i_g * g_g
        h_new = o_g * jnp.tanh(c_new)
        valid = (base + l) < lengths                    # (B, 1) bool
        h_sc[...] = jnp.where(valid, h_new, h)          # freeze finished rows
        c_sc[...] = jnp.where(valid, c_new, c)
        y_ref[l] = jnp.where(valid, h_new, 0.0).astype(y_ref.dtype)
        return carry

    # fori_loop(unroll=True): loop boundary for the scheduler, bodies unrolled.
    jax.lax.fori_loop(0, Tc, step_fn, 0, unroll=True)

    @pl.when(tb == n_tb - 1)
    def _():
        hN_ref[...] = h_sc[...]
        cN_ref[...] = c_sc[...]


def _bidir_recurrence(lens_col, pregates, w_hh, tc, y_dtype):
    """lens_col (B,1) i32, pregates (2,Tp,B,4H) bf16, w_hh (2,H,4H) bf16
    -> y (2,Tp,B,H) y_dtype, h_n (2,B,H) f32, c_n (2,B,H) f32."""
    _, Tp, B, G = pregates.shape
    H = w_hh.shape[1]
    n_tb = Tp // tc
    # Direction 0 visits time-chunks 0..n-1, direction 1 visits n-1..0.
    rev = lambda d, t: d * (n_tb - 1) + (1 - 2 * d) * t

    grid_spec = pltpu.PrefetchScalarGridSpec(
        num_scalar_prefetch=0,
        grid=(2, n_tb),
        in_specs=[
            pl.BlockSpec((B, 1), lambda d, t: (0, 0)),                       # lengths
            pl.BlockSpec((None, tc, B, G), lambda d, t: (d, rev(d, t), 0, 0)),
            # NOTE(perf): pipeline_mode=pl.Buffered(1) would reclaim the dead
            # second buffer of this constant-index W_hh block on v7x.
            pl.BlockSpec((None, H, G), lambda d, t: (d, 0, 0)),              # W_hh^T
        ],
        out_specs=[
            pl.BlockSpec((None, tc, B, H), lambda d, t: (d, rev(d, t), 0, 0)),
            pl.BlockSpec((None, B, H), lambda d, t: (d, 0, 0)),              # h_n
            pl.BlockSpec((None, B, H), lambda d, t: (d, 0, 0)),              # c_n
        ],
        scratch_shapes=[
            pltpu.VMEM((B, H), jnp.float32),     # h state
            pltpu.VMEM((B, H), jnp.float32),     # c state
        ],
    )
    return pl.pallas_call(
        _bidir_lstm_kernel,
        out_shape=(
            jax.ShapeDtypeStruct((2, Tp, B, H), y_dtype),
            jax.ShapeDtypeStruct((2, B, H), jnp.float32),
            jax.ShapeDtypeStruct((2, B, H), jnp.float32),
        ),
        grid_spec=grid_spec,
        compiler_params=pltpu.CompilerParams(
            dimension_semantics=("parallel", "arbitrary"),
            vmem_limit_bytes=_VMEM_LIMIT),
    )(lens_col, pregates, w_hh)


# ----------------------------------------------------------------------------
# Parameters + forward pass
# ----------------------------------------------------------------------------
def init_lstm_params(key, input_dim, hidden_dim, num_layers):
    """PyTorch-style init U(-1/sqrt(H), 1/sqrt(H)); gate order i, f, g, o.

    Per layer:
      W_ih^T packed as (n_in, 2, chunk, 4H) bf16 where n_in = 1 for layer 0
        (chunk = input_dim) and n_in = 2 for deeper layers (chunk = H: forward
        / backward halves of the 2H input features), axis 1 = direction.
      W_hh^T (2, H, 4H) bf16,  b_ih + b_hh (2, 1, 4H) f32.
    """
    k = 1.0 / jnp.sqrt(hidden_dim)
    params = []
    for layer in range(num_layers):
        d_in = input_dim if layer == 0 else 2 * hidden_dim
        n_in = 1 if layer == 0 else 2
        chunk = d_in // n_in
        w_ih_d, w_hh_d, b_d = [], [], []
        for _direction in range(2):       # 0 = forward, 1 = backward
            key, k1, k2, k3, k4 = jax.random.split(key, 5)
            w_ih = jax.random.uniform(k1, (4 * hidden_dim, d_in), jnp.float32, -k, k)
            w_hh = jax.random.uniform(k2, (4 * hidden_dim, hidden_dim), jnp.float32, -k, k)
            b_ih = jax.random.uniform(k3, (4 * hidden_dim,), jnp.float32, -k, k)
            b_hh = jax.random.uniform(k4, (4 * hidden_dim,), jnp.float32, -k, k)
            w_ih_d.append(w_ih.T.reshape(n_in, chunk, 4 * hidden_dim))
            w_hh_d.append(w_hh.T)
            b_d.append((b_ih + b_hh).reshape(1, 4 * hidden_dim))
        params.append((
            jnp.stack(w_ih_d, axis=1).astype(jnp.bfloat16),   # (n_in, 2, chunk, 4H)
            jnp.stack(w_hh_d).astype(jnp.bfloat16),           # (2, H, 4H)
            jnp.stack(b_d),                                   # (2, 1, 4H) f32
        ))
    return params


@functools.partial(jax.jit, static_argnames=("num_layers", "hidden_dim"))
def lstm_forward(word_embeds, word_seq_lengths, params, num_layers, hidden_dim):
    """word_embeds (B, T, D) f32 batch_first, word_seq_lengths (B,) int.
    Returns (result, [h_n, c_n]): result (B, T, 2H), h_n/c_n (2L, B, H)."""
    H = hidden_dim
    lengths = word_seq_lengths.reshape(-1).astype(jnp.int32)
    B, T, D = word_embeds.shape

    Bp = -(-B // 8) * 8                                # sublane-align the batch
    tc = _pick_time_chunk(T, Bp, H, _VMEM_LIMIT)       # per-generation time chunk
    Tp = -(-T // tc) * tc                              # whole number of time chunks

    x = jnp.transpose(word_embeds, (1, 0, 2))                    # (T, B, D)
    x = jnp.pad(x, ((0, Tp - T), (0, Bp - B), (0, 0)))
    lens_col = jnp.pad(lengths, (0, Bp - B)).reshape(Bp, 1)      # pad rows: len 0

    N = Tp * Bp
    layer_in = x.reshape(1, N, D).astype(jnp.bfloat16)           # (n_in, N, K)
    h_list, c_list = [], []
    y = None
    for layer in range(num_layers):
        w_ih, w_hh, bias = params[layer]
        pregates = _input_projection(layer_in, w_ih, bias)       # (2, N, 4H) bf16
        pregates = pregates.reshape(2, Tp, Bp, 4 * H)
        y_dtype = jnp.float32 if layer == num_layers - 1 else jnp.bfloat16
        y, h_n, c_n = _bidir_recurrence(lens_col, pregates, w_hh, tc, y_dtype)
        h_list.append(h_n)
        c_list.append(c_n)
        # Next layer consumes y in its native (2, N, H) layout: free reshape,
        # no transpose / concat / astype pass over the big activation tensor.
        layer_in = y.reshape(2, N, H)

    # Final layer only: (2, Tp, Bp, H) -> (Bp, Tp, 2H) batch-first concat.
    result = jnp.transpose(y, (2, 1, 0, 3)).reshape(Bp, Tp, 2 * H)[:B, :T]
    h_n = jnp.concatenate(h_list, axis=0)[:, :B]                 # (2L, B, H)
    c_n = jnp.concatenate(c_list, axis=0)[:, :B]
    return result, [h_n, c_n]


# ----------------------------------------------------------------------------
# Pure-JAX reference (packed-sequence bidirectional LSTM) for validation
# ----------------------------------------------------------------------------
def _direction_scan(inp, mask, w_ihT, w_hhT, b, H, reverse):
    xs = jnp.transpose(inp, (1, 0, 2))                 # (T, B, Din)
    ms = jnp.transpose(mask, (1, 0))[:, :, None]       # (T, B, 1)
    if reverse:
        xs, ms = xs[::-1], ms[::-1]
    B = inp.shape[0]

    def step(carry, xm):
        h, c = carry
        xt, m = xm
        g = xt @ w_ihT + h @ w_hhT + b
        i_g = jax.nn.sigmoid(g[:, :H])
        f_g = jax.nn.sigmoid(g[:, H:2 * H])
        g_g = jnp.tanh(g[:, 2 * H:3 * H])
        o_g = jax.nn.sigmoid(g[:, 3 * H:])
        c_new = f_g * c + i_g * g_g
        h_new = o_g * jnp.tanh(c_new)
        h = m * h_new + (1 - m) * h
        c = m * c_new + (1 - m) * c
        return (h, c), h * m

    init = (jnp.zeros((B, H), jnp.float32), jnp.zeros((B, H), jnp.float32))
    (hT, cT), ys = jax.lax.scan(step, init, (xs, ms))
    if reverse:
        ys = ys[::-1]
    return jnp.transpose(ys, (1, 0, 2)), hT, cT        # (B, T, H)


def _reference_lstm(x, lengths, params, num_layers, H):
    B, T, _ = x.shape
    mask = (jnp.arange(T)[None, :] < lengths.reshape(-1, 1)).astype(jnp.float32)
    inp = x
    hs, cs = [], []
    for layer in range(num_layers):
        w_pack, w_hh, bias = params[layer]
        n_in = w_pack.shape[0]
        outs = []
        for d in range(2):
            w_ihT = jnp.concatenate([w_pack[i, d] for i in range(n_in)],
                                    axis=0).astype(jnp.float32)
            y, hT, cT = _direction_scan(inp, mask, w_ihT,
                                        w_hh[d].astype(jnp.float32),
                                        bias[d, 0], H, reverse=(d == 1))
            outs.append(y)
            hs.append(hT)
            cs.append(cT)
        inp = jnp.concatenate(outs, axis=-1)
    return inp, jnp.stack(hs), jnp.stack(cs)


if __name__ == "__main__":
    B, T, INPUT_DIM, HIDDEN_DIM, NUM_LAYERS = 4, 8, 16, 32, 2

    key = jax.random.PRNGKey(0)
    k_x, k_p = jax.random.split(key)
    word_embeds = jax.random.normal(k_x, (B, T, INPUT_DIM), dtype=jnp.float32)
    # all lengths > 0, max length == T (so shapes match the torch reference)
    word_seq_lengths = jnp.array([T, 5, 3, 6], dtype=jnp.int32)

    params = init_lstm_params(k_p, INPUT_DIM, HIDDEN_DIM, NUM_LAYERS)

    result, hidden = lstm_forward(word_embeds, word_seq_lengths, params,
                                  NUM_LAYERS, HIDDEN_DIM)
    result = jax.block_until_ready(result)
    h_n = jax.block_until_ready(hidden[0])
    c_n = jax.block_until_ready(hidden[1])

    assert result.shape == (B, T, 2 * HIDDEN_DIM)
    assert h_n.shape == (2 * NUM_LAYERS, B, HIDDEN_DIM)
    assert c_n.shape == (2 * NUM_LAYERS, B, HIDDEN_DIM)
    assert bool(jnp.all(jnp.isfinite(result)))
    # pad_packed_sequence semantics: positions past each length are zero
    t_idx = jnp.arange(T)[None, :, None]
    pad_mask = t_idx >= word_seq_lengths[:, None, None]
    assert bool(jnp.all(jnp.where(pad_mask, result, 0.0) == 0.0))

    # Numerical check vs. a pure-JAX reference using the same (bf16) weights.
    ref_out, ref_h, ref_c = _reference_lstm(word_embeds, word_seq_lengths,
                                            params, NUM_LAYERS, HIDDEN_DIM)
    assert float(jnp.max(jnp.abs(result - ref_out))) < 0.1
    assert float(jnp.max(jnp.abs(h_n - ref_h))) < 0.1
    assert float(jnp.max(jnp.abs(c_n - ref_c))) < 0.1

    print("KERNEL_OK")
</pallas_src>

<mosaic_0001>
module attributes {stable_mosaic.version = 11 : i64} {
  func.func @kernel(%arg0: i32, %arg1: i32, %arg2: i32, %arg3: memref<1x64x16xbf16, #tpu.memory_space<vmem>>, %arg4: memref<1x1x16x128xbf16, #tpu.memory_space<vmem>>, %arg5: memref<1x1x128xf32, #tpu.memory_space<vmem>>, %arg6: memref<1x64x128xbf16, #tpu.memory_space<vmem>>) attributes {dimension_semantics = [#tpu.dimension_semantics<parallel>, #tpu.dimension_semantics<parallel>, #tpu.dimension_semantics<parallel>], iteration_bounds = array<i64: 1, 2, 1>, scalar_prefetch = 0 : i64, scratch_operands = 0 : i64, tpu.core_type = #tpu.core_type<tc>, window_params = [{transform_indices = @transform_0, window_bounds = array<i64: 1, 64, 16>}, {transform_indices = @transform_1, window_bounds = array<i64: 1, 1, 16, 128>}, {transform_indices = @transform_2, window_bounds = array<i64: 1, 1, 128>}, {transform_indices = @transform_3, window_bounds = array<i64: 1, 64, 128>}]} {
    %c0 = arith.constant 0 : index
    %c0_0 = arith.constant 0 : index
    %c0_1 = arith.constant 0 : index
    %0 = vector.load %arg3[%c0, %c0_0, %c0_1] : memref<1x64x16xbf16, #tpu.memory_space<vmem>>, vector<1x64x16xbf16>
    %1 = vector.shape_cast %0 : vector<1x64x16xbf16> to vector<64x16xbf16>
    %c0_2 = arith.constant 0 : index
    %c0_3 = arith.constant 0 : index
    %c0_4 = arith.constant 0 : index
    %c0_5 = arith.constant 0 : index
    %2 = vector.load %arg4[%c0_2, %c0_3, %c0_4, %c0_5] : memref<1x1x16x128xbf16, #tpu.memory_space<vmem>>, vector<1x1x16x128xbf16>
    %3 = vector.shape_cast %2 : vector<1x1x16x128xbf16> to vector<16x128xbf16>
    %cst = arith.constant dense<0.000000e+00> : vector<64x128xf32>
    %4 = tpu.matmul %1, %3, %cst {dimension_numbers = #tpu.dot_dimension_numbers<[1], [0], [0], [1], [0, 0, 1, 1], [], []>} : vector<64x16xbf16>, vector<16x128xbf16>, vector<64x128xf32> -> vector<64x128xf32>
    %c0_6 = arith.constant 0 : index
    %c0_7 = arith.constant 0 : index
    %c0_8 = arith.constant 0 : index
    %5 = vector.load %arg5[%c0_6, %c0_7, %c0_8] : memref<1x1x128xf32, #tpu.memory_space<vmem>>, vector<1x1x128xf32>
    %6 = vector.shape_cast %5 : vector<1x1x128xf32> to vector<1x128xf32>
    %7 = vector.broadcast %6 : vector<1x128xf32> to vector<64x128xf32>
    %8 = arith.addf %4, %7 : vector<64x128xf32>
    %9 = arith.truncf %8 : vector<64x128xf32> to vector<64x128xbf16>
    %c0_9 = arith.constant 0 : index
    %c0_10 = arith.constant 0 : index
    %c0_11 = arith.constant 0 : index
    %10 = vector.load %arg6[%c0_9, %c0_10, %c0_11] : memref<1x64x128xbf16, #tpu.memory_space<vmem>>, vector<1x64x128xbf16>
    %11 = vector.shape_cast %10 : vector<1x64x128xbf16> to vector<64x128xbf16>
    %12 = vector.shape_cast %9 : vector<64x128xbf16> to vector<1x64x128xbf16>
    tpu.vector_store %arg6[%c0_9, %c0_10, %c0_11], %12 {strides = array<i32>} : memref<1x64x128xbf16, #tpu.memory_space<vmem>>, vector<1x64x128xbf16>,
    return
  }
  func.func @transform_0(%arg0: i32, %arg1: i32, %arg2: i32) -> (i32, i32, i32) {
    %c0_i32 = arith.constant 0 : i32
    %c0_i32_0 = arith.constant 0 : i32
    %c0_i32_1 = arith.constant 0 : i32
    return %c0_i32, %arg0, %c0_i32_0 : i32, i32, i32
  }
  func.func @transform_1(%arg0: i32, %arg1: i32, %arg2: i32) -> (i32, i32, i32, i32) {
    %c0_i32 = arith.constant 0 : i32
    %c0_i32_0 = arith.constant 0 : i32
    %c0_i32_1 = arith.constant 0 : i32
    return %c0_i32, %arg1, %c0_i32_0, %arg2 : i32, i32, i32, i32
  }
  func.func @transform_2(%arg0: i32, %arg1: i32, %arg2: i32) -> (i32, i32, i32) {
    %c0_i32 = arith.constant 0 : i32
    %c0_i32_0 = arith.constant 0 : i32
    return %arg1, %c0_i32, %arg2 : i32, i32, i32
  }
  func.func @transform_3(%arg0: i32, %arg1: i32, %arg2: i32) -> (i32, i32, i32) {
    %c0_i32 = arith.constant 0 : i32
    return %arg1, %arg0, %arg2 : i32, i32, i32
  }
}

module attributes {stable_mosaic.version = 11 : i64} {
  func.func @kernel(%arg0: i32, %arg1: i32, %arg2: i32, %arg3: memref<2x64x32xbf16, #tpu.memory_space<vmem>>, %arg4: memref<2x1x32x128xbf16, #tpu.memory_space<vmem>>, %arg5: memref<1x1x128xf32, #tpu.memory_space<vmem>>, %arg6: memref<1x64x128xbf16, #tpu.memory_space<vmem>>) attributes {dimension_semantics = [#tpu.dimension_semantics<parallel>, #tpu.dimension_semantics<parallel>, #tpu.dimension_semantics<parallel>], iteration_bounds = array<i64: 1, 2, 1>, scalar_prefetch = 0 : i64, scratch_operands = 0 : i64, tpu.core_type = #tpu.core_type<tc>, window_params = [{transform_indices = @transform_0, window_bounds = array<i64: 2, 64, 32>}, {transform_indices = @transform_1, window_bounds = array<i64: 2, 1, 32, 128>}, {transform_indices = @transform_2, window_bounds = array<i64: 1, 1, 128>}, {transform_indices = @transform_3, window_bounds = array<i64: 1, 64, 128>}]} {
    %c0 = arith.constant 0 : index
    %c0_0 = arith.constant 0 : index
    %c0_1 = arith.constant 0 : index
    %0 = vector.load %arg3[%c0, %c0_0, %c0_1] : memref<2x64x32xbf16, #tpu.memory_space<vmem>>, vector<1x64x32xbf16>
    %1 = vector.shape_cast %0 : vector<1x64x32xbf16> to vector<64x32xbf16>
    %c0_2 = arith.constant 0 : index
    %c0_3 = arith.constant 0 : index
    %c0_4 = arith.constant 0 : index
    %c0_5 = arith.constant 0 : index
    %2 = vector.load %arg4[%c0_2, %c0_3, %c0_4, %c0_5] : memref<2x1x32x128xbf16, #tpu.memory_space<vmem>>, vector<1x1x32x128xbf16>
    %3 = vector.shape_cast %2 : vector<1x1x32x128xbf16> to vector<32x128xbf16>
    %cst = arith.constant dense<0.000000e+00> : vector<64x128xf32>
    %4 = tpu.matmul %1, %3, %cst {dimension_numbers = #tpu.dot_dimension_numbers<[1], [0], [0], [1], [0, 0, 1, 1], [], []>} : vector<64x32xbf16>, vector<32x128xbf16>, vector<64x128xf32> -> vector<64x128xf32>
    %c0_6 = arith.constant 0 : index
    %c0_7 = arith.constant 0 : index
    %c0_8 = arith.constant 0 : index
    %5 = vector.load %arg5[%c0_6, %c0_7, %c0_8] : memref<1x1x128xf32, #tpu.memory_space<vmem>>, vector<1x1x128xf32>
    %6 = vector.shape_cast %5 : vector<1x1x128xf32> to vector<1x128xf32>
    %7 = vector.broadcast %6 : vector<1x128xf32> to vector<64x128xf32>
    %8 = arith.addf %4, %7 : vector<64x128xf32>
    %c1 = arith.constant 1 : index
    %c0_9 = arith.constant 0 : index
    %c0_10 = arith.constant 0 : index
    %9 = vector.load %arg3[%c1, %c0_9, %c0_10] : memref<2x64x32xbf16, #tpu.memory_space<vmem>>, vector<1x64x32xbf16>
    %10 = vector.shape_cast %9 : vector<1x64x32xbf16> to vector<64x32xbf16>
    %c1_11 = arith.constant 1 : index
    %c0_12 = arith.constant 0 : index
    %c0_13 = arith.constant 0 : index
    %c0_14 = arith.constant 0 : index
    %11 = vector.load %arg4[%c1_11, %c0_12, %c0_13, %c0_14] : memref<2x1x32x128xbf16, #tpu.memory_space<vmem>>, vector<1x1x32x128xbf16>
    %12 = vector.shape_cast %11 : vector<1x1x32x128xbf16> to vector<32x128xbf16>
    %cst_15 = arith.constant dense<0.000000e+00> : vector<64x128xf32>
    %13 = tpu.matmul %10, %12, %cst_15 {dimension_numbers = #tpu.dot_dimension_numbers<[1], [0], [0], [1], [0, 0, 1, 1], [], []>} : vector<64x32xbf16>, vector<32x128xbf16>, vector<64x128xf32> -> vector<64x128xf32>
    %14 = arith.addf %8, %13 : vector<64x128xf32>
    %15 = arith.truncf %14 : vector<64x128xf32> to vector<64x128xbf16>
    %c0_16 = arith.constant 0 : index
    %c0_17 = arith.constant 0 : index
    %c0_18 = arith.constant 0 : index
    %16 = vector.load %arg6[%c0_16, %c0_17, %c0_18] : memref<1x64x128xbf16, #tpu.memory_space<vmem>>, vector<1x64x128xbf16>
    %17 = vector.shape_cast %16 : vector<1x64x128xbf16> to vector<64x128xbf16>
    %18 = vector.shape_cast %15 : vector<64x128xbf16> to vector<1x64x128xbf16>
    tpu.vector_store %arg6[%c0_16, %c0_17, %c0_18], %18 {strides = array<i32>} : memref<1x64x128xbf16, #tpu.memory_space<vmem>>, vector<1x64x128xbf16>,
    return
  }
  func.func @transform_0(%arg0: i32, %arg1: i32, %arg2: i32) -> (i32, i32, i32) {
    %c0_i32 = arith.constant 0 : i32
    %c0_i32_0 = arith.constant 0 : i32
    %c0_i32_1 = arith.constant 0 : i32
    return %c0_i32, %arg0, %c0_i32_0 : i32, i32, i32
  }
  func.func @transform_1(%arg0: i32, %arg1: i32, %arg2: i32) -> (i32, i32, i32, i32) {
    %c0_i32 = arith.constant 0 : i32
    %c0_i32_0 = arith.constant 0 : i32
    %c0_i32_1 = arith.constant 0 : i32
    return %c0_i32, %arg1, %c0_i32_0, %arg2 : i32, i32, i32, i32
  }
  func.func @transform_2(%arg0: i32, %arg1: i32, %arg2: i32) -> (i32, i32, i32) {
    %c0_i32 = arith.constant 0 : i32
    %c0_i32_0 = arith.constant 0 : i32
    return %arg1, %c0_i32, %arg2 : i32, i32, i32
  }
  func.func @transform_3(%arg0: i32, %arg1: i32, %arg2: i32) -> (i32, i32, i32) {
    %c0_i32 = arith.constant 0 : i32
    return %arg1, %arg0, %arg2 : i32, i32, i32
  }
}

module attributes {stable_mosaic.version = 11 : i64} {
  func.func @_bidir_lstm_kernel(%arg0: i32, %arg1: i32, %arg2: memref<8x1xi32, #tpu.memory_space<vmem>>, %arg3: memref<1x8x8x128xbf16, #tpu.memory_space<vmem>>, %arg4: memref<1x32x128xbf16, #tpu.memory_space<vmem>>, %arg5: memref<1x8x8x32xbf16, #tpu.memory_space<vmem>>, %arg6: memref<1x8x32xf32, #tpu.memory_space<vmem>>, %arg7: memref<1x8x32xf32, #tpu.memory_space<vmem>>, %arg8: memref<8x32xf32, #tpu.memory_space<vmem>>, %arg9: memref<8x32xf32, #tpu.memory_space<vmem>>) attributes {dimension_semantics = [#tpu.dimension_semantics<parallel>, #tpu.dimension_semantics<arbitrary>], iteration_bounds = array<i64: 2, 1>, scalar_prefetch = 0 : i64, scratch_operands = 2 : i64, tpu.core_type = #tpu.core_type<tc>, window_params = [{pipeline_mode = #tpu.pipeline_mode<synchronous>, transform_indices = @transform_0, window_bounds = array<i64: 8, 1>}, {transform_indices = @transform_1, window_bounds = array<i64: 1, 8, 8, 128>}, {transform_indices = @transform_2, window_bounds = array<i64: 1, 32, 128>}, {transform_indices = @transform_3, window_bounds = array<i64: 1, 8, 8, 32>}, {transform_indices = @transform_4, window_bounds = array<i64: 1, 8, 32>}, {transform_indices = @transform_5, window_bounds = array<i64: 1, 8, 32>}]} {
    %c0_i32 = arith.constant 0 : i32
    %0 = arith.cmpi eq, %arg1, %c0_i32 : i32
    %1 = arith.extui %0 : i1 to i32
    %c0_i32_0 = arith.constant 0 : i32
    %2 = arith.cmpi ne, %1, %c0_i32_0 : i32
    scf.if %2 {
      %cst_170 = arith.constant 0.000000e+00 : f32
      %461 = vector.broadcast %cst_170 : f32 to vector<8x32xf32>
      %c0_171 = arith.constant 0 : index
      %c0_172 = arith.constant 0 : index
      %462 = vector.load %arg8[%c0_171, %c0_172] : memref<8x32xf32, #tpu.memory_space<vmem>>, vector<8x32xf32>
      tpu.vector_store %arg8[%c0_171, %c0_172], %461 {strides = array<i32>} : memref<8x32xf32, #tpu.memory_space<vmem>>, vector<8x32xf32>,
      %cst_173 = arith.constant 0.000000e+00 : f32
      %463 = vector.broadcast %cst_173 : f32 to vector<8x32xf32>
      %c0_174 = arith.constant 0 : index
      %c0_175 = arith.constant 0 : index
      %464 = vector.load %arg9[%c0_174, %c0_175] : memref<8x32xf32, #tpu.memory_space<vmem>>, vector<8x32xf32>
      tpu.vector_store %arg9[%c0_174, %c0_175], %463 {strides = array<i32>} : memref<8x32xf32, #tpu.memory_space<vmem>>, vector<8x32xf32>,
    } else {
    }
    %c0 = arith.constant 0 : index
    %c0_1 = arith.constant 0 : index
    %3 = vector.load %arg2[%c0, %c0_1] : memref<8x1xi32, #tpu.memory_space<vmem>>, vector<8x1xi32>
    %c0_2 = arith.constant 0 : index
    %c0_3 = arith.constant 0 : index
    %c0_4 = arith.constant 0 : index
    %4 = vector.load %arg4[%c0_2, %c0_3, %c0_4] : memref<1x32x128xbf16, #tpu.memory_space<vmem>>, vector<1x32x128xbf16>
    %5 = vector.shape_cast %4 : vector<1x32x128xbf16> to vector<32x128xbf16>
    %c1_i32 = arith.constant 1 : i32
    %6 = arith.cmpi eq, %arg0, %c1_i32 : i32
    %c0_i32_5 = arith.constant 0 : i32
    %7 = arith.subi %c0_i32_5, %arg1 : i32
    %8 = arith.select %6, %7, %arg1 : i32
    %c8_i32 = arith.constant 8 : i32
    %9 = arith.muli %8, %c8_i32 : i32
    %c0_i32_6 = arith.constant 0 : i32
    %c7_i32 = arith.constant 7 : i32
    %10 = arith.subi %c7_i32, %c0_i32_6 : i32
    %11 = arith.select %6, %10, %c0_i32_6 : i32
    %c0_7 = arith.constant 0 : index
    %12 = arith.index_cast %11 : i32 to index
    %c0_8 = arith.constant 0 : index
    %c0_9 = arith.constant 0 : index
    %13 = vector.load %arg3[%c0_7, %12, %c0_8, %c0_9] : memref<1x8x8x128xbf16, #tpu.memory_space<vmem>>, vector<1x1x8x128xbf16>
    %14 = vector.shape_cast %13 : vector<1x1x8x128xbf16> to vector<8x128xbf16>
    %c0_10 = arith.constant 0 : index
    %c0_11 = arith.constant 0 : index
    %15 = vector.load %arg8[%c0_10, %c0_11] : memref<8x32xf32, #tpu.memory_space<vmem>>, vector<8x32xf32>
    %c0_12 = arith.constant 0 : index
    %c0_13 = arith.constant 0 : index
    %16 = vector.load %arg9[%c0_12, %c0_13] : memref<8x32xf32, #tpu.memory_space<vmem>>, vector<8x32xf32>
    %17 = arith.truncf %15 : vector<8x32xf32> to vector<8x32xbf16>
    %cst = arith.constant dense<0.000000e+00> : vector<8x128xf32>
    %18 = tpu.matmul %17, %5, %cst {dimension_numbers = #tpu.dot_dimension_numbers<[1], [0], [0], [1], [0, 0, 1, 1], [], []>} : vector<8x32xbf16>, vector<32x128xbf16>, vector<8x128xf32> -> vector<8x128xf32>
    %19 = arith.extf %14 : vector<8x128xbf16> to vector<8x128xf32>
    %20 = arith.addf %19, %18 : vector<8x128xf32>
    %21 = vector.extract_strided_slice %20 {offsets = [0, 0], sizes = [8, 32], strides = [1, 1]} : vector<8x128xf32> to vector<8x32xf32>
    %22 = arith.negf %21 : vector<8x32xf32>
    %23 = math.exp %22 : vector<8x32xf32>
    %cst_14 = arith.constant 1.000000e+00 : f32
    %24 = vector.broadcast %cst_14 : f32 to vector<8x32xf32>
    %25 = arith.addf %24, %23 : vector<8x32xf32>
    %26 = arith.divf %24, %25 : vector<8x32xf32>
    %27 = vector.extract_strided_slice %20 {offsets = [0, 32], sizes = [8, 32], strides = [1, 1]} : vector<8x128xf32> to vector<8x32xf32>
    %28 = arith.negf %27 : vector<8x32xf32>
    %29 = math.exp %28 : vector<8x32xf32>
    %cst_15 = arith.constant 1.000000e+00 : f32
    %30 = vector.broadcast %cst_15 : f32 to vector<8x32xf32>
    %31 = arith.addf %30, %29 : vector<8x32xf32>
    %32 = arith.divf %30, %31 : vector<8x32xf32>
    %33 = vector.extract_strided_slice %20 {offsets = [0, 64], sizes = [8, 32], strides = [1, 1]} : vector<8x128xf32> to vector<8x32xf32>
    %34 = math.tanh %33 : vector<8x32xf32>
    %35 = vector.extract_strided_slice %20 {offsets = [0, 96], sizes = [8, 32], strides = [1, 1]} : vector<8x128xf32> to vector<8x32xf32>
    %36 = arith.negf %35 : vector<8x32xf32>
    %37 = math.exp %36 : vector<8x32xf32>
    %cst_16 = arith.constant 1.000000e+00 : f32
    %38 = vector.broadcast %cst_16 : f32 to vector<8x32xf32>
    %39 = arith.addf %38, %37 : vector<8x32xf32>
    %40 = arith.divf %38, %39 : vector<8x32xf32>
    %41 = arith.mulf %32, %16 : vector<8x32xf32>
    %42 = arith.mulf %26, %34 : vector<8x32xf32>
    %43 = arith.addf %41, %42 : vector<8x32xf32>
    %44 = math.tanh %43 : vector<8x32xf32>
    %45 = arith.mulf %40, %44 : vector<8x32xf32>
    %46 = arith.addi %9, %11 : i32
    %47 = vector.broadcast %46 : i32 to vector<8x1xi32>
    %48 = arith.cmpi slt, %47, %3 : vector<8x1xi32>
    %49 = vector.shape_cast %48 : vector<8x1xi1> to vector<8x1xi1>
    %50 = vector.broadcast %49 : vector<8x1xi1> to vector<8x32xi1>
    %51 = arith.select %50, %45, %15 : vector<8x32xi1>, vector<8x32xf32>
    %c0_17 = arith.constant 0 : index
    %c0_18 = arith.constant 0 : index
    %52 = vector.load %arg8[%c0_17, %c0_18] : memref<8x32xf32, #tpu.memory_space<vmem>>, vector<8x32xf32>
    tpu.vector_store %arg8[%c0_17, %c0_18], %51 {strides = array<i32>} : memref<8x32xf32, #tpu.memory_space<vmem>>, vector<8x32xf32>,
    %53 = vector.shape_cast %48 : vector<8x1xi1> to vector<8x1xi1>
    %54 = vector.broadcast %53 : vector<8x1xi1> to vector<8x32xi1>
    %55 = arith.select %54, %43, %16 : vector<8x32xi1>, vector<8x32xf32>
    %c0_19 = arith.constant 0 : index
    %c0_20 = arith.constant 0 : index
    %56 = vector.load %arg9[%c0_19, %c0_20] : memref<8x32xf32, #tpu.memory_space<vmem>>, vector<8x32xf32>
    tpu.vector_store %arg9[%c0_19, %c0_20], %55 {strides = array<i32>} : memref<8x32xf32, #tpu.memory_space<vmem>>, vector<8x32xf32>,
    %cst_21 = arith.constant 0.000000e+00 : f32
    %57 = vector.shape_cast %48 : vector<8x1xi1> to vector<8x1xi1>
    %58 = vector.broadcast %57 : vector<8x1xi1> to vector<8x32xi1>
    %59 = vector.broadcast %cst_21 : f32 to vector<8x32xf32>
    %60 = arith.select %58, %45, %59 : vector<8x32xi1>, vector<8x32xf32>
    %61 = arith.truncf %60 : vector<8x32xf32> to vector<8x32xbf16>
    %c0_22 = arith.constant 0 : index
    %62 = arith.index_cast %11 : i32 to index
    %c0_23 = arith.constant 0 : index
    %c0_24 = arith.constant 0 : index
    %63 = vector.load %arg5[%c0_22, %62, %c0_23, %c0_24] : memref<1x8x8x32xbf16, #tpu.memory_space<vmem>>, vector<1x1x8x32xbf16>
    %64 = vector.shape_cast %63 : vector<1x1x8x32xbf16> to vector<8x32xbf16>
    %65 = vector.shape_cast %61 : vector<8x32xbf16> to vector<1x1x8x32xbf16>
    tpu.vector_store %arg5[%c0_22, %62, %c0_23, %c0_24], %65 {strides = array<i32>} : memref<1x8x8x32xbf16, #tpu.memory_space<vmem>>, vector<1x1x8x32xbf16>,
    %c1_i32_25 = arith.constant 1 : i32
    %c7_i32_26 = arith.constant 7 : i32
    %66 = arith.subi %c7_i32_26, %c1_i32_25 : i32
    %67 = arith.select %6, %66, %c1_i32_25 : i32
    %c0_27 = arith.constant 0 : index
    %68 = arith.index_cast %67 : i32 to index
    %c0_28 = arith.constant 0 : index
    %c0_29 = arith.constant 0 : index
    %69 = vector.load %arg3[%c0_27, %68, %c0_28, %c0_29] : memref<1x8x8x128xbf16, #tpu.memory_space<vmem>>, vector<1x1x8x128xbf16>
    %70 = vector.shape_cast %69 : vector<1x1x8x128xbf16> to vector<8x128xbf16>
    %c0_30 = arith.constant 0 : index
    %c0_31 = arith.constant 0 : index
    %71 = vector.load %arg8[%c0_30, %c0_31] : memref<8x32xf32, #tpu.memory_space<vmem>>, vector<8x32xf32>
    %c0_32 = arith.constant 0 : index
    %c0_33 = arith.constant 0 : index
    %72 = vector.load %arg9[%c0_32, %c0_33] : memref<8x32xf32, #tpu.memory_space<vmem>>, vector<8x32xf32>
    %73 = arith.truncf %71 : vector<8x32xf32> to vector<8x32xbf16>
    %cst_34 = arith.constant dense<0.000000e+00> : vector<8x128xf32>
    %74 = tpu.matmul %73, %5, %cst_34 {dimension_numbers = #tpu.dot_dimension_numbers<[1], [0], [0], [1], [0, 0, 1, 1], [], []>} : vector<8x32xbf16>, vector<32x128xbf16>, vector<8x128xf32> -> vector<8x128xf32>
    %75 = arith.extf %70 : vector<8x128xbf16> to vector<8x128xf32>
    %76 = arith.addf %75, %74 : vector<8x128xf32>
    %77 = vector.extract_strided_slice %76 {offsets = [0, 0], sizes = [8, 32], strides = [1, 1]} : vector<8x128xf32> to vector<8x32xf32>
    %78 = arith.negf %77 : vector<8x32xf32>
    %79 = math.exp %78 : vector<8x32xf32>
    %cst_35 = arith.constant 1.000000e+00 : f32
    %80 = vector.broadcast %cst_35 : f32 to vector<8x32xf32>
    %81 = arith.addf %80, %79 : vector<8x32xf32>
    %82 = arith.divf %80, %81 : vector<8x32xf32>
    %83 = vector.extract_strided_slice %76 {offsets = [0, 32], sizes = [8, 32], strides = [1, 1]} : vector<8x128xf32> to vector<8x32xf32>
    %84 = arith.negf %83 : vector<8x32xf32>
    %85 = math.exp %84 : vector<8x32xf32>
    %cst_36 = arith.constant 1.000000e+00 : f32
    %86 = vector.broadcast %cst_36 : f32 to vector<8x32xf32>
    %87 = arith.addf %86, %85 : vector<8x32xf32>
    %88 = arith.divf %86, %87 : vector<8x32xf32>
    %89 = vector.extract_strided_slice %76 {offsets = [0, 64], sizes = [8, 32], strides = [1, 1]} : vector<8x128xf32> to vector<8x32xf32>
    %90 = math.tanh %89 : vector<8x32xf32>
    %91 = vector.extract_strided_slice %76 {offsets = [0, 96], sizes = [8, 32], strides = [1, 1]} : vector<8x128xf32> to vector<8x32xf32>
    %92 = arith.negf %91 : vector<8x32xf32>
    %93 = math.exp %92 : vector<8x32xf32>
    %cst_37 = arith.constant 1.000000e+00 : f32
    %94 = vector.broadcast %cst_37 : f32 to vector<8x32xf32>
    %95 = arith.addf %94, %93 : vector<8x32xf32>
    %96 = arith.divf %94, %95 : vector<8x32xf32>
    %97 = arith.mulf %88, %72 : vector<8x32xf32>
    %98 = arith.mulf %82, %90 : vector<8x32xf32>
    %99 = arith.addf %97, %98 : vector<8x32xf32>
    %100 = math.tanh %99 : vector<8x32xf32>
    %101 = arith.mulf %96, %100 : vector<8x32xf32>
    %102 = arith.addi %9, %67 : i32
    %103 = vector.broadcast %102 : i32 to vector<8x1xi32>
    %104 = arith.cmpi slt, %103, %3 : vector<8x1xi32>
    %105 = vector.shape_cast %104 : vector<8x1xi1> to vector<8x1xi1>
    %106 = vector.broadcast %105 : vector<8x1xi1> to vector<8x32xi1>
    %107 = arith.select %106, %101, %71 : vector<8x32xi1>, vector<8x32xf32>
    %c0_38 = arith.constant 0 : index
    %c0_39 = arith.constant 0 : index
    %108 = vector.load %arg8[%c0_38, %c0_39] : memref<8x32xf32, #tpu.memory_space<vmem>>, vector<8x32xf32>
    tpu.vector_store %arg8[%c0_38, %c0_39], %107 {strides = array<i32>} : memref<8x32xf32, #tpu.memory_space<vmem>>, vector<8x32xf32>,
    %109 = vector.shape_cast %104 : vector<8x1xi1> to vector<8x1xi1>
    %110 = vector.broadcast %109 : vector<8x1xi1> to vector<8x32xi1>
    %111 = arith.select %110, %99, %72 : vector<8x32xi1>, vector<8x32xf32>
    %c0_40 = arith.constant 0 : index
    %c0_41 = arith.constant 0 : index
    %112 = vector.load %arg9[%c0_40, %c0_41] : memref<8x32xf32, #tpu.memory_space<vmem>>, vector<8x32xf32>
    tpu.vector_store %arg9[%c0_40, %c0_41], %111 {strides = array<i32>} : memref<8x32xf32, #tpu.memory_space<vmem>>, vector<8x32xf32>,
    %cst_42 = arith.constant 0.000000e+00 : f32
    %113 = vector.shape_cast %104 : vector<8x1xi1> to vector<8x1xi1>
    %114 = vector.broadcast %113 : vector<8x1xi1> to vector<8x32xi1>
    %115 = vector.broadcast %cst_42 : f32 to vector<8x32xf32>
    %116 = arith.select %114, %101, %115 : vector<8x32xi1>, vector<8x32xf32>
    %117 = arith.truncf %116 : vector<8x32xf32> to vector<8x32xbf16>
    %c0_43 = arith.constant 0 : index
    %118 = arith.index_cast %67 : i32 to index
    %c0_44 = arith.constant 0 : index
    %c0_45 = arith.constant 0 : index
    %119 = vector.load %arg5[%c0_43, %118, %c0_44, %c0_45] : memref<1x8x8x32xbf16, #tpu.memory_space<vmem>>, vector<1x1x8x32xbf16>
    %120 = vector.shape_cast %119 : vector<1x1x8x32xbf16> to vector<8x32xbf16>
    %121 = vector.shape_cast %117 : vector<8x32xbf16> to vector<1x1x8x32xbf16>
    tpu.vector_store %arg5[%c0_43, %118, %c0_44, %c0_45], %121 {strides = array<i32>} : memref<1x8x8x32xbf16, #tpu.memory_space<vmem>>, vector<1x1x8x32xbf16>,
    %c2_i32 = arith.constant 2 : i32
    %c7_i32_46 = arith.constant 7 : i32
    %122 = arith.subi %c7_i32_46, %c2_i32 : i32
    %123 = arith.select %6, %122, %c2_i32 : i32
    %c0_47 = arith.constant 0 : index
    %124 = arith.index_cast %123 : i32 to index
    %c0_48 = arith.constant 0 : index
    %c0_49 = arith.constant 0 : index
    %125 = vector.load %arg3[%c0_47, %124, %c0_48, %c0_49] : memref<1x8x8x128xbf16, #tpu.memory_space<vmem>>, vector<1x1x8x128xbf16>
    %126 = vector.shape_cast %125 : vector<1x1x8x128xbf16> to vector<8x128xbf16>
    %c0_50 = arith.constant 0 : index
    %c0_51 = arith.constant 0 : index
    %127 = vector.load %arg8[%c0_50, %c0_51] : memref<8x32xf32, #tpu.memory_space<vmem>>, vector<8x32xf32>
    %c0_52 = arith.constant 0 : index
    %c0_53 = arith.constant 0 : index
    %128 = vector.load %arg9[%c0_52, %c0_53] : memref<8x32xf32, #tpu.memory_space<vmem>>, vector<8x32xf32>
    %129 = arith.truncf %127 : vector<8x32xf32> to vector<8x32xbf16>
    %cst_54 = arith.constant dense<0.000000e+00> : vector<8x128xf32>
    %130 = tpu.matmul %129, %5, %cst_54 {dimension_numbers = #tpu.dot_dimension_numbers<[1], [0], [0], [1], [0, 0, 1, 1], [], []>} : vector<8x32xbf16>, vector<32x128xbf16>, vector<8x128xf32> -> vector<8x128xf32>
    %131 = arith.extf %126 : vector<8x128xbf16> to vector<8x128xf32>
    %132 = arith.addf %131, %130 : vector<8x128xf32>
    %133 = vector.extract_strided_slice %132 {offsets = [0, 0], sizes = [8, 32], strides = [1, 1]} : vector<8x128xf32> to vector<8x32xf32>
    %134 = arith.negf %133 : vector<8x32xf32>
    %135 = math.exp %134 : vector<8x32xf32>
    %cst_55 = arith.constant 1.000000e+00 : f32
    %136 = vector.broadcast %cst_55 : f32 to vector<8x32xf32>
    %137 = arith.addf %136, %135 : vector<8x32xf32>
    %138 = arith.divf %136, %137 : vector<8x32xf32>
    %139 = vector.extract_strided_slice %132 {offsets = [0, 32], sizes = [8, 32], strides = [1, 1]} : vector<8x128xf32> to vector<8x32xf32>
    %140 = arith.negf %139 : vector<8x32xf32>
    %141 = math.exp %140 : vector<8x32xf32>
    %cst_56 = arith.constant 1.000000e+00 : f32
    %142 = vector.broadcast %cst_56 : f32 to vector<8x32xf32>
    %143 = arith.addf %142, %141 : vector<8x32xf32>
    %144 = arith.divf %142, %143 : vector<8x32xf32>
    %145 = vector.extract_strided_slice %132 {offsets = [0, 64], sizes = [8, 32], strides = [1, 1]} : vector<8x128xf32> to vector<8x32xf32>
    %146 = math.tanh %145 : vector<8x32xf32>
    %147 = vector.extract_strided_slice %132 {offsets = [0, 96], sizes = [8, 32], strides = [1, 1]} : vector<8x128xf32> to vector<8x32xf32>
    %148 = arith.negf %147 : vector<8x32xf32>
    %149 = math.exp %148 : vector<8x32xf32>
    %cst_57 = arith.constant 1.000000e+00 : f32
    %150 = vector.broadcast %cst_57 : f32 to vector<8x32xf32>
    %151 = arith.addf %150, %149 : vector<8x32xf32>
    %152 = arith.divf %150, %151 : vector<8x32xf32>
    %153 = arith.mulf %144, %128 : vector<8x32xf32>
    %154 = arith.mulf %138, %146 : vector<8x32xf32>
    %155 = arith.addf %153, %154 : vector<8x32xf32>
    %156 = math.tanh %155 : vector<8x32xf32>
    %157 = arith.mulf %152, %156 : vector<8x32xf32>
    %158 = arith.addi %9, %123 : i32
    %159 = vector.broadcast %158 : i32 to vector<8x1xi32>
    %160 = arith.cmpi slt, %159, %3 : vector<8x1xi32>
    %161 = vector.shape_cast %160 : vector<8x1xi1> to vector<8x1xi1>
    %162 = vector.broadcast %161 : vector<8x1xi1> to vector<8x32xi1>
    %163 = arith.select %162, %157, %127 : vector<8x32xi1>, vector<8x32xf32>
    %c0_58 = arith.constant 0 : index
    %c0_59 = arith.constant 0 : index
    %164 = vector.load %arg8[%c0_58, %c0_59] : memref<8x32xf32, #tpu.memory_space<vmem>>, vector<8x32xf32>
    tpu.vector_store %arg8[%c0_58, %c0_59], %163 {strides = array<i32>} : memref<8x32xf32, #tpu.memory_space<vmem>>, vector<8x32xf32>,
    %165 = vector.shape_cast %160 : vector<8x1xi1> to vector<8x1xi1>
    %166 = vector.broadcast %165 : vector<8x1xi1> to vector<8x32xi1>
    %167 = arith.select %166, %155, %128 : vector<8x32xi1>, vector<8x32xf32>
    %c0_60 = arith.constant 0 : index
    %c0_61 = arith.constant 0 : index
    %168 = vector.load %arg9[%c0_60, %c0_61] : memref<8x32xf32, #tpu.memory_space<vmem>>, vector<8x32xf32>
    tpu.vector_store %arg9[%c0_60, %c0_61], %167 {strides = array<i32>} : memref<8x32xf32, #tpu.memory_space<vmem>>, vector<8x32xf32>,
    %cst_62 = arith.constant 0.000000e+00 : f32
    %169 = vector.shape_cast %160 : vector<8x1xi1> to vector<8x1xi1>
    %170 = vector.broadcast %169 : vector<8x1xi1> to vector<8x32xi1>
    %171 = vector.broadcast %cst_62 : f32 to vector<8x32xf32>
    %172 = arith.select %170, %157, %171 : vector<8x32xi1>, vector<8x32xf32>
    %173 = arith.truncf %172 : vector<8x32xf32> to vector<8x32xbf16>
    %c0_63 = arith.constant 0 : index
    %174 = arith.index_cast %123 : i32 to index
    %c0_64 = arith.constant 0 : index
    %c0_65 = arith.constant 0 : index
    %175 = vector.load %arg5[%c0_63, %174, %c0_64, %c0_65] : memref<1x8x8x32xbf16, #tpu.memory_space<vmem>>, vector<1x1x8x32xbf16>
    %176 = vector.shape_cast %175 : vector<1x1x8x32xbf16> to vector<8x32xbf16>
    %177 = vector.shape_cast %173 : vector<8x32xbf16> to vector<1x1x8x32xbf16>
    tpu.vector_store %arg5[%c0_63, %174, %c0_64, %c0_65], %177 {strides = array<i32>} : memref<1x8x8x32xbf16, #tpu.memory_space<vmem>>, vector<1x1x8x32xbf16>,
    %c3_i32 = arith.constant 3 : i32
    %c7_i32_66 = arith.constant 7 : i32
    %178 = arith.subi %c7_i32_66, %c3_i32 : i32
    %179 = arith.select %6, %178, %c3_i32 : i32
    %c0_67 = arith.constant 0 : index
    %180 = arith.index_cast %179 : i32 to index
    %c0_68 = arith.constant 0 : index
    %c0_69 = arith.constant 0 : index
    %181 = vector.load %arg3[%c0_67, %180, %c0_68, %c0_69] : memref<1x8x8x128xbf16, #tpu.memory_space<vmem>>, vector<1x1x8x128xbf16>
    %182 = vector.shape_cast %181 : vector<1x1x8x128xbf16> to vector<8x128xbf16>
    %c0_70 = arith.constant 0 : index
    %c0_71 = arith.constant 0 : index
    %183 = vector.load %arg8[%c0_70, %c0_71] : memref<8x32xf32, #tpu.memory_space<vmem>>, vector<8x32xf32>
    %c0_72 = arith.constant 0 : index
    %c0_73 = arith.constant 0 : index
    %184 = vector.load %arg9[%c0_72, %c0_73] : memref<8x32xf32, #tpu.memory_space<vmem>>, vector<8x32xf32>
    %185 = arith.truncf %183 : vector<8x32xf32> to vector<8x32xbf16>
    %cst_74 = arith.constant dense<0.000000e+00> : vector<8x128xf32>
    %186 = tpu.matmul %185, %5, %cst_74 {dimension_numbers = #tpu.dot_dimension_numbers<[1], [0], [0], [1], [0, 0, 1, 1], [], []>} : vector<8x32xbf16>, vector<32x128xbf16>, vector<8x128xf32> -> vector<8x128xf32>
    %187 = arith.extf %182 : vector<8x128xbf16> to vector<8x128xf32>
    %188 = arith.addf %187, %186 : vector<8x128xf32>
    %189 = vector.extract_strided_slice %188 {offsets = [0, 0], sizes = [8, 32], strides = [1, 1]} : vector<8x128xf32> to vector<8x32xf32>
    %190 = arith.negf %189 : vector<8x32xf32>
    %191 = math.exp %190 : vector<8x32xf32>
    %cst_75 = arith.constant 1.000000e+00 : f32
    %192 = vector.broadcast %cst_75 : f32 to vector<8x32xf32>
    %193 = arith.addf %192, %191 : vector<8x32xf32>
    %194 = arith.divf %192, %193 : vector<8x32xf32>
    %195 = vector.extract_strided_slice %188 {offsets = [0, 32], sizes = [8, 32], strides = [1, 1]} : vector<8x128xf32> to vector<8x32xf32>
    %196 = arith.negf %195 : vector<8x32xf32>
    %197 = math.exp %196 : vector<8x32xf32>
    %cst_76 = arith.constant 1.000000e+00 : f32
    %198 = vector.broadcast %cst_76 : f32 to vector<8x32xf32>
    %199 = arith.addf %198, %197 : vector<8x32xf32>
    %200 = arith.divf %198, %199 : vector<8x32xf32>
    %201 = vector.extract_strided_slice %188 {offsets = [0, 64], sizes = [8, 32], strides = [1, 1]} : vector<8x128xf32> to vector<8x32xf32>
    %202 = math.tanh %201 : vector<8x32xf32>
    %203 = vector.extract_strided_slice %188 {offsets = [0, 96], sizes = [8, 32], strides = [1, 1]} : vector<8x128xf32> to vector<8x32xf32>
    %204 = arith.negf %203 : vector<8x32xf32>
    %205 = math.exp %204 : vector<8x32xf32>
    %cst_77 = arith.constant 1.000000e+00 : f32
    %206 = vector.broadcast %cst_77 : f32 to vector<8x32xf32>
    %207 = arith.addf %206, %205 : vector<8x32xf32>
    %208 = arith.divf %206, %207 : vector<8x32xf32>
    %209 = arith.mulf %200, %184 : vector<8x32xf32>
    %210 = arith.mulf %194, %202 : vector<8x32xf32>
    %211 = arith.addf %209, %210 : vector<8x32xf32>
    %212 = math.tanh %211 : vector<8x32xf32>
    %213 = arith.mulf %208, %212 : vector<8x32xf32>
    %214 = arith.addi %9, %179 : i32
    %215 = vector.broadcast %214 : i32 to vector<8x1xi32>
    %216 = arith.cmpi slt, %215, %3 : vector<8x1xi32>
    %217 = vector.shape_cast %216 : vector<8x1xi1> to vector<8x1xi1>
    %218 = vector.broadcast %217 : vector<8x1xi1> to vector<8x32xi1>
    %219 = arith.select %218, %213, %183 : vector<8x32xi1>, vector<8x32xf32>
    %c0_78 = arith.constant 0 : index
    %c0_79 = arith.constant 0 : index
    %220 = vector.load %arg8[%c0_78, %c0_79] : memref<8x32xf32, #tpu.memory_space<vmem>>, vector<8x32xf32>
    tpu.vector_store %arg8[%c0_78, %c0_79], %219 {strides = array<i32>} : memref<8x32xf32, #tpu.memory_space<vmem>>, vector<8x32xf32>,
    %221 = vector.shape_cast %216 : vector<8x1xi1> to vector<8x1xi1>
    %222 = vector.broadcast %221 : vector<8x1xi1> to vector<8x32xi1>
    %223 = arith.select %222, %211, %184 : vector<8x32xi1>, vector<8x32xf32>
    %c0_80 = arith.constant 0 : index
    %c0_81 = arith.constant 0 : index
    %224 = vector.load %arg9[%c0_80, %c0_81] : memref<8x32xf32, #tpu.memory_space<vmem>>, vector<8x32xf32>
    tpu.vector_store %arg9[%c0_80, %c0_81], %223 {strides = array<i32>} : memref<8x32xf32, #tpu.memory_space<vmem>>, vector<8x32xf32>,
    %cst_82 = arith.constant 0.000000e+00 : f32
    %225 = vector.shape_cast %216 : vector<8x1xi1> to vector<8x1xi1>
    %226 = vector.broadcast %225 : vector<8x1xi1> to vector<8x32xi1>
    %227 = vector.broadcast %cst_82 : f32 to vector<8x32xf32>
    %228 = arith.select %226, %213, %227 : vector<8x32xi1>, vector<8x32xf32>
    %229 = arith.truncf %228 : vector<8x32xf32> to vector<8x32xbf16>
    %c0_83 = arith.constant 0 : index
    %230 = arith.index_cast %179 : i32 to index
    %c0_84 = arith.constant 0 : index
    %c0_85 = arith.constant 0 : index
    %231 = vector.load %arg5[%c0_83, %230, %c0_84, %c0_85] : memref<1x8x8x32xbf16, #tpu.memory_space<vmem>>, vector<1x1x8x32xbf16>
    %232 = vector.shape_cast %231 : vector<1x1x8x32xbf16> to vector<8x32xbf16>
    %233 = vector.shape_cast %229 : vector<8x32xbf16> to vector<1x1x8x32xbf16>
    tpu.vector_store %arg5[%c0_83, %230, %c0_84, %c0_85], %233 {strides = array<i32>} : memref<1x8x8x32xbf16, #tpu.memory_space<vmem>>, vector<1x1x8x32xbf16>,
    %c4_i32 = arith.constant 4 : i32
    %c7_i32_86 = arith.constant 7 : i32
    %234 = arith.subi %c7_i32_86, %c4_i32 : i32
    %235 = arith.select %6, %234, %c4_i32 : i32
    %c0_87 = arith.constant 0 : index
    %236 = arith.index_cast %235 : i32 to index
    %c0_88 = arith.constant 0 : index
    %c0_89 = arith.constant 0 : index
    %237 = vector.load %arg3[%c0_87, %236, %c0_88, %c0_89] : memref<1x8x8x128xbf16, #tpu.memory_space<vmem>>, vector<1x1x8x128xbf16>
    %238 = vector.shape_cast %237 : vector<1x1x8x128xbf16> to vector<8x128xbf16>
    %c0_90 = arith.constant 0 : index
    %c0_91 = arith.constant 0 : index
    %239 = vector.load %arg8[%c0_90, %c0_91] : memref<8x32xf32, #tpu.memory_space<vmem>>, vector<8x32xf32>
    %c0_92 = arith.constant 0 : index
    %c0_93 = arith.constant 0 : index
    %240 = vector.load %arg9[%c0_92, %c0_93] : memref<8x32xf32, #tpu.memory_space<vmem>>, vector<8x32xf32>
    %241 = arith.truncf %239 : vector<8x32xf32> to vector<8x32xbf16>
    %cst_94 = arith.constant dense<0.000000e+00> : vector<8x128xf32>
    %242 = tpu.matmul %241, %5, %cst_94 {dimension_numbers = #tpu.dot_dimension_numbers<[1], [0], [0], [1], [0, 0, 1, 1], [], []>} : vector<8x32xbf16>, vector<32x128xbf16>, vector<8x128xf32> -> vector<8x128xf32>
    %243 = arith.extf %238 : vector<8x128xbf16> to vector<8x128xf32>
    %244 = arith.addf %243, %242 : vector<8x128xf32>
    %245 = vector.extract_strided_slice %244 {offsets = [0, 0], sizes = [8, 32], strides = [1, 1]} : vector<8x128xf32> to vector<8x32xf32>
    %246 = arith.negf %245 : vector<8x32xf32>
    %247 = math.exp %246 : vector<8x32xf32>
    %cst_95 = arith.constant 1.000000e+00 : f32
    %248 = vector.broadcast %cst_95 : f32 to vector<8x32xf32>
    %249 = arith.addf %248, %247 : vector<8x32xf32>
    %250 = arith.divf %248, %249 : vector<8x32xf32>
    %251 = vector.extract_strided_slice %244 {offsets = [0, 32], sizes = [8, 32], strides = [1, 1]} : vector<8x128xf32> to vector<8x32xf32>
    %252 = arith.negf %251 : vector<8x32xf32>
    %253 = math.exp %252 : vector<8x32xf32>
    %cst_96 = arith.constant 1.000000e+00 : f32
    %254 = vector.broadcast %cst_96 : f32 to vector<8x32xf32>
    %255 = arith.addf %254, %253 : vector<8x32xf32>
    %256 = arith.divf %254, %255 : vector<8x32xf32>
    %257 = vector.extract_strided_slice %244 {offsets = [0, 64], sizes = [8, 32], strides = [1, 1]} : vector<8x128xf32> to vector<8x32xf32>
    %258 = math.tanh %257 : vector<8x32xf32>
    %259 = vector.extract_strided_slice %244 {offsets = [0, 96], sizes = [8, 32], strides = [1, 1]} : vector<8x128xf32> to vector<8x32xf32>
    %260 = arith.negf %259 : vector<8x32xf32>
    %261 = math.exp %260 : vector<8x32xf32>
    %cst_97 = arith.constant 1.000000e+00 : f32
    %262 = vector.broadcast %cst_97 : f32 to vector<8x32xf32>
    %263 = arith.addf %262, %261 : vector<8x32xf32>
    %264 = arith.divf %262, %263 : vector<8x32xf32>
    %265 = arith.mulf %256, %240 : vector<8x32xf32>
    %266 = arith.mulf %250, %258 : vector<8x32xf32>
    %267 = arith.addf %265, %266 : vector<8x32xf32>
    %268 = math.tanh %267 : vector<8x32xf32>
    %269 = arith.mulf %264, %268 : vector<8x32xf32>
    %270 = arith.addi %9, %235 : i32
    %271 = vector.broadcast %270 : i32 to vector<8x1xi32>
    %272 = arith.cmpi slt, %271, %3 : vector<8x1xi32>
    %273 = vector.shape_cast %272 : vector<8x1xi1> to vector<8x1xi1>
    %274 = vector.broadcast %273 : vector<8x1xi1> to vector<8x32xi1>
    %275 = arith.select %274, %269, %239 : vector<8x32xi1>, vector<8x32xf32>
    %c0_98 = arith.constant 0 : index
    %c0_99 = arith.constant 0 : index
    %276 = vector.load %arg8[%c0_98, %c0_99] : memref<8x32xf32, #tpu.memory_space<vmem>>, vector<8x32xf32>
    tpu.vector_store %arg8[%c0_98, %c0_99], %275 {strides = array<i32>} : memref<8x32xf32, #tpu.memory_space<vmem>>, vector<8x32xf32>,
    %277 = vector.shape_cast %272 : vector<8x1xi1> to vector<8x1xi1>
    %278 = vector.broadcast %277 : vector<8x1xi1> to vector<8x32xi1>
    %279 = arith.select %278, %267, %240 : vector<8x32xi1>, vector<8x32xf32>
    %c0_100 = arith.constant 0 : index
    %c0_101 = arith.constant 0 : index
    %280 = vector.load %arg9[%c0_100, %c0_101] : memref<8x32xf32, #tpu.memory_space<vmem>>, vector<8x32xf32>
    tpu.vector_store %arg9[%c0_100, %c0_101], %279 {strides = array<i32>} : memref<8x32xf32, #tpu.memory_space<vmem>>, vector<8x32xf32>,
    %cst_102 = arith.constant 0.000000e+00 : f32
    %281 = vector.shape_cast %272 : vector<8x1xi1> to vector<8x1xi1>
    %282 = vector.broadcast %281 : vector<8x1xi1> to vector<8x32xi1>
    %283 = vector.broadcast %cst_102 : f32 to vector<8x32xf32>
    %284 = arith.select %282, %269, %283 : vector<8x32xi1>, vector<8x32xf32>
    %285 = arith.truncf %284 : vector<8x32xf32> to vector<8x32xbf16>
    %c0_103 = arith.constant 0 : index
    %286 = arith.index_cast %235 : i32 to index
    %c0_104 = arith.constant 0 : index
    %c0_105 = arith.constant 0 : index
    %287 = vector.load %arg5[%c0_103, %286, %c0_104, %c0_105] : memref<1x8x8x32xbf16, #tpu.memory_space<vmem>>, vector<1x1x8x32xbf16>
    %288 = vector.shape_cast %287 : vector<1x1x8x32xbf16> to vector<8x32xbf16>
    %289 = vector.shape_cast %285 : vector<8x32xbf16> to vector<1x1x8x32xbf16>
    tpu.vector_store %arg5[%c0_103, %286, %c0_104, %c0_105], %289 {strides = array<i32>} : memref<1x8x8x32xbf16, #tpu.memory_space<vmem>>, vector<1x1x8x32xbf16>,
    %c5_i32 = arith.constant 5 : i32
    %c7_i32_106 = arith.constant 7 : i32
    %290 = arith.subi %c7_i32_106, %c5_i32 : i32
    %291 = arith.select %6, %290, %c5_i32 : i32
    %c0_107 = arith.constant 0 : index
    %292 = arith.index_cast %291 : i32 to index
    %c0_108 = arith.constant 0 : index
    %c0_109 = arith.constant 0 : index
    %293 = vector.load %arg3[%c0_107, %292, %c0_108, %c0_109] : memref<1x8x8x128xbf16, #tpu.memory_space<vmem>>, vector<1x1x8x128xbf16>
    %294 = vector.shape_cast %293 : vector<1x1x8x128xbf16> to vector<8x128xbf16>
    %c0_110 = arith.constant 0 : index
    %c0_111 = arith.constant 0 : index
    %295 = vector.load %arg8[%c0_110, %c0_111] : memref<8x32xf32, #tpu.memory_space<vmem>>, vector<8x32xf32>
    %c0_112 = arith.constant 0 : index
    %c0_113 = arith.constant 0 : index
    %296 = vector.load %arg9[%c0_112, %c0_113] : memref<8x32xf32, #tpu.memory_space<vmem>>, vector<8x32xf32>
    %297 = arith.truncf %295 : vector<8x32xf32> to vector<8x32xbf16>
    %cst_114 = arith.constant dense<0.000000e+00> : vector<8x128xf32>
    %298 = tpu.matmul %297, %5, %cst_114 {dimension_numbers = #tpu.dot_dimension_numbers<[1], [0], [0], [1], [0, 0, 1, 1], [], []>} : vector<8x32xbf16>, vector<32x128xbf16>, vector<8x128xf32> -> vector<8x128xf32>
    %299 = arith.extf %294 : vector<8x128xbf16> to vector<8x128xf32>
    %300 = arith.addf %299, %298 : vector<8x128xf32>
    %301 = vector.extract_strided_slice %300 {offsets = [0, 0], sizes = [8, 32], strides = [1, 1]} : vector<8x128xf32> to vector<8x32xf32>
    %302 = arith.negf %301 : vector<8x32xf32>
    %303 = math.exp %302 : vector<8x32xf32>
    %cst_115 = arith.constant 1.000000e+00 : f32
    %304 = vector.broadcast %cst_115 : f32 to vector<8x32xf32>
    %305 = arith.addf %304, %303 : vector<8x32xf32>
    %306 = arith.divf %304, %305 : vector<8x32xf32>
    %307 = vector.extract_strided_slice %300 {offsets = [0, 32], sizes = [8, 32], strides = [1, 1]} : vector<8x128xf32> to vector<8x32xf32>
    %308 = arith.negf %307 : vector<8x32xf32>
    %309 = math.exp %308 : vector<8x32xf32>
    %cst_116 = arith.constant 1.000000e+00 : f32
    %310 = vector.broadcast %cst_116 : f32 to vector<8x32xf32>
    %311 = arith.addf %310, %309 : vector<8x32xf32>
    %312 = arith.divf %310, %311 : vector<8x32xf32>
    %313 = vector.extract_strided_slice %300 {offsets = [0, 64], sizes = [8, 32], strides = [1, 1]} : vector<8x128xf32> to vector<8x32xf32>
    %314 = math.tanh %313 : vector<8x32xf32>
    %315 = vector.extract_strided_slice %300 {offsets = [0, 96], sizes = [8, 32], strides = [1, 1]} : vector<8x128xf32> to vector<8x32xf32>
    %316 = arith.negf %315 : vector<8x32xf32>
    %317 = math.exp %316 : vector<8x32xf32>
    %cst_117 = arith.constant 1.000000e+00 : f32
    %318 = vector.broadcast %cst_117 : f32 to vector<8x32xf32>
    %319 = arith.addf %318, %317 : vector<8x32xf32>
    %320 = arith.divf %318, %319 : vector<8x32xf32>
    %321 = arith.mulf %312, %296 : vector<8x32xf32>
    %322 = arith.mulf %306, %314 : vector<8x32xf32>
    %323 = arith.addf %321, %322 : vector<8x32xf32>
    %324 = math.tanh %323 : vector<8x32xf32>
    %325 = arith.mulf %320, %324 : vector<8x32xf32>
    %326 = arith.addi %9, %291 : i32
    %327 = vector.broadcast %326 : i32 to vector<8x1xi32>
    %328 = arith.cmpi slt, %327, %3 : vector<8x1xi32>
    %329 = vector.shape_cast %328 : vector<8x1xi1> to vector<8x1xi1>
    %330 = vector.broadcast %329 : vector<8x1xi1> to vector<8x32xi1>
    %331 = arith.select %330, %325, %295 : vector<8x32xi1>, vector<8x32xf32>
    %c0_118 = arith.constant 0 : index
    %c0_119 = arith.constant 0 : index
    %332 = vector.load %arg8[%c0_118, %c0_119] : memref<8x32xf32, #tpu.memory_space<vmem>>, vector<8x32xf32>
    tpu.vector_store %arg8[%c0_118, %c0_119], %331 {strides = array<i32>} : memref<8x32xf32, #tpu.memory_space<vmem>>, vector<8x32xf32>,
    %333 = vector.shape_cast %328 : vector<8x1xi1> to vector<8x1xi1>
    %334 = vector.broadcast %333 : vector<8x1xi1> to vector<8x32xi1>
    %335 = arith.select %334, %323, %296 : vector<8x32xi1>, vector<8x32xf32>
    %c0_120 = arith.constant 0 : index
    %c0_121 = arith.constant 0 : index
    %336 = vector.load %arg9[%c0_120, %c0_121] : memref<8x32xf32, #tpu.memory_space<vmem>>, vector<8x32xf32>
    tpu.vector_store %arg9[%c0_120, %c0_121], %335 {strides = array<i32>} : memref<8x32xf32, #tpu.memory_space<vmem>>, vector<8x32xf32>,
    %cst_122 = arith.constant 0.000000e+00 : f32
    %337 = vector.shape_cast %328 : vector<8x1xi1> to vector<8x1xi1>
    %338 = vector.broadcast %337 : vector<8x1xi1> to vector<8x32xi1>
    %339 = vector.broadcast %cst_122 : f32 to vector<8x32xf32>
    %340 = arith.select %338, %325, %339 : vector<8x32xi1>, vector<8x32xf32>
    %341 = arith.truncf %340 : vector<8x32xf32> to vector<8x32xbf16>
    %c0_123 = arith.constant 0 : index
    %342 = arith.index_cast %291 : i32 to index
    %c0_124 = arith.constant 0 : index
    %c0_125 = arith.constant 0 : index
    %343 = vector.load %arg5[%c0_123, %342, %c0_124, %c0_125] : memref<1x8x8x32xbf16, #tpu.memory_space<vmem>>, vector<1x1x8x32xbf16>
    %344 = vector.shape_cast %343 : vector<1x1x8x32xbf16> to vector<8x32xbf16>
    %345 = vector.shape_cast %341 : vector<8x32xbf16> to vector<1x1x8x32xbf16>
    tpu.vector_store %arg5[%c0_123, %342, %c0_124, %c0_125], %345 {strides = array<i32>} : memref<1x8x8x32xbf16, #tpu.memory_space<vmem>>, vector<1x1x8x32xbf16>,
    %c6_i32 = arith.constant 6 : i32
    %c7_i32_126 = arith.constant 7 : i32
    %346 = arith.subi %c7_i32_126, %c6_i32 : i32
    %347 = arith.select %6, %346, %c6_i32 : i32
    %c0_127 = arith.constant 0 : index
    %348 = arith.index_cast %347 : i32 to index
    %c0_128 = arith.constant 0 : index
    %c0_129 = arith.constant 0 : index
    %349 = vector.load %arg3[%c0_127, %348, %c0_128, %c0_129] : memref<1x8x8x128xbf16, #tpu.memory_space<vmem>>, vector<1x1x8x128xbf16>
    %350 = vector.shape_cast %349 : vector<1x1x8x128xbf16> to vector<8x128xbf16>
    %c0_130 = arith.constant 0 : index
    %c0_131 = arith.constant 0 : index
    %351 = vector.load %arg8[%c0_130, %c0_131] : memref<8x32xf32, #tpu.memory_space<vmem>>, vector<8x32xf32>
    %c0_132 = arith.constant 0 : index
    %c0_133 = arith.constant 0 : index
    %352 = vector.load %arg9[%c0_132, %c0_133] : memref<8x32xf32, #tpu.memory_space<vmem>>, vector<8x32xf32>
    %353 = arith.truncf %351 : vector<8x32xf32> to vector<8x32xbf16>
    %cst_134 = arith.constant dense<0.000000e+00> : vector<8x128xf32>
    %354 = tpu.matmul %353, %5, %cst_134 {dimension_numbers = #tpu.dot_dimension_numbers<[1], [0], [0], [1], [0, 0, 1, 1], [], []>} : vector<8x32xbf16>, vector<32x128xbf16>, vector<8x128xf32> -> vector<8x128xf32>
    %355 = arith.extf %350 : vector<8x128xbf16> to vector<8x128xf32>
    %356 = arith.addf %355, %354 : vector<8x128xf32>
    %357 = vector.extract_strided_slice %356 {offsets = [0, 0], sizes = [8, 32], strides = [1, 1]} : vector<8x128xf32> to vector<8x32xf32>
    %358 = arith.negf %357 : vector<8x32xf32>
    %359 = math.exp %358 : vector<8x32xf32>
    %cst_135 = arith.constant 1.000000e+00 : f32
    %360 = vector.broadcast %cst_135 : f32 to vector<8x32xf32>
    %361 = arith.addf %360, %359 : vector<8x32xf32>
    %362 = arith.divf %360, %361 : vector<8x32xf32>
    %363 = vector.extract_strided_slice %356 {offsets = [0, 32], sizes = [8, 32], strides = [1, 1]} : vector<8x128xf32> to vector<8x32xf32>
    %364 = arith.negf %363 : vector<8x32xf32>
    %365 = math.exp %364 : vector<8x32xf32>
    %cst_136 = arith.constant 1.000000e+00 : f32
    %366 = vector.broadcast %cst_136 : f32 to vector<8x32xf32>
    %367 = arith.addf %366, %365 : vector<8x32xf32>
    %368 = arith.divf %366, %367 : vector<8x32xf32>
    %369 = vector.extract_strided_slice %356 {offsets = [0, 64], sizes = [8, 32], strides = [1, 1]} : vector<8x128xf32> to vector<8x32xf32>
    %370 = math.tanh %369 : vector<8x32xf32>
    %371 = vector.extract_strided_slice %356 {offsets = [0, 96], sizes = [8, 32], strides = [1, 1]} : vector<8x128xf32> to vector<8x32xf32>
    %372 = arith.negf %371 : vector<8x32xf32>
    %373 = math.exp %372 : vector<8x32xf32>
    %cst_137 = arith.constant 1.000000e+00 : f32
    %374 = vector.broadcast %cst_137 : f32 to vector<8x32xf32>
    %375 = arith.addf %374, %373 : vector<8x32xf32>
    %376 = arith.divf %374, %375 : vector<8x32xf32>
    %377 = arith.mulf %368, %352 : vector<8x32xf32>
    %378 = arith.mulf %362, %370 : vector<8x32xf32>
    %379 = arith.addf %377, %378 : vector<8x32xf32>
    %380 = math.tanh %379 : vector<8x32xf32>
    %381 = arith.mulf %376, %380 : vector<8x32xf32>
    %382 = arith.addi %9, %347 : i32
    %383 = vector.broadcast %382 : i32 to vector<8x1xi32>
    %384 = arith.cmpi slt, %383, %3 : vector<8x1xi32>
    %385 = vector.shape_cast %384 : vector<8x1xi1> to vector<8x1xi1>
    %386 = vector.broadcast %385 : vector<8x1xi1> to vector<8x32xi1>
    %387 = arith.select %386, %381, %351 : vector<8x32xi1>, vector<8x32xf32>
    %c0_138 = arith.constant 0 : index
    %c0_139 = arith.constant 0 : index
    %388 = vector.load %arg8[%c0_138, %c0_139] : memref<8x32xf32, #tpu.memory_space<vmem>>, vector<8x32xf32>
    tpu.vector_store %arg8[%c0_138, %c0_139], %387 {strides = array<i32>} : memref<8x32xf32, #tpu.memory_space<vmem>>, vector<8x32xf32>,
    %389 = vector.shape_cast %384 : vector<8x1xi1> to vector<8x1xi1>
    %390 = vector.broadcast %389 : vector<8x1xi1> to vector<8x32xi1>
    %391 = arith.select %390, %379, %352 : vector<8x32xi1>, vector<8x32xf32>
    %c0_140 = arith.constant 0 : index
    %c0_141 = arith.constant 0 : index
    %392 = vector.load %arg9[%c0_140, %c0_141] : memref<8x32xf32, #tpu.memory_space<vmem>>, vector<8x32xf32>
    tpu.vector_store %arg9[%c0_140, %c0_141], %391 {strides = array<i32>} : memref<8x32xf32, #tpu.memory_space<vmem>>, vector<8x32xf32>,
    %cst_142 = arith.constant 0.000000e+00 : f32
    %393 = vector.shape_cast %384 : vector<8x1xi1> to vector<8x1xi1>
    %394 = vector.broadcast %393 : vector<8x1xi1> to vector<8x32xi1>
    %395 = vector.broadcast %cst_142 : f32 to vector<8x32xf32>
    %396 = arith.select %394, %381, %395 : vector<8x32xi1>, vector<8x32xf32>
    %397 = arith.truncf %396 : vector<8x32xf32> to vector<8x32xbf16>
    %c0_143 = arith.constant 0 : index
    %398 = arith.index_cast %347 : i32 to index
    %c0_144 = arith.constant 0 : index
    %c0_145 = arith.constant 0 : index
    %399 = vector.load %arg5[%c0_143, %398, %c0_144, %c0_145] : memref<1x8x8x32xbf16, #tpu.memory_space<vmem>>, vector<1x1x8x32xbf16>
    %400 = vector.shape_cast %399 : vector<1x1x8x32xbf16> to vector<8x32xbf16>
    %401 = vector.shape_cast %397 : vector<8x32xbf16> to vector<1x1x8x32xbf16>
    tpu.vector_store %arg5[%c0_143, %398, %c0_144, %c0_145], %401 {strides = array<i32>} : memref<1x8x8x32xbf16, #tpu.memory_space<vmem>>, vector<1x1x8x32xbf16>,
    %c7_i32_146 = arith.constant 7 : i32
    %c7_i32_147 = arith.constant 7 : i32
    %402 = arith.subi %c7_i32_147, %c7_i32_146 : i32
    %403 = arith.select %6, %402, %c7_i32_146 : i32
    %c0_148 = arith.constant 0 : index
    %404 = arith.index_cast %403 : i32 to index
    %c0_149 = arith.constant 0 : index
    %c0_150 = arith.constant 0 : index
    %405 = vector.load %arg3[%c0_148, %404, %c0_149, %c0_150] : memref<1x8x8x128xbf16, #tpu.memory_space<vmem>>, vector<1x1x8x128xbf16>
    %406 = vector.shape_cast %405 : vector<1x1x8x128xbf16> to vector<8x128xbf16>
    %c0_151 = arith.constant 0 : index
    %c0_152 = arith.constant 0 : index
    %407 = vector.load %arg8[%c0_151, %c0_152] : memref<8x32xf32, #tpu.memory_space<vmem>>, vector<8x32xf32>
    %c0_153 = arith.constant 0 : index
    %c0_154 = arith.constant 0 : index
    %408 = vector.load %arg9[%c0_153, %c0_154] : memref<8x32xf32, #tpu.memory_space<vmem>>, vector<8x32xf32>
    %409 = arith.truncf %407 : vector<8x32xf32> to vector<8x32xbf16>
    %cst_155 = arith.constant dense<0.000000e+00> : vector<8x128xf32>
    %410 = tpu.matmul %409, %5, %cst_155 {dimension_numbers = #tpu.dot_dimension_numbers<[1], [0], [0], [1], [0, 0, 1, 1], [], []>} : vector<8x32xbf16>, vector<32x128xbf16>, vector<8x128xf32> -> vector<8x128xf32>
    %411 = arith.extf %406 : vector<8x128xbf16> to vector<8x128xf32>
    %412 = arith.addf %411, %410 : vector<8x128xf32>
    %413 = vector.extract_strided_slice %412 {offsets = [0, 0], sizes = [8, 32], strides = [1, 1]} : vector<8x128xf32> to vector<8x32xf32>
    %414 = arith.negf %413 : vector<8x32xf32>
    %415 = math.exp %414 : vector<8x32xf32>
    %cst_156 = arith.constant 1.000000e+00 : f32
    %416 = vector.broadcast %cst_156 : f32 to vector<8x32xf32>
    %417 = arith.addf %416, %415 : vector<8x32xf32>
    %418 = arith.divf %416, %417 : vector<8x32xf32>
    %419 = vector.extract_strided_slice %412 {offsets = [0, 32], sizes = [8, 32], strides = [1, 1]} : vector<8x128xf32> to vector<8x32xf32>
    %420 = arith.negf %419 : vector<8x32xf32>
    %421 = math.exp %420 : vector<8x32xf32>
    %cst_157 = arith.constant 1.000000e+00 : f32
    %422 = vector.broadcast %cst_157 : f32 to vector<8x32xf32>
    %423 = arith.addf %422, %421 : vector<8x32xf32>
    %424 = arith.divf %422, %423 : vector<8x32xf32>
    %425 = vector.extract_strided_slice %412 {offsets = [0, 64], sizes = [8, 32], strides = [1, 1]} : vector<8x128xf32> to vector<8x32xf32>
    %426 = math.tanh %425 : vector<8x32xf32>
    %427 = vector.extract_strided_slice %412 {offsets = [0, 96], sizes = [8, 32], strides = [1, 1]} : vector<8x128xf32> to vector<8x32xf32>
    %428 = arith.negf %427 : vector<8x32xf32>
    %429 = math.exp %428 : vector<8x32xf32>
    %cst_158 = arith.constant 1.000000e+00 : f32
    %430 = vector.broadcast %cst_158 : f32 to vector<8x32xf32>
    %431 = arith.addf %430, %429 : vector<8x32xf32>
    %432 = arith.divf %430, %431 : vector<8x32xf32>
    %433 = arith.mulf %424, %408 : vector<8x32xf32>
    %434 = arith.mulf %418, %426 : vector<8x32xf32>
    %435 = arith.addf %433, %434 : vector<8x32xf32>
    %436 = math.tanh %435 : vector<8x32xf32>
    %437 = arith.mulf %432, %436 : vector<8x32xf32>
    %438 = arith.addi %9, %403 : i32
    %439 = vector.broadcast %438 : i32 to vector<8x1xi32>
    %440 = arith.cmpi slt, %439, %3 : vector<8x1xi32>
    %441 = vector.shape_cast %440 : vector<8x1xi1> to vector<8x1xi1>
    %442 = vector.broadcast %441 : vector<8x1xi1> to vector<8x32xi1>
    %443 = arith.select %442, %437, %407 : vector<8x32xi1>, vector<8x32xf32>
    %c0_159 = arith.constant 0 : index
    %c0_160 = arith.constant 0 : index
    %444 = vector.load %arg8[%c0_159, %c0_160] : memref<8x32xf32, #tpu.memory_space<vmem>>, vector<8x32xf32>
    tpu.vector_store %arg8[%c0_159, %c0_160], %443 {strides = array<i32>} : memref<8x32xf32, #tpu.memory_space<vmem>>, vector<8x32xf32>,
    %445 = vector.shape_cast %440 : vector<8x1xi1> to vector<8x1xi1>
    %446 = vector.broadcast %445 : vector<8x1xi1> to vector<8x32xi1>
    %447 = arith.select %446, %435, %408 : vector<8x32xi1>, vector<8x32xf32>
    %c0_161 = arith.constant 0 : index
    %c0_162 = arith.constant 0 : index
    %448 = vector.load %arg9[%c0_161, %c0_162] : memref<8x32xf32, #tpu.memory_space<vmem>>, vector<8x32xf32>
    tpu.vector_store %arg9[%c0_161, %c0_162], %447 {strides = array<i32>} : memref<8x32xf32, #tpu.memory_space<vmem>>, vector<8x32xf32>,
    %cst_163 = arith.constant 0.000000e+00 : f32
    %449 = vector.shape_cast %440 : vector<8x1xi1> to vector<8x1xi1>
    %450 = vector.broadcast %449 : vector<8x1xi1> to vector<8x32xi1>
    %451 = vector.broadcast %cst_163 : f32 to vector<8x32xf32>
    %452 = arith.select %450, %437, %451 : vector<8x32xi1>, vector<8x32xf32>
    %453 = arith.truncf %452 : vector<8x32xf32> to vector<8x32xbf16>
    %c0_164 = arith.constant 0 : index
    %454 = arith.index_cast %403 : i32 to index
    %c0_165 = arith.constant 0 : index
    %c0_166 = arith.constant 0 : index
    %455 = vector.load %arg5[%c0_164, %454, %c0_165, %c0_166] : memref<1x8x8x32xbf16, #tpu.memory_space<vmem>>, vector<1x1x8x32xbf16>
    %456 = vector.shape_cast %455 : vector<1x1x8x32xbf16> to vector<8x32xbf16>
    %457 = vector.shape_cast %453 : vector<8x32xbf16> to vector<1x1x8x32xbf16>
    tpu.vector_store %arg5[%c0_164, %454, %c0_165, %c0_166], %457 {strides = array<i32>} : memref<1x8x8x32xbf16, #tpu.memory_space<vmem>>, vector<1x1x8x32xbf16>,
    %c8_i32_167 = arith.constant 8 : i32
    %c0_i32_168 = arith.constant 0 : i32
    %458 = arith.cmpi eq, %arg1, %c0_i32_168 : i32
    %459 = arith.extui %458 : i1 to i32
    %c0_i32_169 = arith.constant 0 : i32
    %460 = arith.cmpi ne, %459, %c0_i32_169 : i32
    scf.if %460 {
      %c0_170 = arith.constant 0 : index
      %c0_171 = arith.constant 0 : index
      %461 = vector.load %arg8[%c0_170, %c0_171] : memref<8x32xf32, #tpu.memory_space<vmem>>, vector<8x32xf32>
      %c0_172 = arith.constant 0 : index
      %c0_173 = arith.constant 0 : index
      %c0_174 = arith.constant 0 : index
      %462 = vector.load %arg6[%c0_172, %c0_173, %c0_174] : memref<1x8x32xf32, #tpu.memory_space<vmem>>, vector<1x8x32xf32>
      %463 = vector.shape_cast %462 : vector<1x8x32xf32> to vector<8x32xf32>
      %464 = vector.shape_cast %461 : vector<8x32xf32> to vector<1x8x32xf32>
      tpu.vector_store %arg6[%c0_172, %c0_173, %c0_174], %464 {strides = array<i32>} : memref<1x8x32xf32, #tpu.memory_space<vmem>>, vector<1x8x32xf32>,
      %c0_175 = arith.constant 0 : index
      %c0_176 = arith.constant 0 : index
      %465 = vector.load %arg9[%c0_175, %c0_176] : memref<8x32xf32, #tpu.memory_space<vmem>>, vector<8x32xf32>
      %c0_177 = arith.constant 0 : index
      %c0_178 = arith.constant 0 : index
      %c0_179 = arith.constant 0 : index
      %466 = vector.load %arg7[%c0_177, %c0_178, %c0_179] : memref<1x8x32xf32, #tpu.memory_space<vmem>>, vector<1x8x32xf32>
      %467 = vector.shape_cast %466 : vector<1x8x32xf32> to vector<8x32xf32>
      %468 = vector.shape_cast %465 : vector<8x32xf32> to vector<1x8x32xf32>
      tpu.vector_store %arg7[%c0_177, %c0_178, %c0_179], %468 {strides = array<i32>} : memref<1x8x32xf32, #tpu.memory_space<vmem>>, vector<1x8x32xf32>,
    } else {
    }
    return
  }
  func.func @transform_0(%arg0: i32, %arg1: i32) -> (i32, i32) {
    %c0_i32 = arith.constant 0 : i32
    %c0_i32_0 = arith.constant 0 : i32
    %c0_i32_1 = arith.constant 0 : i32
    return %c0_i32, %c0_i32_0 : i32, i32
  }
  func.func @transform_1(%arg0: i32, %arg1: i32) -> (i32, i32, i32, i32) {
    %c0_i32 = arith.constant 0 : i32
    %0 = arith.muli %arg0, %c0_i32 : i32
    %c2_i32 = arith.constant 2 : i32
    %1 = arith.muli %c2_i32, %arg0 : i32
    %c1_i32 = arith.constant 1 : i32
    %2 = arith.subi %c1_i32, %1 : i32
    %3 = arith.muli %2, %arg1 : i32
    %4 = arith.addi %0, %3 : i32
    %c0_i32_0 = arith.constant 0 : i32
    %c0_i32_1 = arith.constant 0 : i32
    %c0_i32_2 = arith.constant 0 : i32
    return %arg0, %4, %c0_i32_0, %c0_i32_1 : i32, i32, i32, i32
  }
  func.func @transform_2(%arg0: i32, %arg1: i32) -> (i32, i32, i32) {
    %c0_i32 = arith.constant 0 : i32
    %c0_i32_0 = arith.constant 0 : i32
    %c0_i32_1 = arith.constant 0 : i32
    return %arg0, %c0_i32, %c0_i32_0 : i32, i32, i32
  }
  func.func @transform_3(%arg0: i32, %arg1: i32) -> (i32, i32, i32, i32) {
    %c0_i32 = arith.constant 0 : i32
    %0 = arith.muli %arg0, %c0_i32 : i32
    %c2_i32 = arith.constant 2 : i32
    %1 = arith.muli %c2_i32, %arg0 : i32
    %c1_i32 = arith.constant 1 : i32
    %2 = arith.subi %c1_i32, %1 : i32
    %3 = arith.muli %2, %arg1 : i32
    %4 = arith.addi %0, %3 : i32
    %c0_i32_0 = arith.constant 0 : i32
    %c0_i32_1 = arith.constant 0 : i32
    %c0_i32_2 = arith.constant 0 : i32
    return %arg0, %4, %c0_i32_0, %c0_i32_1 : i32, i32, i32, i32
  }
  func.func @transform_4(%arg0: i32, %arg1: i32) -> (i32, i32, i32) {
    %c0_i32 = arith.constant 0 : i32
    %c0_i32_0 = arith.constant 0 : i32
    %c0_i32_1 = arith.constant 0 : i32
    return %arg0, %c0_i32, %c0_i32_0 : i32, i32, i32
  }
  func.func @transform_5(%arg0: i32, %arg1: i32) -> (i32, i32, i32) {
    %c0_i32 = arith.constant 0 : i32
    %c0_i32_0 = arith.constant 0 : i32
    %c0_i32_1 = arith.constant 0 : i32
    return %arg0, %c0_i32, %c0_i32_0 : i32, i32, i32
  }
}

module attributes {stable_mosaic.version = 11 : i64} {
  func.func @_bidir_lstm_kernel(%arg0: i32, %arg1: i32, %arg2: memref<8x1xi32, #tpu.memory_space<vmem>>, %arg3: memref<1x8x8x128xbf16, #tpu.memory_space<vmem>>, %arg4: memref<1x32x128xbf16, #tpu.memory_space<vmem>>, %arg5: memref<1x8x8x32xf32, #tpu.memory_space<vmem>>, %arg6: memref<1x8x32xf32, #tpu.memory_space<vmem>>, %arg7: memref<1x8x32xf32, #tpu.memory_space<vmem>>, %arg8: memref<8x32xf32, #tpu.memory_space<vmem>>, %arg9: memref<8x32xf32, #tpu.memory_space<vmem>>) attributes {dimension_semantics = [#tpu.dimension_semantics<parallel>, #tpu.dimension_semantics<arbitrary>], iteration_bounds = array<i64: 2, 1>, scalar_prefetch = 0 : i64, scratch_operands = 2 : i64, tpu.core_type = #tpu.core_type<tc>, window_params = [{pipeline_mode = #tpu.pipeline_mode<synchronous>, transform_indices = @transform_0, window_bounds = array<i64: 8, 1>}, {transform_indices = @transform_1, window_bounds = array<i64: 1, 8, 8, 128>}, {transform_indices = @transform_2, window_bounds = array<i64: 1, 32, 128>}, {transform_indices = @transform_3, window_bounds = array<i64: 1, 8, 8, 32>}, {transform_indices = @transform_4, window_bounds = array<i64: 1, 8, 32>}, {transform_indices = @transform_5, window_bounds = array<i64: 1, 8, 32>}]} {
    %c0_i32 = arith.constant 0 : i32
    %0 = arith.cmpi eq, %arg1, %c0_i32 : i32
    %1 = arith.extui %0 : i1 to i32
    %c0_i32_0 = arith.constant 0 : i32
    %2 = arith.cmpi ne, %1, %c0_i32_0 : i32
    scf.if %2 {
      %cst_170 = arith.constant 0.000000e+00 : f32
      %453 = vector.broadcast %cst_170 : f32 to vector<8x32xf32>
      %c0_171 = arith.constant 0 : index
      %c0_172 = arith.constant 0 : index
      %454 = vector.load %arg8[%c0_171, %c0_172] : memref<8x32xf32, #tpu.memory_space<vmem>>, vector<8x32xf32>
      tpu.vector_store %arg8[%c0_171, %c0_172], %453 {strides = array<i32>} : memref<8x32xf32, #tpu.memory_space<vmem>>, vector<8x32xf32>,
      %cst_173 = arith.constant 0.000000e+00 : f32
      %455 = vector.broadcast %cst_173 : f32 to vector<8x32xf32>
      %c0_174 = arith.constant 0 : index
      %c0_175 = arith.constant 0 : index
      %456 = vector.load %arg9[%c0_174, %c0_175] : memref<8x32xf32, #tpu.memory_space<vmem>>, vector<8x32xf32>
      tpu.vector_store %arg9[%c0_174, %c0_175], %455 {strides = array<i32>} : memref<8x32xf32, #tpu.memory_space<vmem>>, vector<8x32xf32>,
    } else {
    }
    %c0 = arith.constant 0 : index
    %c0_1 = arith.constant 0 : index
    %3 = vector.load %arg2[%c0, %c0_1] : memref<8x1xi32, #tpu.memory_space<vmem>>, vector<8x1xi32>
    %c0_2 = arith.constant 0 : index
    %c0_3 = arith.constant 0 : index
    %c0_4 = arith.constant 0 : index
    %4 = vector.load %arg4[%c0_2, %c0_3, %c0_4] : memref<1x32x128xbf16, #tpu.memory_space<vmem>>, vector<1x32x128xbf16>
    %5 = vector.shape_cast %4 : vector<1x32x128xbf16> to vector<32x128xbf16>
    %c1_i32 = arith.constant 1 : i32
    %6 = arith.cmpi eq, %arg0, %c1_i32 : i32
    %c0_i32_5 = arith.constant 0 : i32
    %7 = arith.subi %c0_i32_5, %arg1 : i32
    %8 = arith.select %6, %7, %arg1 : i32
    %c8_i32 = arith.constant 8 : i32
    %9 = arith.muli %8, %c8_i32 : i32
    %c0_i32_6 = arith.constant 0 : i32
    %c7_i32 = arith.constant 7 : i32
    %10 = arith.subi %c7_i32, %c0_i32_6 : i32
    %11 = arith.select %6, %10, %c0_i32_6 : i32
    %c0_7 = arith.constant 0 : index
    %12 = arith.index_cast %11 : i32 to index
    %c0_8 = arith.constant 0 : index
    %c0_9 = arith.constant 0 : index
    %13 = vector.load %arg3[%c0_7, %12, %c0_8, %c0_9] : memref<1x8x8x128xbf16, #tpu.memory_space<vmem>>, vector<1x1x8x128xbf16>
    %14 = vector.shape_cast %13 : vector<1x1x8x128xbf16> to vector<8x128xbf16>
    %c0_10 = arith.constant 0 : index
    %c0_11 = arith.constant 0 : index
    %15 = vector.load %arg8[%c0_10, %c0_11] : memref<8x32xf32, #tpu.memory_space<vmem>>, vector<8x32xf32>
    %c0_12 = arith.constant 0 : index
    %c0_13 = arith.constant 0 : index
    %16 = vector.load %arg9[%c0_12, %c0_13] : memref<8x32xf32, #tpu.memory_space<vmem>>, vector<8x32xf32>
    %17 = arith.truncf %15 : vector<8x32xf32> to vector<8x32xbf16>
    %cst = arith.constant dense<0.000000e+00> : vector<8x128xf32>
    %18 = tpu.matmul %17, %5, %cst {dimension_numbers = #tpu.dot_dimension_numbers<[1], [0], [0], [1], [0, 0, 1, 1], [], []>} : vector<8x32xbf16>, vector<32x128xbf16>, vector<8x128xf32> -> vector<8x128xf32>
    %19 = arith.extf %14 : vector<8x128xbf16> to vector<8x128xf32>
    %20 = arith.addf %19, %18 : vector<8x128xf32>
    %21 = vector.extract_strided_slice %20 {offsets = [0, 0], sizes = [8, 32], strides = [1, 1]} : vector<8x128xf32> to vector<8x32xf32>
    %22 = arith.negf %21 : vector<8x32xf32>
    %23 = math.exp %22 : vector<8x32xf32>
    %cst_14 = arith.constant 1.000000e+00 : f32
    %24 = vector.broadcast %cst_14 : f32 to vector<8x32xf32>
    %25 = arith.addf %24, %23 : vector<8x32xf32>
    %26 = arith.divf %24, %25 : vector<8x32xf32>
    %27 = vector.extract_strided_slice %20 {offsets = [0, 32], sizes = [8, 32], strides = [1, 1]} : vector<8x128xf32> to vector<8x32xf32>
    %28 = arith.negf %27 : vector<8x32xf32>
    %29 = math.exp %28 : vector<8x32xf32>
    %cst_15 = arith.constant 1.000000e+00 : f32
    %30 = vector.broadcast %cst_15 : f32 to vector<8x32xf32>
    %31 = arith.addf %30, %29 : vector<8x32xf32>
    %32 = arith.divf %30, %31 : vector<8x32xf32>
    %33 = vector.extract_strided_slice %20 {offsets = [0, 64], sizes = [8, 32], strides = [1, 1]} : vector<8x128xf32> to vector<8x32xf32>
    %34 = math.tanh %33 : vector<8x32xf32>
    %35 = vector.extract_strided_slice %20 {offsets = [0, 96], sizes = [8, 32], strides = [1, 1]} : vector<8x128xf32> to vector<8x32xf32>
    %36 = arith.negf %35 : vector<8x32xf32>
    %37 = math.exp %36 : vector<8x32xf32>
    %cst_16 = arith.constant 1.000000e+00 : f32
    %38 = vector.broadcast %cst_16 : f32 to vector<8x32xf32>
    %39 = arith.addf %38, %37 : vector<8x32xf32>
    %40 = arith.divf %38, %39 : vector<8x32xf32>
    %41 = arith.mulf %32, %16 : vector<8x32xf32>
    %42 = arith.mulf %26, %34 : vector<8x32xf32>
    %43 = arith.addf %41, %42 : vector<8x32xf32>
    %44 = math.tanh %43 : vector<8x32xf32>
    %45 = arith.mulf %40, %44 : vector<8x32xf32>
    %46 = arith.addi %9, %11 : i32
    %47 = vector.broadcast %46 : i32 to vector<8x1xi32>
    %48 = arith.cmpi slt, %47, %3 : vector<8x1xi32>
    %49 = vector.shape_cast %48 : vector<8x1xi1> to vector<8x1xi1>
    %50 = vector.broadcast %49 : vector<8x1xi1> to vector<8x32xi1>
    %51 = arith.select %50, %45, %15 : vector<8x32xi1>, vector<8x32xf32>
    %c0_17 = arith.constant 0 : index
    %c0_18 = arith.constant 0 : index
    %52 = vector.load %arg8[%c0_17, %c0_18] : memref<8x32xf32, #tpu.memory_space<vmem>>, vector<8x32xf32>
    tpu.vector_store %arg8[%c0_17, %c0_18], %51 {strides = array<i32>} : memref<8x32xf32, #tpu.memory_space<vmem>>, vector<8x32xf32>,
    %53 = vector.shape_cast %48 : vector<8x1xi1> to vector<8x1xi1>
    %54 = vector.broadcast %53 : vector<8x1xi1> to vector<8x32xi1>
    %55 = arith.select %54, %43, %16 : vector<8x32xi1>, vector<8x32xf32>
    %c0_19 = arith.constant 0 : index
    %c0_20 = arith.constant 0 : index
    %56 = vector.load %arg9[%c0_19, %c0_20] : memref<8x32xf32, #tpu.memory_space<vmem>>, vector<8x32xf32>
    tpu.vector_store %arg9[%c0_19, %c0_20], %55 {strides = array<i32>} : memref<8x32xf32, #tpu.memory_space<vmem>>, vector<8x32xf32>,
    %cst_21 = arith.constant 0.000000e+00 : f32
    %57 = vector.shape_cast %48 : vector<8x1xi1> to vector<8x1xi1>
    %58 = vector.broadcast %57 : vector<8x1xi1> to vector<8x32xi1>
    %59 = vector.broadcast %cst_21 : f32 to vector<8x32xf32>
    %60 = arith.select %58, %45, %59 : vector<8x32xi1>, vector<8x32xf32>
    %c0_22 = arith.constant 0 : index
    %61 = arith.index_cast %11 : i32 to index
    %c0_23 = arith.constant 0 : index
    %c0_24 = arith.constant 0 : index
    %62 = vector.load %arg5[%c0_22, %61, %c0_23, %c0_24] : memref<1x8x8x32xf32, #tpu.memory_space<vmem>>, vector<1x1x8x32xf32>
    %63 = vector.shape_cast %62 : vector<1x1x8x32xf32> to vector<8x32xf32>
    %64 = vector.shape_cast %60 : vector<8x32xf32> to vector<1x1x8x32xf32>
    tpu.vector_store %arg5[%c0_22, %61, %c0_23, %c0_24], %64 {strides = array<i32>} : memref<1x8x8x32xf32, #tpu.memory_space<vmem>>, vector<1x1x8x32xf32>,
    %c1_i32_25 = arith.constant 1 : i32
    %c7_i32_26 = arith.constant 7 : i32
    %65 = arith.subi %c7_i32_26, %c1_i32_25 : i32
    %66 = arith.select %6, %65, %c1_i32_25 : i32
    %c0_27 = arith.constant 0 : index
    %67 = arith.index_cast %66 : i32 to index
    %c0_28 = arith.constant 0 : index
    %c0_29 = arith.constant 0 : index
    %68 = vector.load %arg3[%c0_27, %67, %c0_28, %c0_29] : memref<1x8x8x128xbf16, #tpu.memory_space<vmem>>, vector<1x1x8x128xbf16>
    %69 = vector.shape_cast %68 : vector<1x1x8x128xbf16> to vector<8x128xbf16>
    %c0_30 = arith.constant 0 : index
    %c0_31 = arith.constant 0 : index
    %70 = vector.load %arg8[%c0_30, %c0_31] : memref<8x32xf32, #tpu.memory_space<vmem>>, vector<8x32xf32>
    %c0_32 = arith.constant 0 : index
    %c0_33 = arith.constant 0 : index
    %71 = vector.load %arg9[%c0_32, %c0_33] : memref<8x32xf32, #tpu.memory_space<vmem>>, vector<8x32xf32>
    %72 = arith.truncf %70 : vector<8x32xf32> to vector<8x32xbf16>
    %cst_34 = arith.constant dense<0.000000e+00> : vector<8x128xf32>
    %73 = tpu.matmul %72, %5, %cst_34 {dimension_numbers = #tpu.dot_dimension_numbers<[1], [0], [0], [1], [0, 0, 1, 1], [], []>} : vector<8x32xbf16>, vector<32x128xbf16>, vector<8x128xf32> -> vector<8x128xf32>
    %74 = arith.extf %69 : vector<8x128xbf16> to vector<8x128xf32>
    %75 = arith.addf %74, %73 : vector<8x128xf32>
    %76 = vector.extract_strided_slice %75 {offsets = [0, 0], sizes = [8, 32], strides = [1, 1]} : vector<8x128xf32> to vector<8x32xf32>
    %77 = arith.negf %76 : vector<8x32xf32>
    %78 = math.exp %77 : vector<8x32xf32>
    %cst_35 = arith.constant 1.000000e+00 : f32
    %79 = vector.broadcast %cst_35 : f32 to vector<8x32xf32>
    %80 = arith.addf %79, %78 : vector<8x32xf32>
    %81 = arith.divf %79, %80 : vector<8x32xf32>
    %82 = vector.extract_strided_slice %75 {offsets = [0, 32], sizes = [8, 32], strides = [1, 1]} : vector<8x128xf32> to vector<8x32xf32>
    %83 = arith.negf %82 : vector<8x32xf32>
    %84 = math.exp %83 : vector<8x32xf32>
    %cst_36 = arith.constant 1.000000e+00 : f32
    %85 = vector.broadcast %cst_36 : f32 to vector<8x32xf32>
    %86 = arith.addf %85, %84 : vector<8x32xf32>
    %87 = arith.divf %85, %86 : vector<8x32xf32>
    %88 = vector.extract_strided_slice %75 {offsets = [0, 64], sizes = [8, 32], strides = [1, 1]} : vector<8x128xf32> to vector<8x32xf32>
    %89 = math.tanh %88 : vector<8x32xf32>
    %90 = vector.extract_strided_slice %75 {offsets = [0, 96], sizes = [8, 32], strides = [1, 1]} : vector<8x128xf32> to vector<8x32xf32>
    %91 = arith.negf %90 : vector<8x32xf32>
    %92 = math.exp %91 : vector<8x32xf32>
    %cst_37 = arith.constant 1.000000e+00 : f32
    %93 = vector.broadcast %cst_37 : f32 to vector<8x32xf32>
    %94 = arith.addf %93, %92 : vector<8x32xf32>
    %95 = arith.divf %93, %94 : vector<8x32xf32>
    %96 = arith.mulf %87, %71 : vector<8x32xf32>
    %97 = arith.mulf %81, %89 : vector<8x32xf32>
    %98 = arith.addf %96, %97 : vector<8x32xf32>
    %99 = math.tanh %98 : vector<8x32xf32>
    %100 = arith.mulf %95, %99 : vector<8x32xf32>
    %101 = arith.addi %9, %66 : i32
    %102 = vector.broadcast %101 : i32 to vector<8x1xi32>
    %103 = arith.cmpi slt, %102, %3 : vector<8x1xi32>
    %104 = vector.shape_cast %103 : vector<8x1xi1> to vector<8x1xi1>
    %105 = vector.broadcast %104 : vector<8x1xi1> to vector<8x32xi1>
    %106 = arith.select %105, %100, %70 : vector<8x32xi1>, vector<8x32xf32>
    %c0_38 = arith.constant 0 : index
    %c0_39 = arith.constant 0 : index
    %107 = vector.load %arg8[%c0_38, %c0_39] : memref<8x32xf32, #tpu.memory_space<vmem>>, vector<8x32xf32>
    tpu.vector_store %arg8[%c0_38, %c0_39], %106 {strides = array<i32>} : memref<8x32xf32, #tpu.memory_space<vmem>>, vector<8x32xf32>,
    %108 = vector.shape_cast %103 : vector<8x1xi1> to vector<8x1xi1>
    %109 = vector.broadcast %108 : vector<8x1xi1> to vector<8x32xi1>
    %110 = arith.select %109, %98, %71 : vector<8x32xi1>, vector<8x32xf32>
    %c0_40 = arith.constant 0 : index
    %c0_41 = arith.constant 0 : index
    %111 = vector.load %arg9[%c0_40, %c0_41] : memref<8x32xf32, #tpu.memory_space<vmem>>, vector<8x32xf32>
    tpu.vector_store %arg9[%c0_40, %c0_41], %110 {strides = array<i32>} : memref<8x32xf32, #tpu.memory_space<vmem>>, vector<8x32xf32>,
    %cst_42 = arith.constant 0.000000e+00 : f32
    %112 = vector.shape_cast %103 : vector<8x1xi1> to vector<8x1xi1>
    %113 = vector.broadcast %112 : vector<8x1xi1> to vector<8x32xi1>
    %114 = vector.broadcast %cst_42 : f32 to vector<8x32xf32>
    %115 = arith.select %113, %100, %114 : vector<8x32xi1>, vector<8x32xf32>
    %c0_43 = arith.constant 0 : index
    %116 = arith.index_cast %66 : i32 to index
    %c0_44 = arith.constant 0 : index
    %c0_45 = arith.constant 0 : index
    %117 = vector.load %arg5[%c0_43, %116, %c0_44, %c0_45] : memref<1x8x8x32xf32, #tpu.memory_space<vmem>>, vector<1x1x8x32xf32>
    %118 = vector.shape_cast %117 : vector<1x1x8x32xf32> to vector<8x32xf32>
    %119 = vector.shape_cast %115 : vector<8x32xf32> to vector<1x1x8x32xf32>
    tpu.vector_store %arg5[%c0_43, %116, %c0_44, %c0_45], %119 {strides = array<i32>} : memref<1x8x8x32xf32, #tpu.memory_space<vmem>>, vector<1x1x8x32xf32>,
    %c2_i32 = arith.constant 2 : i32
    %c7_i32_46 = arith.constant 7 : i32
    %120 = arith.subi %c7_i32_46, %c2_i32 : i32
    %121 = arith.select %6, %120, %c2_i32 : i32
    %c0_47 = arith.constant 0 : index
    %122 = arith.index_cast %121 : i32 to index
    %c0_48 = arith.constant 0 : index
    %c0_49 = arith.constant 0 : index
    %123 = vector.load %arg3[%c0_47, %122, %c0_48, %c0_49] : memref<1x8x8x128xbf16, #tpu.memory_space<vmem>>, vector<1x1x8x128xbf16>
    %124 = vector.shape_cast %123 : vector<1x1x8x128xbf16> to vector<8x128xbf16>
    %c0_50 = arith.constant 0 : index
    %c0_51 = arith.constant 0 : index
    %125 = vector.load %arg8[%c0_50, %c0_51] : memref<8x32xf32, #tpu.memory_space<vmem>>, vector<8x32xf32>
    %c0_52 = arith.constant 0 : index
    %c0_53 = arith.constant 0 : index
    %126 = vector.load %arg9[%c0_52, %c0_53] : memref<8x32xf32, #tpu.memory_space<vmem>>, vector<8x32xf32>
    %127 = arith.truncf %125 : vector<8x32xf32> to vector<8x32xbf16>
    %cst_54 = arith.constant dense<0.000000e+00> : vector<8x128xf32>
    %128 = tpu.matmul %127, %5, %cst_54 {dimension_numbers = #tpu.dot_dimension_numbers<[1], [0], [0], [1], [0, 0, 1, 1], [], []>} : vector<8x32xbf16>, vector<32x128xbf16>, vector<8x128xf32> -> vector<8x128xf32>
    %129 = arith.extf %124 : vector<8x128xbf16> to vector<8x128xf32>
    %130 = arith.addf %129, %128 : vector<8x128xf32>
    %131 = vector.extract_strided_slice %130 {offsets = [0, 0], sizes = [8, 32], strides = [1, 1]} : vector<8x128xf32> to vector<8x32xf32>
    %132 = arith.negf %131 : vector<8x32xf32>
    %133 = math.exp %132 : vector<8x32xf32>
    %cst_55 = arith.constant 1.000000e+00 : f32
    %134 = vector.broadcast %cst_55 : f32 to vector<8x32xf32>
    %135 = arith.addf %134, %133 : vector<8x32xf32>
    %136 = arith.divf %134, %135 : vector<8x32xf32>
    %137 = vector.extract_strided_slice %130 {offsets = [0, 32], sizes = [8, 32], strides = [1, 1]} : vector<8x128xf32> to vector<8x32xf32>
    %138 = arith.negf %137 : vector<8x32xf32>
    %139 = math.exp %138 : vector<8x32xf32>
    %cst_56 = arith.constant 1.000000e+00 : f32
    %140 = vector.broadcast %cst_56 : f32 to vector<8x32xf32>
    %141 = arith.addf %140, %139 : vector<8x32xf32>
    %142 = arith.divf %140, %141 : vector<8x32xf32>
    %143 = vector.extract_strided_slice %130 {offsets = [0, 64], sizes = [8, 32], strides = [1, 1]} : vector<8x128xf32> to vector<8x32xf32>
    %144 = math.tanh %143 : vector<8x32xf32>
    %145 = vector.extract_strided_slice %130 {offsets = [0, 96], sizes = [8, 32], strides = [1, 1]} : vector<8x128xf32> to vector<8x32xf32>
    %146 = arith.negf %145 : vector<8x32xf32>
    %147 = math.exp %146 : vector<8x32xf32>
    %cst_57 = arith.constant 1.000000e+00 : f32
    %148 = vector.broadcast %cst_57 : f32 to vector<8x32xf32>
    %149 = arith.addf %148, %147 : vector<8x32xf32>
    %150 = arith.divf %148, %149 : vector<8x32xf32>
    %151 = arith.mulf %142, %126 : vector<8x32xf32>
    %152 = arith.mulf %136, %144 : vector<8x32xf32>
    %153 = arith.addf %151, %152 : vector<8x32xf32>
    %154 = math.tanh %153 : vector<8x32xf32>
    %155 = arith.mulf %150, %154 : vector<8x32xf32>
    %156 = arith.addi %9, %121 : i32
    %157 = vector.broadcast %156 : i32 to vector<8x1xi32>
    %158 = arith.cmpi slt, %157, %3 : vector<8x1xi32>
    %159 = vector.shape_cast %158 : vector<8x1xi1> to vector<8x1xi1>
    %160 = vector.broadcast %159 : vector<8x1xi1> to vector<8x32xi1>
    %161 = arith.select %160, %155, %125 : vector<8x32xi1>, vector<8x32xf32>
    %c0_58 = arith.constant 0 : index
    %c0_59 = arith.constant 0 : index
    %162 = vector.load %arg8[%c0_58, %c0_59] : memref<8x32xf32, #tpu.memory_space<vmem>>, vector<8x32xf32>
    tpu.vector_store %arg8[%c0_58, %c0_59], %161 {strides = array<i32>} : memref<8x32xf32, #tpu.memory_space<vmem>>, vector<8x32xf32>,
    %163 = vector.shape_cast %158 : vector<8x1xi1> to vector<8x1xi1>
    %164 = vector.broadcast %163 : vector<8x1xi1> to vector<8x32xi1>
    %165 = arith.select %164, %153, %126 : vector<8x32xi1>, vector<8x32xf32>
    %c0_60 = arith.constant 0 : index
    %c0_61 = arith.constant 0 : index
    %166 = vector.load %arg9[%c0_60, %c0_61] : memref<8x32xf32, #tpu.memory_space<vmem>>, vector<8x32xf32>
    tpu.vector_store %arg9[%c0_60, %c0_61], %165 {strides = array<i32>} : memref<8x32xf32, #tpu.memory_space<vmem>>, vector<8x32xf32>,
    %cst_62 = arith.constant 0.000000e+00 : f32
    %167 = vector.shape_cast %158 : vector<8x1xi1> to vector<8x1xi1>
    %168 = vector.broadcast %167 : vector<8x1xi1> to vector<8x32xi1>
    %169 = vector.broadcast %cst_62 : f32 to vector<8x32xf32>
    %170 = arith.select %168, %155, %169 : vector<8x32xi1>, vector<8x32xf32>
    %c0_63 = arith.constant 0 : index
    %171 = arith.index_cast %121 : i32 to index
    %c0_64 = arith.constant 0 : index
    %c0_65 = arith.constant 0 : index
    %172 = vector.load %arg5[%c0_63, %171, %c0_64, %c0_65] : memref<1x8x8x32xf32, #tpu.memory_space<vmem>>, vector<1x1x8x32xf32>
    %173 = vector.shape_cast %172 : vector<1x1x8x32xf32> to vector<8x32xf32>
    %174 = vector.shape_cast %170 : vector<8x32xf32> to vector<1x1x8x32xf32>
    tpu.vector_store %arg5[%c0_63, %171, %c0_64, %c0_65], %174 {strides = array<i32>} : memref<1x8x8x32xf32, #tpu.memory_space<vmem>>, vector<1x1x8x32xf32>,
    %c3_i32 = arith.constant 3 : i32
    %c7_i32_66 = arith.constant 7 : i32
    %175 = arith.subi %c7_i32_66, %c3_i32 : i32
    %176 = arith.select %6, %175, %c3_i32 : i32
    %c0_67 = arith.constant 0 : index
    %177 = arith.index_cast %176 : i32 to index
    %c0_68 = arith.constant 0 : index
    %c0_69 = arith.constant 0 : index
    %178 = vector.load %arg3[%c0_67, %177, %c0_68, %c0_69] : memref<1x8x8x128xbf16, #tpu.memory_space<vmem>>, vector<1x1x8x128xbf16>
    %179 = vector.shape_cast %178 : vector<1x1x8x128xbf16> to vector<8x128xbf16>
    %c0_70 = arith.constant 0 : index
    %c0_71 = arith.constant 0 : index
    %180 = vector.load %arg8[%c0_70, %c0_71] : memref<8x32xf32, #tpu.memory_space<vmem>>, vector<8x32xf32>
    %c0_72 = arith.constant 0 : index
    %c0_73 = arith.constant 0 : index
    %181 = vector.load %arg9[%c0_72, %c0_73] : memref<8x32xf32, #tpu.memory_space<vmem>>, vector<8x32xf32>
    %182 = arith.truncf %180 : vector<8x32xf32> to vector<8x32xbf16>
    %cst_74 = arith.constant dense<0.000000e+00> : vector<8x128xf32>
    %183 = tpu.matmul %182, %5, %cst_74 {dimension_numbers = #tpu.dot_dimension_numbers<[1], [0], [0], [1], [0, 0, 1, 1], [], []>} : vector<8x32xbf16>, vector<32x128xbf16>, vector<8x128xf32> -> vector<8x128xf32>
    %184 = arith.extf %179 : vector<8x128xbf16> to vector<8x128xf32>
    %185 = arith.addf %184, %183 : vector<8x128xf32>
    %186 = vector.extract_strided_slice %185 {offsets = [0, 0], sizes = [8, 32], strides = [1, 1]} : vector<8x128xf32> to vector<8x32xf32>
    %187 = arith.negf %186 : vector<8x32xf32>
    %188 = math.exp %187 : vector<8x32xf32>
    %cst_75 = arith.constant 1.000000e+00 : f32
    %189 = vector.broadcast %cst_75 : f32 to vector<8x32xf32>
    %190 = arith.addf %189, %188 : vector<8x32xf32>
    %191 = arith.divf %189, %190 : vector<8x32xf32>
    %192 = vector.extract_strided_slice %185 {offsets = [0, 32], sizes = [8, 32], strides = [1, 1]} : vector<8x128xf32> to vector<8x32xf32>
    %193 = arith.negf %192 : vector<8x32xf32>
    %194 = math.exp %193 : vector<8x32xf32>
    %cst_76 = arith.constant 1.000000e+00 : f32
    %195 = vector.broadcast %cst_76 : f32 to vector<8x32xf32>
    %196 = arith.addf %195, %194 : vector<8x32xf32>
    %197 = arith.divf %195, %196 : vector<8x32xf32>
    %198 = vector.extract_strided_slice %185 {offsets = [0, 64], sizes = [8, 32], strides = [1, 1]} : vector<8x128xf32> to vector<8x32xf32>
    %199 = math.tanh %198 : vector<8x32xf32>
    %200 = vector.extract_strided_slice %185 {offsets = [0, 96], sizes = [8, 32], strides = [1, 1]} : vector<8x128xf32> to vector<8x32xf32>
    %201 = arith.negf %200 : vector<8x32xf32>
    %202 = math.exp %201 : vector<8x32xf32>
    %cst_77 = arith.constant 1.000000e+00 : f32
    %203 = vector.broadcast %cst_77 : f32 to vector<8x32xf32>
    %204 = arith.addf %203, %202 : vector<8x32xf32>
    %205 = arith.divf %203, %204 : vector<8x32xf32>
    %206 = arith.mulf %197, %181 : vector<8x32xf32>
    %207 = arith.mulf %191, %199 : vector<8x32xf32>
    %208 = arith.addf %206, %207 : vector<8x32xf32>
    %209 = math.tanh %208 : vector<8x32xf32>
    %210 = arith.mulf %205, %209 : vector<8x32xf32>
    %211 = arith.addi %9, %176 : i32
    %212 = vector.broadcast %211 : i32 to vector<8x1xi32>
    %213 = arith.cmpi slt, %212, %3 : vector<8x1xi32>
    %214 = vector.shape_cast %213 : vector<8x1xi1> to vector<8x1xi1>
    %215 = vector.broadcast %214 : vector<8x1xi1> to vector<8x32xi1>
    %216 = arith.select %215, %210, %180 : vector<8x32xi1>, vector<8x32xf32>
    %c0_78 = arith.constant 0 : index
    %c0_79 = arith.constant 0 : index
    %217 = vector.load %arg8[%c0_78, %c0_79] : memref<8x32xf32, #tpu.memory_space<vmem>>, vector<8x32xf32>
    tpu.vector_store %arg8[%c0_78, %c0_79], %216 {strides = array<i32>} : memref<8x32xf32, #tpu.memory_space<vmem>>, vector<8x32xf32>,
    %218 = vector.shape_cast %213 : vector<8x1xi1> to vector<8x1xi1>
    %219 = vector.broadcast %218 : vector<8x1xi1> to vector<8x32xi1>
    %220 = arith.select %219, %208, %181 : vector<8x32xi1>, vector<8x32xf32>
    %c0_80 = arith.constant 0 : index
    %c0_81 = arith.constant 0 : index
    %221 = vector.load %arg9[%c0_80, %c0_81] : memref<8x32xf32, #tpu.memory_space<vmem>>, vector<8x32xf32>
    tpu.vector_store %arg9[%c0_80, %c0_81], %220 {strides = array<i32>} : memref<8x32xf32, #tpu.memory_space<vmem>>, vector<8x32xf32>,
    %cst_82 = arith.constant 0.000000e+00 : f32
    %222 = vector.shape_cast %213 : vector<8x1xi1> to vector<8x1xi1>
    %223 = vector.broadcast %222 : vector<8x1xi1> to vector<8x32xi1>
    %224 = vector.broadcast %cst_82 : f32 to vector<8x32xf32>
    %225 = arith.select %223, %210, %224 : vector<8x32xi1>, vector<8x32xf32>
    %c0_83 = arith.constant 0 : index
    %226 = arith.index_cast %176 : i32 to index
    %c0_84 = arith.constant 0 : index
    %c0_85 = arith.constant 0 : index
    %227 = vector.load %arg5[%c0_83, %226, %c0_84, %c0_85] : memref<1x8x8x32xf32, #tpu.memory_space<vmem>>, vector<1x1x8x32xf32>
    %228 = vector.shape_cast %227 : vector<1x1x8x32xf32> to vector<8x32xf32>
    %229 = vector.shape_cast %225 : vector<8x32xf32> to vector<1x1x8x32xf32>
    tpu.vector_store %arg5[%c0_83, %226, %c0_84, %c0_85], %229 {strides = array<i32>} : memref<1x8x8x32xf32, #tpu.memory_space<vmem>>, vector<1x1x8x32xf32>,
    %c4_i32 = arith.constant 4 : i32
    %c7_i32_86 = arith.constant 7 : i32
    %230 = arith.subi %c7_i32_86, %c4_i32 : i32
    %231 = arith.select %6, %230, %c4_i32 : i32
    %c0_87 = arith.constant 0 : index
    %232 = arith.index_cast %231 : i32 to index
    %c0_88 = arith.constant 0 : index
    %c0_89 = arith.constant 0 : index
    %233 = vector.load %arg3[%c0_87, %232, %c0_88, %c0_89] : memref<1x8x8x128xbf16, #tpu.memory_space<vmem>>, vector<1x1x8x128xbf16>
    %234 = vector.shape_cast %233 : vector<1x1x8x128xbf16> to vector<8x128xbf16>
    %c0_90 = arith.constant 0 : index
    %c0_91 = arith.constant 0 : index
    %235 = vector.load %arg8[%c0_90, %c0_91] : memref<8x32xf32, #tpu.memory_space<vmem>>, vector<8x32xf32>
    %c0_92 = arith.constant 0 : index
    %c0_93 = arith.constant 0 : index
    %236 = vector.load %arg9[%c0_92, %c0_93] : memref<8x32xf32, #tpu.memory_space<vmem>>, vector<8x32xf32>
    %237 = arith.truncf %235 : vector<8x32xf32> to vector<8x32xbf16>
    %cst_94 = arith.constant dense<0.000000e+00> : vector<8x128xf32>
    %238 = tpu.matmul %237, %5, %cst_94 {dimension_numbers = #tpu.dot_dimension_numbers<[1], [0], [0], [1], [0, 0, 1, 1], [], []>} : vector<8x32xbf16>, vector<32x128xbf16>, vector<8x128xf32> -> vector<8x128xf32>
    %239 = arith.extf %234 : vector<8x128xbf16> to vector<8x128xf32>
    %240 = arith.addf %239, %238 : vector<8x128xf32>
    %241 = vector.extract_strided_slice %240 {offsets = [0, 0], sizes = [8, 32], strides = [1, 1]} : vector<8x128xf32> to vector<8x32xf32>
    %242 = arith.negf %241 : vector<8x32xf32>
    %243 = math.exp %242 : vector<8x32xf32>
    %cst_95 = arith.constant 1.000000e+00 : f32
    %244 = vector.broadcast %cst_95 : f32 to vector<8x32xf32>
    %245 = arith.addf %244, %243 : vector<8x32xf32>
    %246 = arith.divf %244, %245 : vector<8x32xf32>
    %247 = vector.extract_strided_slice %240 {offsets = [0, 32], sizes = [8, 32], strides = [1, 1]} : vector<8x128xf32> to vector<8x32xf32>
    %248 = arith.negf %247 : vector<8x32xf32>
    %249 = math.exp %248 : vector<8x32xf32>
    %cst_96 = arith.constant 1.000000e+00 : f32
    %250 = vector.broadcast %cst_96 : f32 to vector<8x32xf32>
    %251 = arith.addf %250, %249 : vector<8x32xf32>
    %252 = arith.divf %250, %251 : vector<8x32xf32>
    %253 = vector.extract_strided_slice %240 {offsets = [0, 64], sizes = [8, 32], strides = [1, 1]} : vector<8x128xf32> to vector<8x32xf32>
    %254 = math.tanh %253 : vector<8x32xf32>
    %255 = vector.extract_strided_slice %240 {offsets = [0, 96], sizes = [8, 32], strides = [1, 1]} : vector<8x128xf32> to vector<8x32xf32>
    %256 = arith.negf %255 : vector<8x32xf32>
    %257 = math.exp %256 : vector<8x32xf32>
    %cst_97 = arith.constant 1.000000e+00 : f32
    %258 = vector.broadcast %cst_97 : f32 to vector<8x32xf32>
    %259 = arith.addf %258, %257 : vector<8x32xf32>
    %260 = arith.divf %258, %259 : vector<8x32xf32>
    %261 = arith.mulf %252, %236 : vector<8x32xf32>
    %262 = arith.mulf %246, %254 : vector<8x32xf32>
    %263 = arith.addf %261, %262 : vector<8x32xf32>
    %264 = math.tanh %263 : vector<8x32xf32>
    %265 = arith.mulf %260, %264 : vector<8x32xf32>
    %266 = arith.addi %9, %231 : i32
    %267 = vector.broadcast %266 : i32 to vector<8x1xi32>
    %268 = arith.cmpi slt, %267, %3 : vector<8x1xi32>
    %269 = vector.shape_cast %268 : vector<8x1xi1> to vector<8x1xi1>
    %270 = vector.broadcast %269 : vector<8x1xi1> to vector<8x32xi1>
    %271 = arith.select %270, %265, %235 : vector<8x32xi1>, vector<8x32xf32>
    %c0_98 = arith.constant 0 : index
    %c0_99 = arith.constant 0 : index
    %272 = vector.load %arg8[%c0_98, %c0_99] : memref<8x32xf32, #tpu.memory_space<vmem>>, vector<8x32xf32>
    tpu.vector_store %arg8[%c0_98, %c0_99], %271 {strides = array<i32>} : memref<8x32xf32, #tpu.memory_space<vmem>>, vector<8x32xf32>,
    %273 = vector.shape_cast %268 : vector<8x1xi1> to vector<8x1xi1>
    %274 = vector.broadcast %273 : vector<8x1xi1> to vector<8x32xi1>
    %275 = arith.select %274, %263, %236 : vector<8x32xi1>, vector<8x32xf32>
    %c0_100 = arith.constant 0 : index
    %c0_101 = arith.constant 0 : index
    %276 = vector.load %arg9[%c0_100, %c0_101] : memref<8x32xf32, #tpu.memory_space<vmem>>, vector<8x32xf32>
    tpu.vector_store %arg9[%c0_100, %c0_101], %275 {strides = array<i32>} : memref<8x32xf32, #tpu.memory_space<vmem>>, vector<8x32xf32>,
    %cst_102 = arith.constant 0.000000e+00 : f32
    %277 = vector.shape_cast %268 : vector<8x1xi1> to vector<8x1xi1>
    %278 = vector.broadcast %277 : vector<8x1xi1> to vector<8x32xi1>
    %279 = vector.broadcast %cst_102 : f32 to vector<8x32xf32>
    %280 = arith.select %278, %265, %279 : vector<8x32xi1>, vector<8x32xf32>
    %c0_103 = arith.constant 0 : index
    %281 = arith.index_cast %231 : i32 to index
    %c0_104 = arith.constant 0 : index
    %c0_105 = arith.constant 0 : index
    %282 = vector.load %arg5[%c0_103, %281, %c0_104, %c0_105] : memref<1x8x8x32xf32, #tpu.memory_space<vmem>>, vector<1x1x8x32xf32>
    %283 = vector.shape_cast %282 : vector<1x1x8x32xf32> to vector<8x32xf32>
    %284 = vector.shape_cast %280 : vector<8x32xf32> to vector<1x1x8x32xf32>
    tpu.vector_store %arg5[%c0_103, %281, %c0_104, %c0_105], %284 {strides = array<i32>} : memref<1x8x8x32xf32, #tpu.memory_space<vmem>>, vector<1x1x8x32xf32>,
    %c5_i32 = arith.constant 5 : i32
    %c7_i32_106 = arith.constant 7 : i32
    %285 = arith.subi %c7_i32_106, %c5_i32 : i32
    %286 = arith.select %6, %285, %c5_i32 : i32
    %c0_107 = arith.constant 0 : index
    %287 = arith.index_cast %286 : i32 to index
    %c0_108 = arith.constant 0 : index
    %c0_109 = arith.constant 0 : index
    %288 = vector.load %arg3[%c0_107, %287, %c0_108, %c0_109] : memref<1x8x8x128xbf16, #tpu.memory_space<vmem>>, vector<1x1x8x128xbf16>
    %289 = vector.shape_cast %288 : vector<1x1x8x128xbf16> to vector<8x128xbf16>
    %c0_110 = arith.constant 0 : index
    %c0_111 = arith.constant 0 : index
    %290 = vector.load %arg8[%c0_110, %c0_111] : memref<8x32xf32, #tpu.memory_space<vmem>>, vector<8x32xf32>
    %c0_112 = arith.constant 0 : index
    %c0_113 = arith.constant 0 : index
    %291 = vector.load %arg9[%c0_112, %c0_113] : memref<8x32xf32, #tpu.memory_space<vmem>>, vector<8x32xf32>
    %292 = arith.truncf %290 : vector<8x32xf32> to vector<8x32xbf16>
    %cst_114 = arith.constant dense<0.000000e+00> : vector<8x128xf32>
    %293 = tpu.matmul %292, %5, %cst_114 {dimension_numbers = #tpu.dot_dimension_numbers<[1], [0], [0], [1], [0, 0, 1, 1], [], []>} : vector<8x32xbf16>, vector<32x128xbf16>, vector<8x128xf32> -> vector<8x128xf32>
    %294 = arith.extf %289 : vector<8x128xbf16> to vector<8x128xf32>
    %295 = arith.addf %294, %293 : vector<8x128xf32>
    %296 = vector.extract_strided_slice %295 {offsets = [0, 0], sizes = [8, 32], strides = [1, 1]} : vector<8x128xf32> to vector<8x32xf32>
    %297 = arith.negf %296 : vector<8x32xf32>
    %298 = math.exp %297 : vector<8x32xf32>
    %cst_115 = arith.constant 1.000000e+00 : f32
    %299 = vector.broadcast %cst_115 : f32 to vector<8x32xf32>
    %300 = arith.addf %299, %298 : vector<8x32xf32>
    %301 = arith.divf %299, %300 : vector<8x32xf32>
    %302 = vector.extract_strided_slice %295 {offsets = [0, 32], sizes = [8, 32], strides = [1, 1]} : vector<8x128xf32> to vector<8x32xf32>
    %303 = arith.negf %302 : vector<8x32xf32>
    %304 = math.exp %303 : vector<8x32xf32>
    %cst_116 = arith.constant 1.000000e+00 : f32
    %305 = vector.broadcast %cst_116 : f32 to vector<8x32xf32>
    %306 = arith.addf %305, %304 : vector<8x32xf32>
    %307 = arith.divf %305, %306 : vector<8x32xf32>
    %308 = vector.extract_strided_slice %295 {offsets = [0, 64], sizes = [8, 32], strides = [1, 1]} : vector<8x128xf32> to vector<8x32xf32>
    %309 = math.tanh %308 : vector<8x32xf32>
    %310 = vector.extract_strided_slice %295 {offsets = [0, 96], sizes = [8, 32], strides = [1, 1]} : vector<8x128xf32> to vector<8x32xf32>
    %311 = arith.negf %310 : vector<8x32xf32>
    %312 = math.exp %311 : vector<8x32xf32>
    %cst_117 = arith.constant 1.000000e+00 : f32
    %313 = vector.broadcast %cst_117 : f32 to vector<8x32xf32>
    %314 = arith.addf %313, %312 : vector<8x32xf32>
    %315 = arith.divf %313, %314 : vector<8x32xf32>
    %316 = arith.mulf %307, %291 : vector<8x32xf32>
    %317 = arith.mulf %301, %309 : vector<8x32xf32>
    %318 = arith.addf %316, %317 : vector<8x32xf32>
    %319 = math.tanh %318 : vector<8x32xf32>
    %320 = arith.mulf %315, %319 : vector<8x32xf32>
    %321 = arith.addi %9, %286 : i32
    %322 = vector.broadcast %321 : i32 to vector<8x1xi32>
    %323 = arith.cmpi slt, %322, %3 : vector<8x1xi32>
    %324 = vector.shape_cast %323 : vector<8x1xi1> to vector<8x1xi1>
    %325 = vector.broadcast %324 : vector<8x1xi1> to vector<8x32xi1>
    %326 = arith.select %325, %320, %290 : vector<8x32xi1>, vector<8x32xf32>
    %c0_118 = arith.constant 0 : index
    %c0_119 = arith.constant 0 : index
    %327 = vector.load %arg8[%c0_118, %c0_119] : memref<8x32xf32, #tpu.memory_space<vmem>>, vector<8x32xf32>
    tpu.vector_store %arg8[%c0_118, %c0_119], %326 {strides = array<i32>} : memref<8x32xf32, #tpu.memory_space<vmem>>, vector<8x32xf32>,
    %328 = vector.shape_cast %323 : vector<8x1xi1> to vector<8x1xi1>
    %329 = vector.broadcast %328 : vector<8x1xi1> to vector<8x32xi1>
    %330 = arith.select %329, %318, %291 : vector<8x32xi1>, vector<8x32xf32>
    %c0_120 = arith.constant 0 : index
    %c0_121 = arith.constant 0 : index
    %331 = vector.load %arg9[%c0_120, %c0_121] : memref<8x32xf32, #tpu.memory_space<vmem>>, vector<8x32xf32>
    tpu.vector_store %arg9[%c0_120, %c0_121], %330 {strides = array<i32>} : memref<8x32xf32, #tpu.memory_space<vmem>>, vector<8x32xf32>,
    %cst_122 = arith.constant 0.000000e+00 : f32
    %332 = vector.shape_cast %323 : vector<8x1xi1> to vector<8x1xi1>
    %333 = vector.broadcast %332 : vector<8x1xi1> to vector<8x32xi1>
    %334 = vector.broadcast %cst_122 : f32 to vector<8x32xf32>
    %335 = arith.select %333, %320, %334 : vector<8x32xi1>, vector<8x32xf32>
    %c0_123 = arith.constant 0 : index
    %336 = arith.index_cast %286 : i32 to index
    %c0_124 = arith.constant 0 : index
    %c0_125 = arith.constant 0 : index
    %337 = vector.load %arg5[%c0_123, %336, %c0_124, %c0_125] : memref<1x8x8x32xf32, #tpu.memory_space<vmem>>, vector<1x1x8x32xf32>
    %338 = vector.shape_cast %337 : vector<1x1x8x32xf32> to vector<8x32xf32>
    %339 = vector.shape_cast %335 : vector<8x32xf32> to vector<1x1x8x32xf32>
    tpu.vector_store %arg5[%c0_123, %336, %c0_124, %c0_125], %339 {strides = array<i32>} : memref<1x8x8x32xf32, #tpu.memory_space<vmem>>, vector<1x1x8x32xf32>,
    %c6_i32 = arith.constant 6 : i32
    %c7_i32_126 = arith.constant 7 : i32
    %340 = arith.subi %c7_i32_126, %c6_i32 : i32
    %341 = arith.select %6, %340, %c6_i32 : i32
    %c0_127 = arith.constant 0 : index
    %342 = arith.index_cast %341 : i32 to index
    %c0_128 = arith.constant 0 : index
    %c0_129 = arith.constant 0 : index
    %343 = vector.load %arg3[%c0_127, %342, %c0_128, %c0_129] : memref<1x8x8x128xbf16, #tpu.memory_space<vmem>>, vector<1x1x8x128xbf16>
    %344 = vector.shape_cast %343 : vector<1x1x8x128xbf16> to vector<8x128xbf16>
    %c0_130 = arith.constant 0 : index
    %c0_131 = arith.constant 0 : index
    %345 = vector.load %arg8[%c0_130, %c0_131] : memref<8x32xf32, #tpu.memory_space<vmem>>, vector<8x32xf32>
    %c0_132 = arith.constant 0 : index
    %c0_133 = arith.constant 0 : index
    %346 = vector.load %arg9[%c0_132, %c0_133] : memref<8x32xf32, #tpu.memory_space<vmem>>, vector<8x32xf32>
    %347 = arith.truncf %345 : vector<8x32xf32> to vector<8x32xbf16>
    %cst_134 = arith.constant dense<0.000000e+00> : vector<8x128xf32>
    %348 = tpu.matmul %347, %5, %cst_134 {dimension_numbers = #tpu.dot_dimension_numbers<[1], [0], [0], [1], [0, 0, 1, 1], [], []>} : vector<8x32xbf16>, vector<32x128xbf16>, vector<8x128xf32> -> vector<8x128xf32>
    %349 = arith.extf %344 : vector<8x128xbf16> to vector<8x128xf32>
    %350 = arith.addf %349, %348 : vector<8x128xf32>
    %351 = vector.extract_strided_slice %350 {offsets = [0, 0], sizes = [8, 32], strides = [1, 1]} : vector<8x128xf32> to vector<8x32xf32>
    %352 = arith.negf %351 : vector<8x32xf32>
    %353 = math.exp %352 : vector<8x32xf32>
    %cst_135 = arith.constant 1.000000e+00 : f32
    %354 = vector.broadcast %cst_135 : f32 to vector<8x32xf32>
    %355 = arith.addf %354, %353 : vector<8x32xf32>
    %356 = arith.divf %354, %355 : vector<8x32xf32>
    %357 = vector.extract_strided_slice %350 {offsets = [0, 32], sizes = [8, 32], strides = [1, 1]} : vector<8x128xf32> to vector<8x32xf32>
    %358 = arith.negf %357 : vector<8x32xf32>
    %359 = math.exp %358 : vector<8x32xf32>
    %cst_136 = arith.constant 1.000000e+00 : f32
    %360 = vector.broadcast %cst_136 : f32 to vector<8x32xf32>
    %361 = arith.addf %360, %359 : vector<8x32xf32>
    %362 = arith.divf %360, %361 : vector<8x32xf32>
    %363 = vector.extract_strided_slice %350 {offsets = [0, 64], sizes = [8, 32], strides = [1, 1]} : vector<8x128xf32> to vector<8x32xf32>
    %364 = math.tanh %363 : vector<8x32xf32>
    %365 = vector.extract_strided_slice %350 {offsets = [0, 96], sizes = [8, 32], strides = [1, 1]} : vector<8x128xf32> to vector<8x32xf32>
    %366 = arith.negf %365 : vector<8x32xf32>
    %367 = math.exp %366 : vector<8x32xf32>
    %cst_137 = arith.constant 1.000000e+00 : f32
    %368 = vector.broadcast %cst_137 : f32 to vector<8x32xf32>
    %369 = arith.addf %368, %367 : vector<8x32xf32>
    %370 = arith.divf %368, %369 : vector<8x32xf32>
    %371 = arith.mulf %362, %346 : vector<8x32xf32>
    %372 = arith.mulf %356, %364 : vector<8x32xf32>
    %373 = arith.addf %371, %372 : vector<8x32xf32>
    %374 = math.tanh %373 : vector<8x32xf32>
    %375 = arith.mulf %370, %374 : vector<8x32xf32>
    %376 = arith.addi %9, %341 : i32
    %377 = vector.broadcast %376 : i32 to vector<8x1xi32>
    %378 = arith.cmpi slt, %377, %3 : vector<8x1xi32>
    %379 = vector.shape_cast %378 : vector<8x1xi1> to vector<8x1xi1>
    %380 = vector.broadcast %379 : vector<8x1xi1> to vector<8x32xi1>
    %381 = arith.select %380, %375, %345 : vector<8x32xi1>, vector<8x32xf32>
    %c0_138 = arith.constant 0 : index
    %c0_139 = arith.constant 0 : index
    %382 = vector.load %arg8[%c0_138, %c0_139] : memref<8x32xf32, #tpu.memory_space<vmem>>, vector<8x32xf32>
    tpu.vector_store %arg8[%c0_138, %c0_139], %381 {strides = array<i32>} : memref<8x32xf32, #tpu.memory_space<vmem>>, vector<8x32xf32>,
    %383 = vector.shape_cast %378 : vector<8x1xi1> to vector<8x1xi1>
    %384 = vector.broadcast %383 : vector<8x1xi1> to vector<8x32xi1>
    %385 = arith.select %384, %373, %346 : vector<8x32xi1>, vector<8x32xf32>
    %c0_140 = arith.constant 0 : index
    %c0_141 = arith.constant 0 : index
    %386 = vector.load %arg9[%c0_140, %c0_141] : memref<8x32xf32, #tpu.memory_space<vmem>>, vector<8x32xf32>
    tpu.vector_store %arg9[%c0_140, %c0_141], %385 {strides = array<i32>} : memref<8x32xf32, #tpu.memory_space<vmem>>, vector<8x32xf32>,
    %cst_142 = arith.constant 0.000000e+00 : f32
    %387 = vector.shape_cast %378 : vector<8x1xi1> to vector<8x1xi1>
    %388 = vector.broadcast %387 : vector<8x1xi1> to vector<8x32xi1>
    %389 = vector.broadcast %cst_142 : f32 to vector<8x32xf32>
    %390 = arith.select %388, %375, %389 : vector<8x32xi1>, vector<8x32xf32>
    %c0_143 = arith.constant 0 : index
    %391 = arith.index_cast %341 : i32 to index
    %c0_144 = arith.constant 0 : index
    %c0_145 = arith.constant 0 : index
    %392 = vector.load %arg5[%c0_143, %391, %c0_144, %c0_145] : memref<1x8x8x32xf32, #tpu.memory_space<vmem>>, vector<1x1x8x32xf32>
    %393 = vector.shape_cast %392 : vector<1x1x8x32xf32> to vector<8x32xf32>
    %394 = vector.shape_cast %390 : vector<8x32xf32> to vector<1x1x8x32xf32>
    tpu.vector_store %arg5[%c0_143, %391, %c0_144, %c0_145], %394 {strides = array<i32>} : memref<1x8x8x32xf32, #tpu.memory_space<vmem>>, vector<1x1x8x32xf32>,
    %c7_i32_146 = arith.constant 7 : i32
    %c7_i32_147 = arith.constant 7 : i32
    %395 = arith.subi %c7_i32_147, %c7_i32_146 : i32
    %396 = arith.select %6, %395, %c7_i32_146 : i32
    %c0_148 = arith.constant 0 : index
    %397 = arith.index_cast %396 : i32 to index
    %c0_149 = arith.constant 0 : index
    %c0_150 = arith.constant 0 : index
    %398 = vector.load %arg3[%c0_148, %397, %c0_149, %c0_150] : memref<1x8x8x128xbf16, #tpu.memory_space<vmem>>, vector<1x1x8x128xbf16>
    %399 = vector.shape_cast %398 : vector<1x1x8x128xbf16> to vector<8x128xbf16>
    %c0_151 = arith.constant 0 : index
    %c0_152 = arith.constant 0 : index
    %400 = vector.load %arg8[%c0_151, %c0_152] : memref<8x32xf32, #tpu.memory_space<vmem>>, vector<8x32xf32>
    %c0_153 = arith.constant 0 : index
    %c0_154 = arith.constant 0 : index
    %401 = vector.load %arg9[%c0_153, %c0_154] : memref<8x32xf32, #tpu.memory_space<vmem>>, vector<8x32xf32>
    %402 = arith.truncf %400 : vector<8x32xf32> to vector<8x32xbf16>
    %cst_155 = arith.constant dense<0.000000e+00> : vector<8x128xf32>
    %403 = tpu.matmul %402, %5, %cst_155 {dimension_numbers = #tpu.dot_dimension_numbers<[1], [0], [0], [1], [0, 0, 1, 1], [], []>} : vector<8x32xbf16>, vector<32x128xbf16>, vector<8x128xf32> -> vector<8x128xf32>
    %404 = arith.extf %399 : vector<8x128xbf16> to vector<8x128xf32>
    %405 = arith.addf %404, %403 : vector<8x128xf32>
    %406 = vector.extract_strided_slice %405 {offsets = [0, 0], sizes = [8, 32], strides = [1, 1]} : vector<8x128xf32> to vector<8x32xf32>
    %407 = arith.negf %406 : vector<8x32xf32>
    %408 = math.exp %407 : vector<8x32xf32>
    %cst_156 = arith.constant 1.000000e+00 : f32
    %409 = vector.broadcast %cst_156 : f32 to vector<8x32xf32>
    %410 = arith.addf %409, %408 : vector<8x32xf32>
    %411 = arith.divf %409, %410 : vector<8x32xf32>
    %412 = vector.extract_strided_slice %405 {offsets = [0, 32], sizes = [8, 32], strides = [1, 1]} : vector<8x128xf32> to vector<8x32xf32>
    %413 = arith.negf %412 : vector<8x32xf32>
    %414 = math.exp %413 : vector<8x32xf32>
    %cst_157 = arith.constant 1.000000e+00 : f32
    %415 = vector.broadcast %cst_157 : f32 to vector<8x32xf32>
    %416 = arith.addf %415, %414 : vector<8x32xf32>
    %417 = arith.divf %415, %416 : vector<8x32xf32>
    %418 = vector.extract_strided_slice %405 {offsets = [0, 64], sizes = [8, 32], strides = [1, 1]} : vector<8x128xf32> to vector<8x32xf32>
    %419 = math.tanh %418 : vector<8x32xf32>
    %420 = vector.extract_strided_slice %405 {offsets = [0, 96], sizes = [8, 32], strides = [1, 1]} : vector<8x128xf32> to vector<8x32xf32>
    %421 = arith.negf %420 : vector<8x32xf32>
    %422 = math.exp %421 : vector<8x32xf32>
    %cst_158 = arith.constant 1.000000e+00 : f32
    %423 = vector.broadcast %cst_158 : f32 to vector<8x32xf32>
    %424 = arith.addf %423, %422 : vector<8x32xf32>
    %425 = arith.divf %423, %424 : vector<8x32xf32>
    %426 = arith.mulf %417, %401 : vector<8x32xf32>
    %427 = arith.mulf %411, %419 : vector<8x32xf32>
    %428 = arith.addf %426, %427 : vector<8x32xf32>
    %429 = math.tanh %428 : vector<8x32xf32>
    %430 = arith.mulf %425, %429 : vector<8x32xf32>
    %431 = arith.addi %9, %396 : i32
    %432 = vector.broadcast %431 : i32 to vector<8x1xi32>
    %433 = arith.cmpi slt, %432, %3 : vector<8x1xi32>
    %434 = vector.shape_cast %433 : vector<8x1xi1> to vector<8x1xi1>
    %435 = vector.broadcast %434 : vector<8x1xi1> to vector<8x32xi1>
    %436 = arith.select %435, %430, %400 : vector<8x32xi1>, vector<8x32xf32>
    %c0_159 = arith.constant 0 : index
    %c0_160 = arith.constant 0 : index
    %437 = vector.load %arg8[%c0_159, %c0_160] : memref<8x32xf32, #tpu.memory_space<vmem>>, vector<8x32xf32>
    tpu.vector_store %arg8[%c0_159, %c0_160], %436 {strides = array<i32>} : memref<8x32xf32, #tpu.memory_space<vmem>>, vector<8x32xf32>,
    %438 = vector.shape_cast %433 : vector<8x1xi1> to vector<8x1xi1>
    %439 = vector.broadcast %438 : vector<8x1xi1> to vector<8x32xi1>
    %440 = arith.select %439, %428, %401 : vector<8x32xi1>, vector<8x32xf32>
    %c0_161 = arith.constant 0 : index
    %c0_162 = arith.constant 0 : index
    %441 = vector.load %arg9[%c0_161, %c0_162] : memref<8x32xf32, #tpu.memory_space<vmem>>, vector<8x32xf32>
    tpu.vector_store %arg9[%c0_161, %c0_162], %440 {strides = array<i32>} : memref<8x32xf32, #tpu.memory_space<vmem>>, vector<8x32xf32>,
    %cst_163 = arith.constant 0.000000e+00 : f32
    %442 = vector.shape_cast %433 : vector<8x1xi1> to vector<8x1xi1>
    %443 = vector.broadcast %442 : vector<8x1xi1> to vector<8x32xi1>
    %444 = vector.broadcast %cst_163 : f32 to vector<8x32xf32>
    %445 = arith.select %443, %430, %444 : vector<8x32xi1>, vector<8x32xf32>
    %c0_164 = arith.constant 0 : index
    %446 = arith.index_cast %396 : i32 to index
    %c0_165 = arith.constant 0 : index
    %c0_166 = arith.constant 0 : index
    %447 = vector.load %arg5[%c0_164, %446, %c0_165, %c0_166] : memref<1x8x8x32xf32, #tpu.memory_space<vmem>>, vector<1x1x8x32xf32>
    %448 = vector.shape_cast %447 : vector<1x1x8x32xf32> to vector<8x32xf32>
    %449 = vector.shape_cast %445 : vector<8x32xf32> to vector<1x1x8x32xf32>
    tpu.vector_store %arg5[%c0_164, %446, %c0_165, %c0_166], %449 {strides = array<i32>} : memref<1x8x8x32xf32, #tpu.memory_space<vmem>>, vector<1x1x8x32xf32>,
    %c8_i32_167 = arith.constant 8 : i32
    %c0_i32_168 = arith.constant 0 : i32
    %450 = arith.cmpi eq, %arg1, %c0_i32_168 : i32
    %451 = arith.extui %450 : i1 to i32
    %c0_i32_169 = arith.constant 0 : i32
    %452 = arith.cmpi ne, %451, %c0_i32_169 : i32
    scf.if %452 {
      %c0_170 = arith.constant 0 : index
      %c0_171 = arith.constant 0 : index
      %453 = vector.load %arg8[%c0_170, %c0_171] : memref<8x32xf32, #tpu.memory_space<vmem>>, vector<8x32xf32>
      %c0_172 = arith.constant 0 : index
      %c0_173 = arith.constant 0 : index
      %c0_174 = arith.constant 0 : index
      %454 = vector.load %arg6[%c0_172, %c0_173, %c0_174] : memref<1x8x32xf32, #tpu.memory_space<vmem>>, vector<1x8x32xf32>
      %455 = vector.shape_cast %454 : vector<1x8x32xf32> to vector<8x32xf32>
      %456 = vector.shape_cast %453 : vector<8x32xf32> to vector<1x8x32xf32>
      tpu.vector_store %arg6[%c0_172, %c0_173, %c0_174], %456 {strides = array<i32>} : memref<1x8x32xf32, #tpu.memory_space<vmem>>, vector<1x8x32xf32>,
      %c0_175 = arith.constant 0 : index
      %c0_176 = arith.constant 0 : index
      %457 = vector.load %arg9[%c0_175, %c0_176] : memref<8x32xf32, #tpu.memory_space<vmem>>, vector<8x32xf32>
      %c0_177 = arith.constant 0 : index
      %c0_178 = arith.constant 0 : index
      %c0_179 = arith.constant 0 : index
      %458 = vector.load %arg7[%c0_177, %c0_178, %c0_179] : memref<1x8x32xf32, #tpu.memory_space<vmem>>, vector<1x8x32xf32>
      %459 = vector.shape_cast %458 : vector<1x8x32xf32> to vector<8x32xf32>
      %460 = vector.shape_cast %457 : vector<8x32xf32> to vector<1x8x32xf32>
      tpu.vector_store %arg7[%c0_177, %c0_178, %c0_179], %460 {strides = array<i32>} : memref<1x8x32xf32, #tpu.memory_space<vmem>>, vector<1x8x32xf32>,
    } else {
    }
    return
  }
  func.func @transform_0(%arg0: i32, %arg1: i32) -> (i32, i32) {
    %c0_i32 = arith.constant 0 : i32
    %c0_i32_0 = arith.constant 0 : i32
    %c0_i32_1 = arith.constant 0 : i32
    return %c0_i32, %c0_i32_0 : i32, i32
  }
  func.func @transform_1(%arg0: i32, %arg1: i32) -> (i32, i32, i32, i32) {
    %c0_i32 = arith.constant 0 : i32
    %0 = arith.muli %arg0, %c0_i32 : i32
    %c2_i32 = arith.constant 2 : i32
    %1 = arith.muli %c2_i32, %arg0 : i32
    %c1_i32 = arith.constant 1 : i32
    %2 = arith.subi %c1_i32, %1 : i32
    %3 = arith.muli %2, %arg1 : i32
    %4 = arith.addi %0, %3 : i32
    %c0_i32_0 = arith.constant 0 : i32
    %c0_i32_1 = arith.constant 0 : i32
    %c0_i32_2 = arith.constant 0 : i32
    return %arg0, %4, %c0_i32_0, %c0_i32_1 : i32, i32, i32, i32
  }
  func.func @transform_2(%arg0: i32, %arg1: i32) -> (i32, i32, i32) {
    %c0_i32 = arith.constant 0 : i32
    %c0_i32_0 = arith.constant 0 : i32
    %c0_i32_1 = arith.constant 0 : i32
    return %arg0, %c0_i32, %c0_i32_0 : i32, i32, i32
  }
  func.func @transform_3(%arg0: i32, %arg1: i32) -> (i32, i32, i32, i32) {
    %c0_i32 = arith.constant 0 : i32
    %0 = arith.muli %arg0, %c0_i32 : i32
    %c2_i32 = arith.constant 2 : i32
    %1 = arith.muli %c2_i32, %arg0 : i32
    %c1_i32 = arith.constant 1 : i32
    %2 = arith.subi %c1_i32, %1 : i32
    %3 = arith.muli %2, %arg1 : i32
    %4 = arith.addi %0, %3 : i32
    %c0_i32_0 = arith.constant 0 : i32
    %c0_i32_1 = arith.constant 0 : i32
    %c0_i32_2 = arith.constant 0 : i32
    return %arg0, %4, %c0_i32_0, %c0_i32_1 : i32, i32, i32, i32
  }
  func.func @transform_4(%arg0: i32, %arg1: i32) -> (i32, i32, i32) {
    %c0_i32 = arith.constant 0 : i32
    %c0_i32_0 = arith.constant 0 : i32
    %c0_i32_1 = arith.constant 0 : i32
    return %arg0, %c0_i32, %c0_i32_0 : i32, i32, i32
  }
  func.func @transform_5(%arg0: i32, %arg1: i32) -> (i32, i32, i32) {
    %c0_i32 = arith.constant 0 : i32
    %c0_i32_0 = arith.constant 0 : i32
    %c0_i32_1 = arith.constant 0 : i32
    return %arg0, %c0_i32, %c0_i32_0 : i32, i32, i32
  }
}

</mosaic_0001>

<llo_original>
// kernel: lstm_forward.4
$region0: #{lstm_forward.4}
  #allocation0 [shape = 'u32[]', space=smem, size = 0x4, offset = 0x4, fixed_abs, tag = 'smem constant byte address 0x4 - core index']
  #allocation1 [shape = 'u32[144,128]{1,0:T(1,128)}', space=vmem, size = 0x12000, scoped, tag = 'internal scratch']
  %s0 = inlined_call_operand.vmem [shape: bf16[1,64,16], index: 0, kind: input, shape index: {}]
  %s1 = inlined_call_operand.vmem [shape: bf16[1,2,16,128], index: 1, kind: input, shape index: {}]
  %s2 = inlined_call_operand.vmem [shape: f32[2,1,128], index: 2, kind: input, shape index: {}]
  %s3 = inlined_call_operand.vmem [shape: bf16[2,64,128], index: 3, kind: output, shape index: {}]
  %s4 = sld [smem:[#allocation0]]
  $region45: #{lstm_forward.4} parent=0
    _
  %s6 = ssub.s32 1, %s4
  %s7 = scalar_select 0, %s6, %s4
  loop: start=0, step=1, limit=4
  $region2: #{lstm_forward.4} parent=0 // loop_pre_header
    _
  $region3: #{lstm_forward.4} parent=0 // loop_header
    %s9 = sphi 0, %s13
    %p10 = scmp.ge.s32.totalorder %s9, 4
    %s16 = sphi 0, %s35
    %s17 = sphi 0, %s31
    %s18 = sphi 0, %s27
    %s19 = sphi 0, %s16
    %s20 = sphi 0, %s17
    %s21 = sphi 0, %s18
    %s22 = sphi 0, %s19
    %s23 = sphi 0, %s20
    %s24 = sphi 0, %s21
    %s38 = sphi 0, %s40
    %s41 = sphi 0, %s38
    %s42 = sphi 0, %s41
    %s58 = sphi 0, %s42
    %s66 = sphi 0, %s68
    %s69 = sphi 0, %s66
    %s70 = sphi 0, %s69
    %s86 = sphi 0, %s70
    %s94 = sphi 0, %s96
    %s97 = sphi 0, %s94
    %s98 = sphi 0, %s97
    %s114 = sphi 0, %s98
    %s124 = sphi 0, %s126
    %s127 = sphi 0, %s124
    %s128 = sphi 0, %s127
    %s144 = sphi 0, %s128
  $region4: #{lstm_forward.4} parent=0 // loop_header_branch
    %12 = sbr.rel (%p10) target = $region8
  $region5: #{lstm_forward.4} parent=0 // loop_body
    %s14 = ssub.s32 %s9, 1
    %s15 = ssub.s32 %s9, 2
    %s25 = sadd.s32 1, %s18
    %p26 = scmp.ge.s32.totalorder %s25, 1
    %s27 = scalar_select %p26, 0, %s25
    %s28 = sadd.s32 1, %s17
    %s29 = scalar_select %p26, %s28, %s17
    %p30 = scmp.ge.s32.totalorder %s29, 2
    %s31 = scalar_select %p30, 0, %s29
    %s32 = sadd.s32 1, %s16
    %s33 = scalar_select %p30, %s32, %s16
    %p34 = scmp.ge.s32.totalorder %s33, 1
    %s35 = scalar_select %p34, 0, %s33
    %s36 = ssub.s32 %s16, %s35
    %p37 = scmp.eq.s32.totalorder %s36, 0
    %s39 = sadd.s32 %s38, 1
    %s40 = scalar_select %p37, %s38, %s39
    %p43 = pneg %p37
    %p44 = scmp.eq.s32.totalorder %s9, 1
    %p45 = por %p43, %p44
    %p46 = scmp.ne.s32.totalorder %s38, %s41
    %p47 = scmp.eq.s32.totalorder %s9, 0
    %p48 = por %p46, %p47
    %p49 = scmp.ne.s32.totalorder %s38, %s41
    %p50 = scmp.eq.s32.totalorder %s14, 1
    %p51 = por %p49, %p50
    %p52 = scmp.ne.s32.totalorder %s41, %s42
    %p53 = scmp.eq.s32.totalorder %s14, 0
    %p54 = por %p52, %p53
    %p55 = scmp.ne.s32.totalorder %s41, %s42
    %p56 = scmp.eq.s32.totalorder %s15, 1
    %p57 = por %p55, %p56
    %p59 = scmp.ne.s32.totalorder %s42, %s58
    %p60 = scmp.eq.s32.totalorder %s15, 0
    %p61 = por %p59, %p60
    %s62 = ssub.s32 %s17, %s31
    %s63 = ssub.s32 %s18, %s27
    %s64 = sor.u32 %s62, %s63
    %p65 = scmp.eq.s32.totalorder %s64, 0
    %s67 = sadd.s32 %s66, 1
    %s68 = scalar_select %p65, %s66, %s67
    %p71 = pneg %p65
    %p72 = scmp.eq.s32.totalorder %s9, 1
    %p73 = por %p71, %p72
    %p74 = scmp.ne.s32.totalorder %s66, %s69
    %p75 = scmp.eq.s32.totalorder %s9, 0
    %p76 = por %p74, %p75
    %p77 = scmp.ne.s32.totalorder %s66, %s69
    %p78 = scmp.eq.s32.totalorder %s14, 1
    %p79 = por %p77, %p78
    %p80 = scmp.ne.s32.totalorder %s69, %s70
    %p81 = scmp.eq.s32.totalorder %s14, 0
    %p82 = por %p80, %p81
    %p83 = scmp.ne.s32.totalorder %s69, %s70
    %p84 = scmp.eq.s32.totalorder %s15, 1
    %p85 = por %p83, %p84
    %p87 = scmp.ne.s32.totalorder %s70, %s86
    %p88 = scmp.eq.s32.totalorder %s15, 0
    %p89 = por %p87, %p88
    %s90 = ssub.s32 %s17, %s31
    %s91 = ssub.s32 %s18, %s27
    %s92 = sor.u32 %s90, %s91
    %p93 = scmp.eq.s32.totalorder %s92, 0
    %s95 = sadd.s32 %s94, 1
    %s96 = scalar_select %p93, %s94, %s95
    %p99 = pneg %p93
    %p100 = scmp.eq.s32.totalorder %s9, 1
    %p101 = por %p99, %p100
    %p102 = scmp.ne.s32.totalorder %s94, %s97
    %p103 = scmp.eq.s32.totalorder %s9, 0
    %p104 = por %p102, %p103
    %p105 = scmp.ne.s32.totalorder %s94, %s97
    %p106 = scmp.eq.s32.totalorder %s14, 1
    %p107 = por %p105, %p106
    %p108 = scmp.ne.s32.totalorder %s97, %s98
    %p109 = scmp.eq.s32.totalorder %s14, 0
    %p110 = por %p108, %p109
    %p111 = scmp.ne.s32.totalorder %s97, %s98
    %p112 = scmp.eq.s32.totalorder %s15, 1
    %p113 = por %p111, %p112
    %p115 = scmp.ne.s32.totalorder %s98, %s114
    %p116 = scmp.eq.s32.totalorder %s15, 0
    %p117 = por %p115, %p116
    %s118 = ssub.s32 %s17, %s31
    %s119 = ssub.s32 %s16, %s35
    %s120 = sor.u32 %s118, %s119
    %s121 = ssub.s32 %s18, %s27
    %s122 = sor.u32 %s120, %s121
    %p123 = scmp.eq.s32.totalorder %s122, 0
    %s125 = sadd.s32 %s124, 1
    %s126 = scalar_select %p123, %s124, %s125
    %p129 = pneg %p123
    %p130 = scmp.eq.s32.totalorder %s9, 1
    %p131 = por %p129, %p130
    %p132 = scmp.ne.s32.totalorder %s124, %s127
    %p133 = scmp.eq.s32.totalorder %s9, 0
    %p134 = por %p132, %p133
    %p135 = scmp.ne.s32.totalorder %s124, %s127
    %p136 = scmp.eq.s32.totalorder %s14, 1
    %p137 = por %p135, %p136
    %p138 = scmp.ne.s32.totalorder %s127, %s128
    %p139 = scmp.eq.s32.totalorder %s14, 0
    %p140 = por %p138, %p139
    %p141 = scmp.ne.s32.totalorder %s127, %s128
    %p142 = scmp.eq.s32.totalorder %s15, 1
    %p143 = por %p141, %p142
    %p145 = scmp.ne.s32.totalorder %s128, %s144
    %p146 = scmp.eq.s32.totalorder %s15, 0
    %p147 = por %p145, %p146
    %p148 = scmp.le.s32.totalorder 1, %s9
    %p149 = scmp.lt.s32.totalorder %s9, 3
    %p150 = pnand %p148, %p149
    %p151 = pneg %p150
    // Predicated region
    $region9: #{lstm_forward.4} parent=5 // pred_check
      _
    $region10: #{lstm_forward.4} parent=5 // pred_check_branch
      %153 = sbr.rel (%p150) target = $region12
    $region11: #{lstm_forward.4} parent=5 // pred_region
      %s154 = ssub.s32 %s9, 1
      // Predicated region
      $region13: #{lstm_forward.4} parent=11 // pred_check
        %p155 = pneg %p54
      $region14: #{lstm_forward.4} parent=11 // pred_check_branch
        %157 = sbr.rel (%p155) target = $region16
      $region15: #{lstm_forward.4} parent=11 // pred_region
        %s158 = smul.u32 8, %s19
        %p159 = scmp.lt.s32.totalorder %s158, 7
        %s160 = scalar_select %p159, %s158, 7
        %s161 = smul.addr %s160, 4
        %s162 = scalar_lea.vmem %s0, %s161
        %s163 = smul.u32 8, %s19
      $region16: #{lstm_forward.4} parent=11 // pred_fallthru
        _
    $region12: #{lstm_forward.4} parent=5 // pred_fallthru
      _
    %p164 = scmp.lt.s32.totalorder %s9, 2
    // Predicated region
    $region17: #{lstm_forward.4} parent=5 // pred_check
      %p165 = pneg %p164
    $region18: #{lstm_forward.4} parent=5 // pred_check_branch
      %167 = sbr.rel (%p165) target = $region20
    $region19: #{lstm_forward.4} parent=5 // pred_region
      // Predicated region
      $region21: #{lstm_forward.4} parent=19 // pred_check
        %p168 = pneg %p76
      $region22: #{lstm_forward.4} parent=19 // pred_check_branch
        %170 = sbr.rel (%p168) target = $region24
      $region23: #{lstm_forward.4} parent=19 // pred_region
        %p171 = scmp.lt.s32.totalorder %s17, 1
        %s172 = scalar_select %p171, %s17, 1
        %p173 = scmp.lt.s32.totalorder %s18, 0
        %s174 = scalar_select %p173, %s18, 0
        %s175 = smul.addr %s172, 2
        %s176 = sadd.s32 %s174, %s175
        %s177 = smul.addr %s176, 4
        %s178 = scalar_lea.vmem %s1, %s177
      $region24: #{lstm_forward.4} parent=19 // pred_fallthru
        _
      // Predicated region
      $region25: #{lstm_forward.4} parent=19 // pred_check
        %p179 = pneg %p104
      $region26: #{lstm_forward.4} parent=19 // pred_check_branch
        %181 = sbr.rel (%p179) target = $region28
      $region27: #{lstm_forward.4} parent=19 // pred_region
        %p182 = scmp.lt.s32.totalorder %s17, 1
        %s183 = scalar_select %p182, %s17, 1
        %p184 = scmp.lt.s32.totalorder %s18, 0
        %s185 = scalar_select %p184, %s18, 0
        %s186 = sadd.s32 %s185, %s183
        %s187 = scalar_lea.vmem %s2, %s186
      $region28: #{lstm_forward.4} parent=19 // pred_fallthru
        _
    $region20: #{lstm_forward.4} parent=5 // pred_fallthru
      _
    %p188 = scmp.le.s32.totalorder 1, %s9
    %p189 = scmp.lt.s32.totalorder %s9, 3
    %p190 = pnand %p188, %p189
    %p191 = pneg %p190
    // Predicated region
    $region29: #{lstm_forward.4} parent=5 // pred_check
      _
    $region30: #{lstm_forward.4} parent=5 // pred_check_branch
      %193 = sbr.rel (%p190) target = $region32
    $region31: #{lstm_forward.4} parent=5 // pred_region
      %s194 = ssub.s32 %s9, 1
      %s195 = smul.u32 8, %s19
      %p196 = scmp.lt.s32.totalorder %s195, 7
      %s197 = scalar_select %p196, %s195, 7
      %s198 = smul.addr %s197, 4
      %s199 = scalar_lea.vmem %s0, %s198
      %p200 = pneg %p54
      %p201 = pneg %p51
      %p202 = scmp.lt.s32.totalorder %s20, 1
      %s203 = scalar_select %p202, %s20, 1
      %p204 = scmp.lt.s32.totalorder %s21, 0
      %s205 = scalar_select %p204, %s21, 0
      %s206 = smul.addr %s203, 2
      %s207 = sadd.s32 %s205, %s206
      %s208 = smul.addr %s207, 4
      %s209 = scalar_lea.vmem %s1, %s208
      %p210 = pneg %p82
      %p211 = pneg %p79
      %p212 = scmp.lt.s32.totalorder %s20, 1
      %s213 = scalar_select %p212, %s20, 1
      %p214 = scmp.lt.s32.totalorder %s21, 0
      %s215 = scalar_select %p214, %s21, 0
      %s216 = sadd.s32 %s215, %s213
      %s217 = scalar_lea.vmem %s2, %s216
      %p218 = pneg %p110
      %p219 = pneg %p107
      %p220 = pneg %p140
      %p221 = pneg %p137
      %s222 = smul.u32 8, %s19
      %p223 = scmp.lt.s32.totalorder %s20, 1
      %s224 = scalar_select %p223, %s20, 1
      %p225 = scmp.lt.s32.totalorder %s222, 7
      %s226 = scalar_select %p225, %s222, 7
      %p227 = scmp.lt.s32.totalorder %s21, 0
      %s228 = scalar_select %p227, %s21, 0
      %s229 = sadd.s32 %s228, %s226
      %s230 = smul.addr %s224, 8
      %s231 = sadd.s32 %s229, %s230
      %s232 = smul.addr %s231, 4
      %s233 = scalar_lea.vmem %s3, %s232
      %s234 = smul.u32 8, %s19
      %p235 = scmp.lt.s32.totalorder %s234, 7
      %s236 = scalar_select %p235, %s234, 7
      %s237 = smul.addr %s236, 4
      %s238 = scalar_lea.vmem %s0, %s237
      %s239 = smul.u32 8, %s19
      %p240 = scmp.lt.s32.totalorder %s20, 1
      %s241 = scalar_select %p240, %s20, 1
      %p242 = scmp.lt.s32.totalorder %s21, 0
      %s243 = scalar_select %p242, %s21, 0
      %s244 = smul.addr %s241, 2
      %s245 = sadd.s32 %s243, %s244
      %s246 = smul.addr %s245, 4
      %s247 = scalar_lea.vmem %s1, %s246
      %p248 = scmp.lt.s32.totalorder %s20, 1
      %s249 = scalar_select %p248, %s20, 1
      %p250 = scmp.lt.s32.totalorder %s21, 0
      %s251 = scalar_select %p250, %s21, 0
      %s252 = sadd.s32 %s251, %s249
      %s253 = scalar_lea.vmem %s2, %s252
      %s254 = smul.u32 8, %s19
      %p255 = scmp.lt.s32.totalorder %s20, 1
      %s256 = scalar_select %p255, %s20, 1
      %p257 = scmp.lt.s32.totalorder %s254, 7
      %s258 = scalar_select %p257, %s254, 7
      %p259 = scmp.lt.s32.totalorder %s21, 0
      %s260 = scalar_select %p259, %s21, 0
      %s261 = sadd.s32 %s260, %s258
      %s262 = smul.addr %s256, 8
      %s263 = sadd.s32 %s261, %s262
      %s264 = smul.addr %s263, 4
      %s265 = scalar_lea.vmem %s3, %s264
      %s266 = smul.u32 8, %s19
      %v268 = vld [vmem:[%s238] sm:$0xf]
      %v269 = vld [vmem:[%s238 + $0x4] sm:$0xf]
      %v270 = vld [vmem:[%s238 + $0x8] sm:$0xf]
      %v271 = vld [vmem:[%s238 + $0xc] sm:$0xf]
      %v272 = vld [vmem:[%s238 + $0x10] sm:$0xf]
      %v273 = vld [vmem:[%s238 + $0x14] sm:$0xf]
      %v274 = vld [vmem:[%s238 + $0x18] sm:$0xf]
      %v275 = vld [vmem:[%s238 + $0x1c] sm:$0xf]
      %v276 = vld [vmem:[%s247] sm:$0xf]
      %v277 = vld [vmem:[%s247 + $0x4] sm:$0xf]
      %v278 = vld [vmem:[%s253] sm:$0x1]
      %v280 = vlaneseq
      %v281 = vshrl.u32 %v280, 7
      %v282 = vsub.s32 0, %v281
      %v283 = vrot.slane %v278, %v282
      %v293 = vunpack.c.l.b16 %v268
      %v294 = vunpack.c.l.b16 %v269
      %v295 = vunpack.c.l.b16 %v270
      %v296 = vunpack.c.l.b16 %v271
      %v297 = vunpack.c.l.b16 %v272
      %v298 = vunpack.c.l.b16 %v273
      %v299 = vunpack.c.l.b16 %v274
      %v300 = vunpack.c.l.b16 %v275
      %v301 = vpack.c.b16 %v294, %v293
      %v302 = vpack.c.b16 %v296, %v295
      %v303 = vpack.c.b16 %v298, %v297
      %v304 = vpack.c.b16 %v300, %v299
      %v307 = vunpack.c.l.b16 %v276
      %v308 = vunpack.c.l.b16 %v277
      %v309 = vpack.c.b16 %v308, %v307
      %vm311 = vcmask 130048
      %v313 = vsel %vm311, %v301, 0
      %v316 = vsel %vm311, %v302, 0
      %v319 = vsel %vm311, %v303, 0
      %v322 = vsel %vm311, %v304, 0
      %324 = vmatprep.subr.bf16.mxu0 0
      %325 = vmatpush1.bf16.msra.mxu0 0
      %326 = vmatprep.subr.bf16.mxu0 0
      %327 = vmatpush1.bf16.msra.mxu0 0
      %328 = vmatprep.subr.bf16.mxu0 0
      %329 = vmatpush1.bf16.msra.mxu0 0
      %330 = vmatprep.subr.bf16.mxu0 0
      %331 = vmatpush1.bf16.msra.mxu0 0
      %332 = vmatprep.subr.bf16.mxu0 0
      %333 = vmatpush1.bf16.msra.mxu0 0
      %334 = vmatprep.subr.bf16.mxu0 0
      %335 = vmatpush1.bf16.msra.mxu0 0
      %336 = vmatprep.subr.bf16.mxu0 0
      %337 = vmatpush1.bf16.msra.mxu0 0
      %338 = vmatprep.subr.bf16.mxu0 0
      %339 = vmatpush1.bf16.msra.mxu0 %v309
      %340 = vmatprep.subr.bf16.mxu0 0
      %341 = vmatpush2.bf16.msra.mxu0 0
      %342 = vmatprep.subr.bf16.mxu0 0
      %343 = vmatpush2.bf16.msra.mxu0 0
      %344 = vmatprep.subr.bf16.mxu0 0
      %345 = vmatpush2.bf16.msra.mxu0 0
      %346 = vmatprep.subr.bf16.mxu0 0
      %347 = vmatpush2.bf16.msra.mxu0 0
      %348 = vmatprep.subr.bf16.mxu0 0
      %349 = vmatpush2.bf16.msra.mxu0 0
      %350 = vmatprep.subr.bf16.mxu0 0
      %351 = vmatpush2.bf16.msra.mxu0 0
      %352 = vmatprep.subr.bf16.mxu0 0
      %353 = vmatpush2.bf16.msra.mxu0 0
      %354 = vmatprep.subr.bf16.mxu0 0
      %355 = vmatpush2.bf16.msra.mxu0 0
      %356 = vmatprep.mubr.bf16.mxu0 0
      %357 = vmatmul.mubr.bf16.gmra.mxu0 %v313
      %v358 = vpop.f32.mrf.mxu0
      %v359 = vadd.f32 %v283, %v358
      %v360 = vpop.f32.mrf.mxu0
      %v361 = vpop.f32.mrf.mxu0
      %v362 = vadd.f32 %v283, %v361
      %v363 = vpop.f32.mrf.mxu0
      %364 = vmatprep.mubr.bf16.mxu0 0
      %365 = vmatmul.mubr.bf16.gmra.mxu0 %v316
      %v366 = vpop.f32.mrf.mxu0
      %v367 = vadd.f32 %v283, %v366
      %v368 = vpop.f32.mrf.mxu0
      %v369 = vpop.f32.mrf.mxu0
      %v370 = vadd.f32 %v283, %v369
      %v371 = vpop.f32.mrf.mxu0
      %372 = vmatprep.mubr.bf16.mxu0 0
      %373 = vmatmul.mubr.bf16.gmra.mxu0 %v319
      %v374 = vpop.f32.mrf.mxu0
      %v375 = vadd.f32 %v283, %v374
      %v376 = vpop.f32.mrf.mxu0
      %v377 = vpop.f32.mrf.mxu0
      %v378 = vadd.f32 %v283, %v377
      %v379 = vpop.f32.mrf.mxu0
      %380 = vmatprep.mubr.bf16.mxu0 0
      %381 = vmatmul.mubr.bf16.gmra.mxu0 %v322
      %v382 = vpop.f32.mrf.mxu0
      %v383 = vadd.f32 %v283, %v382
      %v384 = vpop.f32.mrf.mxu0
      %v385 = vpop.f32.mrf.mxu0
      %v386 = vadd.f32 %v283, %v385
      %v387 = vpop.f32.mrf.mxu0
      %388 = vdwg.mxu0
      %v389 = vpack.c.bf16 %v362, %v359
      %v390 = vpack.c.bf16 %v370, %v367
      %v391 = vpack.c.bf16 %v378, %v375
      %v392 = vpack.c.bf16 %v386, %v383
      %v397 = vunpack.c.l.b16 %v389
      %v398 = vunpack.c.h.b16 %v389
      %v399 = vunpack.c.l.b16 %v390
      %v400 = vunpack.c.h.b16 %v390
      %v401 = vunpack.c.l.b16 %v391
      %v402 = vunpack.c.h.b16 %v391
      %v403 = vunpack.c.l.b16 %v392
      %v404 = vunpack.c.h.b16 %v392
      %v405 = vpack.c.b16 %v397, %v397
      %v406 = vpack.c.b16 %v398, %v398
      %v407 = vpack.c.b16 %v399, %v399
      %v408 = vpack.c.b16 %v400, %v400
      %v409 = vpack.c.b16 %v401, %v401
      %v410 = vpack.c.b16 %v402, %v402
      %v411 = vpack.c.b16 %v403, %v403
      %v412 = vpack.c.b16 %v404, %v404
      %421 = vst [vmem:[%s265] sm:$0xf] %v405
      %422 = vst [vmem:[%s265 + $0x4] sm:$0xf] %v406
      %423 = vst [vmem:[%s265 + $0x8] sm:$0xf] %v407
      %424 = vst [vmem:[%s265 + $0xc] sm:$0xf] %v408
      %425 = vst [vmem:[%s265 + $0x10] sm:$0xf] %v409
      %426 = vst [vmem:[%s265 + $0x14] sm:$0xf] %v410
      %427 = vst [vmem:[%s265 + $0x18] sm:$0xf] %v411
      %428 = vst [vmem:[%s265 + $0x1c] sm:$0xf] %v412
      %s429 = smul.u32 8, %s19
      %p430 = scmp.lt.s32.totalorder %s20, 1
      %s431 = scalar_select %p430, %s20, 1
      %p432 = scmp.lt.s32.totalorder %s429, 7
      %s433 = scalar_select %p432, %s429, 7
      %p434 = scmp.lt.s32.totalorder %s21, 0
      %s435 = scalar_select %p434, %s21, 0
      %s436 = sadd.s32 %s435, %s433
      %s437 = smul.addr %s431, 8
      %s438 = sadd.s32 %s436, %s437
      %s439 = smul.addr %s438, 4
      %s440 = scalar_lea.vmem %s3, %s439
      // Predicated region
      $region33: #{lstm_forward.4} parent=31 // pred_check
        %p441 = pneg %p137
      $region34: #{lstm_forward.4} parent=31 // pred_check_branch
        %443 = sbr.rel (%p441) target = $region36
      $region35: #{lstm_forward.4} parent=31 // pred_region
        %s444 = smul.u32 8, %s19
      $region36: #{lstm_forward.4} parent=31 // pred_fallthru
        _
    $region32: #{lstm_forward.4} parent=5 // pred_fallthru
      _
    %p445 = scmp.le.s32.totalorder 2, %s9
    // Predicated region
    $region37: #{lstm_forward.4} parent=5 // pred_check
      %p446 = pneg %p445
    $region38: #{lstm_forward.4} parent=5 // pred_check_branch
      %448 = sbr.rel (%p446) target = $region40
    $region39: #{lstm_forward.4} parent=5 // pred_region
      %s449 = ssub.s32 %s9, 2
      // Predicated region
      $region41: #{lstm_forward.4} parent=39 // pred_check
        %p450 = pneg %p143
      $region42: #{lstm_forward.4} parent=39 // pred_check_branch
        %452 = sbr.rel (%p450) target = $region44
      $region43: #{lstm_forward.4} parent=39 // pred_region
        %s453 = smul.u32 8, %s22
        %p454 = scmp.lt.s32.totalorder %s23, 1
        %s455 = scalar_select %p454, %s23, 1
        %p456 = scmp.lt.s32.totalorder %s453, 7
        %s457 = scalar_select %p456, %s453, 7
        %p458 = scmp.lt.s32.totalorder %s24, 0
        %s459 = scalar_select %p458, %s24, 0
        %s460 = sadd.s32 %s459, %s457
        %s461 = smul.addr %s455, 8
        %s462 = sadd.s32 %s460, %s461
        %s463 = smul.addr %s462, 4
        %s464 = scalar_lea.vmem %s3, %s463
      $region44: #{lstm_forward.4} parent=39 // pred_fallthru
        _
    $region40: #{lstm_forward.4} parent=5 // pred_fallthru
      _
  $region6: #{lstm_forward.4} parent=0 // loop_footer
    %s13 = sadd.s32 1, %s9
  $region7: #{lstm_forward.4} parent=0 // loop_footer_branch
    %8 = sbr.rel target = $region3
  $region8: #{lstm_forward.4} parent=0 // loop_exit
    _

// kernel: lstm_forward.6
$region0: #{lstm_forward.6}
  #allocation0 [shape = 'u32[]', space=smem, size = 0x4, offset = 0x4, fixed_abs, tag = 'smem constant byte address 0x4 - core index']
  #allocation1 [shape = 'u32[144,128]{1,0:T(1,128)}', space=vmem, size = 0x12000, scoped, tag = 'internal scratch']
  %s0 = inlined_call_operand.vmem [shape: bf16[2,64,32], index: 0, kind: input, shape index: {}]
  %s1 = inlined_call_operand.vmem [shape: bf16[2,2,32,128], index: 1, kind: input, shape index: {}]
  %s2 = inlined_call_operand.vmem [shape: f32[2,1,128], index: 2, kind: input, shape index: {}]
  %s3 = inlined_call_operand.vmem [shape: bf16[2,64,128], index: 3, kind: output, shape index: {}]
  %s4 = sld [smem:[#allocation0]]
  $region86: #{lstm_forward.6} parent=0
    _
  %s6 = ssub.s32 1, %s4
  %s7 = scalar_select 0, %s6, %s4
  $region1: #{lstm_forward.6} parent=0
    #allocation2 [shape = 'u8[32768]{0}', space=vmem, size = 0x8000, scoped, tag = 'input window, operand 1']
    loop: start=0, step=1, limit=4
    $region2: #{lstm_forward.6} parent=1 // loop_pre_header
      _
    $region3: #{lstm_forward.6} parent=1 // loop_header
      %s9 = sphi 0, %s13
      %p10 = scmp.ge.s32.totalorder %s9, 4
      %s16 = sphi 0, %s35
      %s17 = sphi 0, %s31
      %s18 = sphi 0, %s27
      %s19 = sphi 0, %s16
      %s20 = sphi 0, %s17
      %s21 = sphi 0, %s18
      %s22 = sphi 0, %s19
      %s23 = sphi 0, %s20
      %s24 = sphi 0, %s21
      %s38 = sphi 0, %s40
      %s41 = sphi 0, %s38
      %s42 = sphi 0, %s41
      %s58 = sphi 0, %s42
      %s66 = sphi 0, %s68
      %s69 = sphi 0, %s66
      %s70 = sphi 0, %s69
      %s86 = sphi 0, %s70
      %s94 = sphi 0, %s96
      %s97 = sphi 0, %s94
      %s98 = sphi 0, %s97
      %s114 = sphi 0, %s98
      %s124 = sphi 0, %s126
      %s127 = sphi 0, %s124
      %s128 = sphi 0, %s127
      %s144 = sphi 0, %s128
    $region4: #{lstm_forward.6} parent=1 // loop_header_branch
      %12 = sbr.rel (%p10) target = $region8
    $region5: #{lstm_forward.6} parent=1 // loop_body
      %s14 = ssub.s32 %s9, 1
      %s15 = ssub.s32 %s9, 2
      %s25 = sadd.s32 1, %s18
      %p26 = scmp.ge.s32.totalorder %s25, 1
      %s27 = scalar_select %p26, 0, %s25
      %s28 = sadd.s32 1, %s17
      %s29 = scalar_select %p26, %s28, %s17
      %p30 = scmp.ge.s32.totalorder %s29, 2
      %s31 = scalar_select %p30, 0, %s29
      %s32 = sadd.s32 1, %s16
      %s33 = scalar_select %p30, %s32, %s16
      %p34 = scmp.ge.s32.totalorder %s33, 1
      %s35 = scalar_select %p34, 0, %s33
      %s36 = ssub.s32 %s16, %s35
      %p37 = scmp.eq.s32.totalorder %s36, 0
      %s39 = sadd.s32 %s38, 1
      %s40 = scalar_select %p37, %s38, %s39
      %p43 = pneg %p37
      %p44 = scmp.eq.s32.totalorder %s9, 1
      %p45 = por %p43, %p44
      %p46 = scmp.ne.s32.totalorder %s38, %s41
      %p47 = scmp.eq.s32.totalorder %s9, 0
      %p48 = por %p46, %p47
      %p49 = scmp.ne.s32.totalorder %s38, %s41
      %p50 = scmp.eq.s32.totalorder %s14, 1
      %p51 = por %p49, %p50
      %p52 = scmp.ne.s32.totalorder %s41, %s42
      %p53 = scmp.eq.s32.totalorder %s14, 0
      %p54 = por %p52, %p53
      %p55 = scmp.ne.s32.totalorder %s41, %s42
      %p56 = scmp.eq.s32.totalorder %s15, 1
      %p57 = por %p55, %p56
      %p59 = scmp.ne.s32.totalorder %s42, %s58
      %p60 = scmp.eq.s32.totalorder %s15, 0
      %p61 = por %p59, %p60
      %s62 = ssub.s32 %s17, %s31
      %s63 = ssub.s32 %s18, %s27
      %s64 = sor.u32 %s62, %s63
      %p65 = scmp.eq.s32.totalorder %s64, 0
      %s67 = sadd.s32 %s66, 1
      %s68 = scalar_select %p65, %s66, %s67
      %p71 = pneg %p65
      %p72 = scmp.eq.s32.totalorder %s9, 1
      %p73 = por %p71, %p72
      %p74 = scmp.ne.s32.totalorder %s66, %s69
      %p75 = scmp.eq.s32.totalorder %s9, 0
      %p76 = por %p74, %p75
      %p77 = scmp.ne.s32.totalorder %s66, %s69
      %p78 = scmp.eq.s32.totalorder %s14, 1
      %p79 = por %p77, %p78
      %p80 = scmp.ne.s32.totalorder %s69, %s70
      %p81 = scmp.eq.s32.totalorder %s14, 0
      %p82 = por %p80, %p81
      %p83 = scmp.ne.s32.totalorder %s69, %s70
      %p84 = scmp.eq.s32.totalorder %s15, 1
      %p85 = por %p83, %p84
      %p87 = scmp.ne.s32.totalorder %s70, %s86
      %p88 = scmp.eq.s32.totalorder %s15, 0
      %p89 = por %p87, %p88
      %s90 = ssub.s32 %s17, %s31
      %s91 = ssub.s32 %s18, %s27
      %s92 = sor.u32 %s90, %s91
      %p93 = scmp.eq.s32.totalorder %s92, 0
      %s95 = sadd.s32 %s94, 1
      %s96 = scalar_select %p93, %s94, %s95
      %p99 = pneg %p93
      %p100 = scmp.eq.s32.totalorder %s9, 1
      %p101 = por %p99, %p100
      %p102 = scmp.ne.s32.totalorder %s94, %s97
      %p103 = scmp.eq.s32.totalorder %s9, 0
      %p104 = por %p102, %p103
      %p105 = scmp.ne.s32.totalorder %s94, %s97
      %p106 = scmp.eq.s32.totalorder %s14, 1
      %p107 = por %p105, %p106
      %p108 = scmp.ne.s32.totalorder %s97, %s98
      %p109 = scmp.eq.s32.totalorder %s14, 0
      %p110 = por %p108, %p109
      %p111 = scmp.ne.s32.totalorder %s97, %s98
      %p112 = scmp.eq.s32.totalorder %s15, 1
      %p113 = por %p111, %p112
      %p115 = scmp.ne.s32.totalorder %s98, %s114
      %p116 = scmp.eq.s32.totalorder %s15, 0
      %p117 = por %p115, %p116
      %s118 = ssub.s32 %s17, %s31
      %s119 = ssub.s32 %s16, %s35
      %s120 = sor.u32 %s118, %s119
      %s121 = ssub.s32 %s18, %s27
      %s122 = sor.u32 %s120, %s121
      %p123 = scmp.eq.s32.totalorder %s122, 0
      %s125 = sadd.s32 %s124, 1
      %s126 = scalar_select %p123, %s124, %s125
      %p129 = pneg %p123
      %p130 = scmp.eq.s32.totalorder %s9, 1
      %p131 = por %p129, %p130
      %p132 = scmp.ne.s32.totalorder %s124, %s127
      %p133 = scmp.eq.s32.totalorder %s9, 0
      %p134 = por %p132, %p133
      %p135 = scmp.ne.s32.totalorder %s124, %s127
      %p136 = scmp.eq.s32.totalorder %s14, 1
      %p137 = por %p135, %p136
      %p138 = scmp.ne.s32.totalorder %s127, %s128
      %p139 = scmp.eq.s32.totalorder %s14, 0
      %p140 = por %p138, %p139
      %p141 = scmp.ne.s32.totalorder %s127, %s128
      %p142 = scmp.eq.s32.totalorder %s15, 1
      %p143 = por %p141, %p142
      %p145 = scmp.ne.s32.totalorder %s128, %s144
      %p146 = scmp.eq.s32.totalorder %s15, 0
      %p147 = por %p145, %p146
      %p148 = scmp.le.s32.totalorder 1, %s9
      %p149 = scmp.lt.s32.totalorder %s9, 3
      %p150 = pnand %p148, %p149
      %p151 = pneg %p150
      // Predicated region
      $region9: #{lstm_forward.6} parent=5 // pred_check
        _
      $region10: #{lstm_forward.6} parent=5 // pred_check_branch
        %153 = sbr.rel (%p150) target = $region12
      $region11: #{lstm_forward.6} parent=5 // pred_region
        %s154 = ssub.s32 %s9, 1
        // Predicated region
        $region13: #{lstm_forward.6} parent=11 // pred_check
          %p155 = pneg %p54
        $region14: #{lstm_forward.6} parent=11 // pred_check_branch
          %157 = sbr.rel (%p155) target = $region16
        $region15: #{lstm_forward.6} parent=11 // pred_region
          %s158 = smul.u32 8, %s19
          %p159 = scmp.lt.s32.totalorder %s158, 7
          %s160 = scalar_select %p159, %s158, 7
          %s161 = smul.addr %s160, 4
          %s162 = scalar_lea.vmem %s0, %s161
          %s163 = smul.u32 8, %s19
        $region16: #{lstm_forward.6} parent=11 // pred_fallthru
          _
      $region12: #{lstm_forward.6} parent=5 // pred_fallthru
        _
      %p164 = scmp.lt.s32.totalorder %s9, 2
      // Predicated region
      $region17: #{lstm_forward.6} parent=5 // pred_check
        %p165 = pneg %p164
      $region18: #{lstm_forward.6} parent=5 // pred_check_branch
        %167 = sbr.rel (%p165) target = $region20
      $region19: #{lstm_forward.6} parent=5 // pred_region
        // Predicated region
        $region21: #{lstm_forward.6} parent=19 // pred_check
          %p168 = pneg %p76
        $region22: #{lstm_forward.6} parent=19 // pred_check_branch
          %170 = sbr.rel (%p168) target = $region24
        $region23: #{lstm_forward.6} parent=19 // pred_region
          %s171 = sand.u32 %s66, 1
          %s172 = sand.u32 %s66, 1
          %s173 = smul.addr %s172, 32
          %s174 = scalar_lea.vmem [#allocation2], %s173
          %s175 = smul.addr %s17, 4
          %s176 = sadd.s32 %s18, %s175
          %s177 = smul.addr %s176, 4
          %s178 = scalar_lea.vmem %s1, %s177
          // Predicated region
          $region25: #{lstm_forward.6} parent=23 // pred_check
            _
          $region26: #{lstm_forward.6} parent=23 // pred_check_branch
            %180 = sbr.rel (0) target = $region28
          $region27: #{lstm_forward.6} parent=23 // pred_region
            // Predicated region
            $region29: #{lstm_forward.6} parent=27 // pred_check
              _
            $region30: #{lstm_forward.6} parent=27 // pred_check_branch
              %182 = sbr.rel target = $region32
            $region31: #{lstm_forward.6} parent=27 // pred_region
              // Predicated region
              $region44: #{lstm_forward.6} parent=31 // pred_check
                _
              $region45: #{lstm_forward.6} parent=31 // pred_check_branch
                %212 = sbr.rel (0) target = $region47
              $region46: #{lstm_forward.6} parent=31 // pred_region
                loop: start=0, step=1, limit=1
                $region48: #{lstm_forward.6} parent=46 // loop_pre_header
                  _
                $region49: #{lstm_forward.6} parent=46 // loop_header
                  %s214 = sphi 0, %s218
                  %p215 = scmp.ge.s32.totalorder %s214, 1
                  %s219 = sphi %s178, %s178
                  %s220 = sphi %s174, %s174
                $region50: #{lstm_forward.6} parent=46 // loop_header_branch
                  %217 = sbr.rel (%p215) target = $region54
                $region51: #{lstm_forward.6} parent=46 // loop_body
                  _
                $region52: #{lstm_forward.6} parent=46 // loop_footer
                  %s218 = sadd.s32 1, %s214
                $region53: #{lstm_forward.6} parent=46 // loop_footer_branch
                  %213 = sbr.rel target = $region49
                $region54: #{lstm_forward.6} parent=46 // loop_exit
                  _
                %s222 = ssub.s32 16, 1
                loop: start=0, step=1, limit=1
                $region55: #{lstm_forward.6} parent=46 // loop_pre_header
                  _
                $region56: #{lstm_forward.6} parent=46 // loop_header
                  %s224 = sphi 0, %s228
                  %p225 = scmp.ge.s32.totalorder %s224, 1
                  %s229 = sphi %s178, %s178
                  %s230 = sphi %s174, %s174
                $region57: #{lstm_forward.6} parent=46 // loop_header_branch
                  %227 = sbr.rel (%p225) target = $region61
                $region58: #{lstm_forward.6} parent=46 // loop_body
                  %v231 = vld [vmem:[%s229] sm:%s222]
                  %232 = vst [vmem:[%s230] sm:%s222] %v231
                  %v233 = vld [vmem:[%s229 + $0x4] sm:%s222]
                  %234 = vst [vmem:[%s230 + $0x4] sm:%s222] %v233
                  %v235 = vld [vmem:[%s229 + $0x8] sm:%s222]
                  %236 = vst [vmem:[%s230 + $0x8] sm:%s222] %v235
                  %v237 = vld [vmem:[%s229 + $0xc] sm:%s222]
                  %238 = vst [vmem:[%s230 + $0xc] sm:%s222] %v237
                  %v239 = vld [vmem:[%s229 + $0x20] sm:%s222]
                  %240 = vst [vmem:[%s230 + $0x10] sm:%s222] %v239
                  %v241 = vld [vmem:[%s229 + $0x24] sm:%s222]
                  %242 = vst [vmem:[%s230 + $0x14] sm:%s222] %v241
                  %v243 = vld [vmem:[%s229 + $0x28] sm:%s222]
                  %244 = vst [vmem:[%s230 + $0x18] sm:%s222] %v243
                  %v245 = vld [vmem:[%s229 + $0x2c] sm:%s222]
                  %246 = vst [vmem:[%s230 + $0x1c] sm:%s222] %v245
                $region59: #{lstm_forward.6} parent=46 // loop_footer
                  %s228 = sadd.s32 1, %s224
                $region60: #{lstm_forward.6} parent=46 // loop_footer_branch
                  %223 = sbr.rel target = $region56
                $region61: #{lstm_forward.6} parent=46 // loop_exit
                  _
              $region47: #{lstm_forward.6} parent=31 // pred_fallthru
                _
            $region32: #{lstm_forward.6} parent=27 // pred_fallthru
              _
            // Predicated region
            $region33: #{lstm_forward.6} parent=27 // pred_check
              _
            $region34: #{lstm_forward.6} parent=27 // pred_check_branch
              %184 = sbr.rel (0) target = $region36
            $region35: #{lstm_forward.6} parent=27 // pred_region
              %s186 = ssub.s32 16, 1
              loop: start=0, step=1, limit=1
              $region37: #{lstm_forward.6} parent=35 // loop_pre_header
                _
              $region38: #{lstm_forward.6} parent=35 // loop_header
                %s188 = sphi 0, %s192
                %p189 = scmp.ge.s32.totalorder %s188, 1
                %s193 = sphi %s178, %s178
                %s194 = sphi %s174, %s174
              $region39: #{lstm_forward.6} parent=35 // loop_header_branch
                %191 = sbr.rel (%p189) target = $region43
              $region40: #{lstm_forward.6} parent=35 // loop_body
                %v195 = vld [vmem:[%s193] sm:%s186]
                %196 = vst [vmem:[%s194] sm:%s186] %v195
                %v197 = vld [vmem:[%s193 + $0x4] sm:%s186]
                %198 = vst [vmem:[%s194 + $0x4] sm:%s186] %v197
                %v199 = vld [vmem:[%s193 + $0x8] sm:%s186]
                %200 = vst [vmem:[%s194 + $0x8] sm:%s186] %v199
                %v201 = vld [vmem:[%s193 + $0xc] sm:%s186]
                %202 = vst [vmem:[%s194 + $0xc] sm:%s186] %v201
                %v203 = vld [vmem:[%s193 + $0x20] sm:%s186]
                %204 = vst [vmem:[%s194 + $0x10] sm:%s186] %v203
                %v205 = vld [vmem:[%s193 + $0x24] sm:%s186]
                %206 = vst [vmem:[%s194 + $0x14] sm:%s186] %v205
                %v207 = vld [vmem:[%s193 + $0x28] sm:%s186]
                %208 = vst [vmem:[%s194 + $0x18] sm:%s186] %v207
                %v209 = vld [vmem:[%s193 + $0x2c] sm:%s186]
                %210 = vst [vmem:[%s194 + $0x1c] sm:%s186] %v209
              $region41: #{lstm_forward.6} parent=35 // loop_footer
                %s192 = sadd.s32 1, %s188
              $region42: #{lstm_forward.6} parent=35 // loop_footer_branch
                %187 = sbr.rel target = $region38
              $region43: #{lstm_forward.6} parent=35 // loop_exit
                _
            $region36: #{lstm_forward.6} parent=27 // pred_fallthru
              _
          $region28: #{lstm_forward.6} parent=23 // pred_fallthru
            _
          %247 = vnop
        $region24: #{lstm_forward.6} parent=19 // pred_fallthru
          _
        // Predicated region
        $region62: #{lstm_forward.6} parent=19 // pred_check
          %p248 = pneg %p104
        $region63: #{lstm_forward.6} parent=19 // pred_check_branch
          %250 = sbr.rel (%p248) target = $region65
        $region64: #{lstm_forward.6} parent=19 // pred_region
          %p251 = scmp.lt.s32.totalorder %s17, 1
          %s252 = scalar_select %p251, %s17, 1
          %p253 = scmp.lt.s32.totalorder %s18, 0
          %s254 = scalar_select %p253, %s18, 0
          %s255 = sadd.s32 %s254, %s252
          %s256 = scalar_lea.vmem %s2, %s255
        $region65: #{lstm_forward.6} parent=19 // pred_fallthru
          _
      $region20: #{lstm_forward.6} parent=5 // pred_fallthru
        _
      %p257 = scmp.le.s32.totalorder 1, %s9
      %p258 = scmp.lt.s32.totalorder %s9, 3
      %p259 = pnand %p257, %p258
      %p260 = pneg %p259
      // Predicated region
      $region66: #{lstm_forward.6} parent=5 // pred_check
        _
      $region67: #{lstm_forward.6} parent=5 // pred_check_branch
        %262 = sbr.rel (%p259) target = $region69
      $region68: #{lstm_forward.6} parent=5 // pred_region
        %s263 = ssub.s32 %s9, 1
        %s264 = sand.u32 %s69, 1
        %s265 = sand.u32 %s69, 1
        %s266 = smul.addr %s265, 32
        %s267 = scalar_lea.vmem [#allocation2], %s266
        // Predicated region
        $region70: #{lstm_forward.6} parent=68 // pred_check
          %p268 = pneg %p82
        $region71: #{lstm_forward.6} parent=68 // pred_check_branch
          %270 = sbr.rel (%p268) target = $region73
        $region72: #{lstm_forward.6} parent=68 // pred_region
          _
        $region73: #{lstm_forward.6} parent=68 // pred_fallthru
          _
        %s271 = smul.u32 8, %s19
        %p272 = scmp.lt.s32.totalorder %s271, 7
        %s273 = scalar_select %p272, %s271, 7
        %s274 = smul.addr %s273, 4
        %s275 = scalar_lea.vmem %s0, %s274
        %p276 = pneg %p54
        %p277 = pneg %p51
        %s278 = sand.u32 %s69, 1
        %s279 = sand.u32 %s69, 1
        %s280 = smul.addr %s279, 32
        %s281 = scalar_lea.vmem [#allocation2], %s280
        %p282 = pneg %p82
        %p283 = pneg %p79
        %p284 = scmp.lt.s32.totalorder %s20, 1
        %s285 = scalar_select %p284, %s20, 1
        %p286 = scmp.lt.s32.totalorder %s21, 0
        %s287 = scalar_select %p286, %s21, 0
        %s288 = sadd.s32 %s287, %s285
        %s289 = scalar_lea.vmem %s2, %s288
        %p290 = pneg %p110
        %p291 = pneg %p107
        %p292 = pneg %p140
        %p293 = pneg %p137
        %s294 = smul.u32 8, %s19
        %p295 = scmp.lt.s32.totalorder %s20, 1
        %s296 = scalar_select %p295, %s20, 1
        %p297 = scmp.lt.s32.totalorder %s294, 7
        %s298 = scalar_select %p297, %s294, 7
        %p299 = scmp.lt.s32.totalorder %s21, 0
        %s300 = scalar_select %p299, %s21, 0
        %s301 = sadd.s32 %s300, %s298
        %s302 = smul.addr %s296, 8
        %s303 = sadd.s32 %s301, %s302
        %s304 = smul.addr %s303, 4
        %s305 = scalar_lea.vmem %s3, %s304
        %s306 = smul.u32 8, %s19
        %p307 = scmp.lt.s32.totalorder %s306, 7
        %s308 = scalar_select %p307, %s306, 7
        %s309 = smul.addr %s308, 4
        %s310 = scalar_lea.vmem %s0, %s309
        %s311 = smul.u32 8, %s19
        %p312 = scmp.lt.s32.totalorder %s20, 1
        %s313 = scalar_select %p312, %s20, 1
        %p314 = scmp.lt.s32.totalorder %s21, 0
        %s315 = scalar_select %p314, %s21, 0
        %s316 = sadd.s32 %s315, %s313
        %s317 = scalar_lea.vmem %s2, %s316
        %s318 = smul.u32 8, %s19
        %p319 = scmp.lt.s32.totalorder %s20, 1
        %s320 = scalar_select %p319, %s20, 1
        %p321 = scmp.lt.s32.totalorder %s318, 7
        %s322 = scalar_select %p321, %s318, 7
        %p323 = scmp.lt.s32.totalorder %s21, 0
        %s324 = scalar_select %p323, %s21, 0
        %s325 = sadd.s32 %s324, %s322
        %s326 = smul.addr %s320, 8
        %s327 = sadd.s32 %s325, %s326
        %s328 = smul.addr %s327, 4
        %s329 = scalar_lea.vmem %s3, %s328
        %s330 = smul.u32 8, %s19
        %v332 = vld [vmem:[%s310] sm:$0xf]
        %v333 = vld [vmem:[%s310 + $0x4] sm:$0xf]
        %v334 = vld [vmem:[%s310 + $0x8] sm:$0xf]
        %v335 = vld [vmem:[%s310 + $0xc] sm:$0xf]
        %v336 = vld [vmem:[%s310 + $0x10] sm:$0xf]
        %v337 = vld [vmem:[%s310 + $0x14] sm:$0xf]
        %v338 = vld [vmem:[%s310 + $0x18] sm:$0xf]
        %v339 = vld [vmem:[%s310 + $0x1c] sm:$0xf]
        %v340 = vld [vmem:[%s267] sm:$0xf]
        %v341 = vld [vmem:[%s267 + $0x4] sm:$0xf]
        %v342 = vld [vmem:[%s267 + $0x8] sm:$0xf]
        %v343 = vld [vmem:[%s267 + $0xc] sm:$0xf]
        %v344 = vld [vmem:[%s317] sm:$0x1]
        %v346 = vlaneseq
        %v347 = vshrl.u32 %v346, 7
        %v348 = vsub.s32 0, %v347
        %v349 = vrot.slane %v344, %v348
        %v359 = vunpack.c.l.b16 %v332
        %v360 = vunpack.c.l.b16 %v333
        %v361 = vunpack.c.l.b16 %v334
        %v362 = vunpack.c.l.b16 %v335
        %v363 = vunpack.c.l.b16 %v336
        %v364 = vunpack.c.l.b16 %v337
        %v365 = vunpack.c.l.b16 %v338
        %v366 = vunpack.c.l.b16 %v339
        %v367 = vpack.c.b16 %v360, %v359
        %v368 = vpack.c.b16 %v362, %v361
        %v369 = vpack.c.b16 %v364, %v363
        %v370 = vpack.c.b16 %v366, %v365
        %v375 = vunpack.c.l.b16 %v340
        %v376 = vunpack.c.l.b16 %v341
        %v377 = vunpack.c.l.b16 %v342
        %v378 = vunpack.c.l.b16 %v343
        %v379 = vpack.c.b16 %v376, %v375
        %v380 = vpack.c.b16 %v378, %v377
        %vm383 = vcmask 261120
        %v385 = vsel %vm383, %v367, 0
        %v388 = vsel %vm383, %v368, 0
        %v391 = vsel %vm383, %v369, 0
        %v394 = vsel %vm383, %v370, 0
        %396 = vmatprep.subr.bf16.mxu0 0
        %397 = vmatpush1.bf16.msra.mxu0 0
        %398 = vmatprep.subr.bf16.mxu0 0
        %399 = vmatpush1.bf16.msra.mxu0 0
        %400 = vmatprep.subr.bf16.mxu0 0
        %401 = vmatpush1.bf16.msra.mxu0 0
        %402 = vmatprep.subr.bf16.mxu0 0
        %403 = vmatpush1.bf16.msra.mxu0 0
        %404 = vmatprep.subr.bf16.mxu0 0
        %405 = vmatpush1.bf16.msra.mxu0 0
        %406 = vmatprep.subr.bf16.mxu0 0
        %407 = vmatpush1.bf16.msra.mxu0 0
        %408 = vmatprep.subr.bf16.mxu0 0
        %409 = vmatpush1.bf16.msra.mxu0 %v380
        %410 = vmatprep.subr.bf16.mxu0 0
        %411 = vmatpush1.bf16.msra.mxu0 %v379
        %412 = vmatprep.subr.bf16.mxu0 0
        %413 = vmatpush2.bf16.msra.mxu0 0
        %414 = vmatprep.subr.bf16.mxu0 0
        %415 = vmatpush2.bf16.msra.mxu0 0
        %416 = vmatprep.subr.bf16.mxu0 0
        %417 = vmatpush2.bf16.msra.mxu0 0
        %418 = vmatprep.subr.bf16.mxu0 0
        %419 = vmatpush2.bf16.msra.mxu0 0
        %420 = vmatprep.subr.bf16.mxu0 0
        %421 = vmatpush2.bf16.msra.mxu0 0
        %422 = vmatprep.subr.bf16.mxu0 0
        %423 = vmatpush2.bf16.msra.mxu0 0
        %424 = vmatprep.subr.bf16.mxu0 0
        %425 = vmatpush2.bf16.msra.mxu0 0
        %426 = vmatprep.subr.bf16.mxu0 0
        %427 = vmatpush2.bf16.msra.mxu0 0
        %428 = vmatprep.mubr.bf16.mxu0 0
        %429 = vmatmul.mubr.bf16.gmra.mxu0 %v385
        %v430 = vpop.f32.mrf.mxu0
        %v431 = vadd.f32 %v349, %v430
        %v432 = vpop.f32.mrf.mxu0
        %v433 = vpop.f32.mrf.mxu0
        %v434 = vadd.f32 %v349, %v433
        %v435 = vpop.f32.mrf.mxu0
        %436 = vmatprep.mubr.bf16.mxu0 0
        %437 = vmatmul.mubr.bf16.gmra.mxu0 %v388
        %v438 = vpop.f32.mrf.mxu0
        %v439 = vadd.f32 %v349, %v438
        %v440 = vpop.f32.mrf.mxu0
        %v441 = vpop.f32.mrf.mxu0
        %v442 = vadd.f32 %v349, %v441
        %v443 = vpop.f32.mrf.mxu0
        %444 = vmatprep.mubr.bf16.mxu0 0
        %445 = vmatmul.mubr.bf16.gmra.mxu0 %v391
        %v446 = vpop.f32.mrf.mxu0
        %v447 = vadd.f32 %v349, %v446
        %v448 = vpop.f32.mrf.mxu0
        %v449 = vpop.f32.mrf.mxu0
        %v450 = vadd.f32 %v349, %v449
        %v451 = vpop.f32.mrf.mxu0
        %452 = vmatprep.mubr.bf16.mxu0 0
        %453 = vmatmul.mubr.bf16.gmra.mxu0 %v394
        %v454 = vpop.f32.mrf.mxu0
        %v455 = vadd.f32 %v349, %v454
        %v456 = vpop.f32.mrf.mxu0
        %v457 = vpop.f32.mrf.mxu0
        %v458 = vadd.f32 %v349, %v457
        %v459 = vpop.f32.mrf.mxu0
        %460 = vdwg.mxu0
        %s461 = scalar_lea.vmem %s310, 32
        %v462 = vld [vmem:[%s461] sm:$0xf]
        %v463 = vld [vmem:[%s461 + $0x4] sm:$0xf]
        %v464 = vld [vmem:[%s461 + $0x8] sm:$0xf]
        %v465 = vld [vmem:[%s461 + $0xc] sm:$0xf]
        %v466 = vld [vmem:[%s461 + $0x10] sm:$0xf]
        %v467 = vld [vmem:[%s461 + $0x14] sm:$0xf]
        %v468 = vld [vmem:[%s461 + $0x18] sm:$0xf]
        %v469 = vld [vmem:[%s461 + $0x1c] sm:$0xf]
        %s470 = scalar_lea.vmem %s267, 16 [#allocation2]
        %v471 = vld [vmem:[%s470] sm:$0xf]
        %v472 = vld [vmem:[%s470 + $0x4] sm:$0xf]
        %v473 = vld [vmem:[%s470 + $0x8] sm:$0xf]
        %v474 = vld [vmem:[%s470 + $0xc] sm:$0xf]
        %v483 = vunpack.c.l.b16 %v462
        %v484 = vunpack.c.l.b16 %v463
        %v485 = vunpack.c.l.b16 %v464
        %v486 = vunpack.c.l.b16 %v465
        %v487 = vunpack.c.l.b16 %v466
        %v488 = vunpack.c.l.b16 %v467
        %v489 = vunpack.c.l.b16 %v468
        %v490 = vunpack.c.l.b16 %v469
        %v491 = vpack.c.b16 %v484, %v483
        %v492 = vpack.c.b16 %v486, %v485
        %v493 = vpack.c.b16 %v488, %v487
        %v494 = vpack.c.b16 %v490, %v489
        %v499 = vunpack.c.l.b16 %v471
        %v500 = vunpack.c.l.b16 %v472
        %v501 = vunpack.c.l.b16 %v473
        %v502 = vunpack.c.l.b16 %v474
        %v503 = vpack.c.b16 %v500, %v499
        %v504 = vpack.c.b16 %v502, %v501
        %v508 = vsel %vm383, %v491, 0
        %v511 = vsel %vm383, %v492, 0
        %v514 = vsel %vm383, %v493, 0
        %v517 = vsel %vm383, %v494, 0
        %519 = vmatprep.subr.bf16.mxu0 0
        %520 = vmatpush1.bf16.msra.mxu0 0
        %521 = vmatprep.subr.bf16.mxu0 0
        %522 = vmatpush1.bf16.msra.mxu0 0
        %523 = vmatprep.subr.bf16.mxu0 0
        %524 = vmatpush1.bf16.msra.mxu0 0
        %525 = vmatprep.subr.bf16.mxu0 0
        %526 = vmatpush1.bf16.msra.mxu0 0
        %527 = vmatprep.subr.bf16.mxu0 0
        %528 = vmatpush1.bf16.msra.mxu0 0
        %529 = vmatprep.subr.bf16.mxu0 0
        %530 = vmatpush1.bf16.msra.mxu0 0
        %531 = vmatprep.subr.bf16.mxu0 0
        %532 = vmatpush1.bf16.msra.mxu0 %v504
        %533 = vmatprep.subr.bf16.mxu0 0
        %534 = vmatpush1.bf16.msra.mxu0 %v503
        %535 = vmatprep.subr.bf16.mxu0 0
        %536 = vmatpush2.bf16.msra.mxu0 0
        %537 = vmatprep.subr.bf16.mxu0 0
        %538 = vmatpush2.bf16.msra.mxu0 0
        %539 = vmatprep.subr.bf16.mxu0 0
        %540 = vmatpush2.bf16.msra.mxu0 0
        %541 = vmatprep.subr.bf16.mxu0 0
        %542 = vmatpush2.bf16.msra.mxu0 0
        %543 = vmatprep.subr.bf16.mxu0 0
        %544 = vmatpush2.bf16.msra.mxu0 0
        %545 = vmatprep.subr.bf16.mxu0 0
        %546 = vmatpush2.bf16.msra.mxu0 0
        %547 = vmatprep.subr.bf16.mxu0 0
        %548 = vmatpush2.bf16.msra.mxu0 0
        %549 = vmatprep.subr.bf16.mxu0 0
        %550 = vmatpush2.bf16.msra.mxu0 0
        %551 = vmatprep.mubr.bf16.mxu0 0
        %552 = vmatmul.mubr.bf16.gmra.mxu0 %v508
        %v553 = vpop.f32.mrf.mxu0
        %v554 = vadd.f32 0.0, %v553
        %v555 = vpop.f32.mrf.mxu0
        %v556 = vpop.f32.mrf.mxu0
        %v557 = vadd.f32 0.0, %v556
        %v558 = vpop.f32.mrf.mxu0
        %559 = vmatprep.mubr.bf16.mxu0 0
        %560 = vmatmul.mubr.bf16.gmra.mxu0 %v511
        %v561 = vpop.f32.mrf.mxu0
        %v562 = vadd.f32 0.0, %v561
        %v563 = vpop.f32.mrf.mxu0
        %v564 = vpop.f32.mrf.mxu0
        %v565 = vadd.f32 0.0, %v564
        %v566 = vpop.f32.mrf.mxu0
        %567 = vmatprep.mubr.bf16.mxu0 0
        %568 = vmatmul.mubr.bf16.gmra.mxu0 %v514
        %v569 = vpop.f32.mrf.mxu0
        %v570 = vadd.f32 0.0, %v569
        %v571 = vpop.f32.mrf.mxu0
        %v572 = vpop.f32.mrf.mxu0
        %v573 = vadd.f32 0.0, %v572
        %v574 = vpop.f32.mrf.mxu0
        %575 = vmatprep.mubr.bf16.mxu0 0
        %576 = vmatmul.mubr.bf16.gmra.mxu0 %v517
        %v577 = vpop.f32.mrf.mxu0
        %v578 = vadd.f32 0.0, %v577
        %v579 = vpop.f32.mrf.mxu0
        %v580 = vpop.f32.mrf.mxu0
        %v581 = vadd.f32 0.0, %v580
        %v582 = vpop.f32.mrf.mxu0
        %583 = vdwg.mxu0
        %v584 = vadd.f32 %v431, %v554
        %v585 = vadd.f32 %v434, %v557
        %v586 = vadd.f32 %v439, %v562
        %v587 = vadd.f32 %v442, %v565
        %v588 = vadd.f32 %v447, %v570
        %v589 = vadd.f32 %v450, %v573
        %v590 = vadd.f32 %v455, %v578
        %v591 = vadd.f32 %v458, %v581
        %v592 = vpack.c.bf16 %v585, %v584
        %v593 = vpack.c.bf16 %v587, %v586
        %v594 = vpack.c.bf16 %v589, %v588
        %v595 = vpack.c.bf16 %v591, %v590
        %v600 = vunpack.c.l.b16 %v592
        %v601 = vunpack.c.h.b16 %v592
        %v602 = vunpack.c.l.b16 %v593
        %v603 = vunpack.c.h.b16 %v593
        %v604 = vunpack.c.l.b16 %v594
        %v605 = vunpack.c.h.b16 %v594
        %v606 = vunpack.c.l.b16 %v595
        %v607 = vunpack.c.h.b16 %v595
        %v608 = vpack.c.b16 %v600, %v600
        %v609 = vpack.c.b16 %v601, %v601
        %v610 = vpack.c.b16 %v602, %v602
        %v611 = vpack.c.b16 %v603, %v603
        %v612 = vpack.c.b16 %v604, %v604
        %v613 = vpack.c.b16 %v605, %v605
        %v614 = vpack.c.b16 %v606, %v606
        %v615 = vpack.c.b16 %v607, %v607
        %624 = vst [vmem:[%s329] sm:$0xf] %v608
        %625 = vst [vmem:[%s329 + $0x4] sm:$0xf] %v609
        %626 = vst [vmem:[%s329 + $0x8] sm:$0xf] %v610
        %627 = vst [vmem:[%s329 + $0xc] sm:$0xf] %v611
        %628 = vst [vmem:[%s329 + $0x10] sm:$0xf] %v612
        %629 = vst [vmem:[%s329 + $0x14] sm:$0xf] %v613
        %630 = vst [vmem:[%s329 + $0x18] sm:$0xf] %v614
        %631 = vst [vmem:[%s329 + $0x1c] sm:$0xf] %v615
        %s632 = smul.u32 8, %s19
        %p633 = scmp.lt.s32.totalorder %s20, 1
        %s634 = scalar_select %p633, %s20, 1
        %p635 = scmp.lt.s32.totalorder %s632, 7
        %s636 = scalar_select %p635, %s632, 7
        %p637 = scmp.lt.s32.totalorder %s21, 0
        %s638 = scalar_select %p637, %s21, 0
        %s639 = sadd.s32 %s638, %s636
        %s640 = smul.addr %s634, 8
        %s641 = sadd.s32 %s639, %s640
        %s642 = smul.addr %s641, 4
        %s643 = scalar_lea.vmem %s3, %s642
        // Predicated region
        $region74: #{lstm_forward.6} parent=68 // pred_check
          %p644 = pneg %p137
        $region75: #{lstm_forward.6} parent=68 // pred_check_branch
          %646 = sbr.rel (%p644) target = $region77
        $region76: #{lstm_forward.6} parent=68 // pred_region
          %s647 = smul.u32 8, %s19
        $region77: #{lstm_forward.6} parent=68 // pred_fallthru
          _
      $region69: #{lstm_forward.6} parent=5 // pred_fallthru
        _
      %p648 = scmp.le.s32.totalorder 2, %s9
      // Predicated region
      $region78: #{lstm_forward.6} parent=5 // pred_check
        %p649 = pneg %p648
      $region79: #{lstm_forward.6} parent=5 // pred_check_branch
        %651 = sbr.rel (%p649) target = $region81
      $region80: #{lstm_forward.6} parent=5 // pred_region
        %s652 = ssub.s32 %s9, 2
        // Predicated region
        $region82: #{lstm_forward.6} parent=80 // pred_check
          %p653 = pneg %p143
        $region83: #{lstm_forward.6} parent=80 // pred_check_branch
          %655 = sbr.rel (%p653) target = $region85
        $region84: #{lstm_forward.6} parent=80 // pred_region
          %s656 = smul.u32 8, %s22
          %p657 = scmp.lt.s32.totalorder %s23, 1
          %s658 = scalar_select %p657, %s23, 1
          %p659 = scmp.lt.s32.totalorder %s656, 7
          %s660 = scalar_select %p659, %s656, 7
          %p661 = scmp.lt.s32.totalorder %s24, 0
          %s662 = scalar_select %p661, %s24, 0
          %s663 = sadd.s32 %s662, %s660
          %s664 = smul.addr %s658, 8
          %s665 = sadd.s32 %s663, %s664
          %s666 = smul.addr %s665, 4
          %s667 = scalar_lea.vmem %s3, %s666
        $region85: #{lstm_forward.6} parent=80 // pred_fallthru
          _
      $region81: #{lstm_forward.6} parent=5 // pred_fallthru
        _
    $region6: #{lstm_forward.6} parent=1 // loop_footer
      %s13 = sadd.s32 1, %s9
    $region7: #{lstm_forward.6} parent=1 // loop_footer_branch
      %8 = sbr.rel target = $region3
    $region8: #{lstm_forward.6} parent=1 // loop_exit
      _

// kernel: lstm_forward.5
$region0: #{lstm_forward.5}
  #allocation0 [shape = 'u32[]', space=smem, size = 0x4, offset = 0x4, fixed_abs, tag = 'smem constant byte address 0x4 - core index']
  #allocation1 [shape = 'u32[144,128]{1,0:T(1,128)}', space=vmem, size = 0x12000, scoped, tag = 'internal scratch']
  #allocation2 [shape = 'f32[8,32]{1,0:T(8,128)}', space=vmem, size = 0x1000, scoped, tag = 'scratch operand']
  #allocation3 [shape = 'f32[8,32]{1,0:T(8,128)}', space=vmem, size = 0x1000, scoped, tag = 'scratch operand']
  %s0 = inlined_call_operand.vmem [shape: s32[8,1], index: 0, kind: input, shape index: {}]
  %s1 = inlined_call_operand.vmem [shape: bf16[2,8,8,128], index: 1, kind: input, shape index: {}]
  %s2 = inlined_call_operand.vmem [shape: bf16[2,32,128], index: 2, kind: input, shape index: {}]
  %s3 = inlined_call_operand.vmem [shape: bf16[2,8,8,32], index: 3, kind: output, shape index: {0}]
  %s4 = inlined_call_operand.vmem [shape: f32[2,8,32], index: 4, kind: output, shape index: {1}]
  %s5 = inlined_call_operand.vmem [shape: f32[2,8,32], index: 5, kind: output, shape index: {2}]
  %6 = xla_tuple %s3, %s4, %s5
  %s7 = sld [smem:[#allocation0]]
  $region69: #{lstm_forward.5} parent=0
    _
  %s9 = ssub.s32 1, %s7
  %s10 = scalar_select 0, %s9, %s7
  loop: start=0, step=1, limit=4
  $region2: #{lstm_forward.5} parent=0 // loop_pre_header
    _
  $region3: #{lstm_forward.5} parent=0 // loop_header
    %s12 = sphi 0, %s16
    %p13 = scmp.ge.s32.totalorder %s12, 4
    %s19 = sphi 0, %s31
    %s20 = sphi 0, %s27
    %s21 = sphi 0, %s19
    %s22 = sphi 0, %s20
    %s23 = sphi 0, %s21
    %s24 = sphi 0, %s22
    %s32 = sphi 0, %s32
    %s34 = sphi 0, %s32
    %s35 = sphi 0, %s34
    %s49 = sphi 0, %s35
    %s63 = sphi 0, %s65
    %s66 = sphi 0, %s63
    %s67 = sphi 0, %s66
    %s83 = sphi 0, %s67
    %s89 = sphi 0, %s91
    %s92 = sphi 0, %s89
    %s93 = sphi 0, %s92
    %s109 = sphi 0, %s93
    %s123 = sphi 0, %s125
    %s126 = sphi 0, %s123
    %s127 = sphi 0, %s126
    %s143 = sphi 0, %s127
    %s149 = sphi 0, %s151
    %s152 = sphi 0, %s149
    %s153 = sphi 0, %s152
    %s169 = sphi 0, %s153
    %s175 = sphi 0, %s177
    %s178 = sphi 0, %s175
    %s179 = sphi 0, %s178
    %s195 = sphi 0, %s179
  $region4: #{lstm_forward.5} parent=0 // loop_header_branch
    %15 = sbr.rel (%p13) target = $region8
  $region5: #{lstm_forward.5} parent=0 // loop_body
    %s17 = ssub.s32 %s12, 1
    %s18 = ssub.s32 %s12, 2
    %s25 = sadd.s32 1, %s20
    %p26 = scmp.ge.s32.totalorder %s25, 1
    %s27 = scalar_select %p26, 0, %s25
    %s28 = sadd.s32 1, %s19
    %s29 = scalar_select %p26, %s28, %s19
    %p30 = scmp.ge.s32.totalorder %s29, 2
    %s31 = scalar_select %p30, 0, %s29
    %s33 = sadd.s32 %s32, 1
    %p36 = scmp.eq.s32.totalorder %s12, 1
    %p37 = scmp.ne.s32.totalorder %s32, %s34
    %p38 = scmp.eq.s32.totalorder %s12, 0
    %p39 = por %p37, %p38
    %p40 = scmp.ne.s32.totalorder %s32, %s34
    %p41 = scmp.eq.s32.totalorder %s17, 1
    %p42 = por %p40, %p41
    %p43 = scmp.ne.s32.totalorder %s34, %s35
    %p44 = scmp.eq.s32.totalorder %s17, 0
    %p45 = por %p43, %p44
    %p46 = scmp.ne.s32.totalorder %s34, %s35
    %p47 = scmp.eq.s32.totalorder %s18, 1
    %p48 = por %p46, %p47
    %p50 = scmp.ne.s32.totalorder %s35, %s49
    %p51 = scmp.eq.s32.totalorder %s18, 0
    %p52 = por %p50, %p51
    %s53 = smul.u32 %s19, 2
    %s54 = ssub.s32 1, %s53
    %s55 = smul.u32 %s54, %s20
    %s56 = smul.u32 %s31, 2
    %s57 = ssub.s32 1, %s56
    %s58 = smul.u32 %s57, %s27
    %s59 = ssub.s32 %s19, %s31
    %s60 = ssub.s32 %s55, %s58
    %s61 = sor.u32 %s59, %s60
    %p62 = scmp.eq.s32.totalorder %s61, 0
    %s64 = sadd.s32 %s63, 1
    %s65 = scalar_select %p62, %s63, %s64
    %p68 = pneg %p62
    %p69 = scmp.eq.s32.totalorder %s12, 1
    %p70 = por %p68, %p69
    %p71 = scmp.ne.s32.totalorder %s63, %s66
    %p72 = scmp.eq.s32.totalorder %s12, 0
    %p73 = por %p71, %p72
    %p74 = scmp.ne.s32.totalorder %s63, %s66
    %p75 = scmp.eq.s32.totalorder %s17, 1
    %p76 = por %p74, %p75
    %p77 = scmp.ne.s32.totalorder %s66, %s67
    %p78 = scmp.eq.s32.totalorder %s17, 0
    %p79 = por %p77, %p78
    %p80 = scmp.ne.s32.totalorder %s66, %s67
    %p81 = scmp.eq.s32.totalorder %s18, 1
    %p82 = por %p80, %p81
    %p84 = scmp.ne.s32.totalorder %s67, %s83
    %p85 = scmp.eq.s32.totalorder %s18, 0
    %p86 = por %p84, %p85
    %s87 = ssub.s32 %s19, %s31
    %p88 = scmp.eq.s32.totalorder %s87, 0
    %s90 = sadd.s32 %s89, 1
    %s91 = scalar_select %p88, %s89, %s90
    %p94 = pneg %p88
    %p95 = scmp.eq.s32.totalorder %s12, 1
    %p96 = por %p94, %p95
    %p97 = scmp.ne.s32.totalorder %s89, %s92
    %p98 = scmp.eq.s32.totalorder %s12, 0
    %p99 = por %p97, %p98
    %p100 = scmp.ne.s32.totalorder %s89, %s92
    %p101 = scmp.eq.s32.totalorder %s17, 1
    %p102 = por %p100, %p101
    %p103 = scmp.ne.s32.totalorder %s92, %s93
    %p104 = scmp.eq.s32.totalorder %s17, 0
    %p105 = por %p103, %p104
    %p106 = scmp.ne.s32.totalorder %s92, %s93
    %p107 = scmp.eq.s32.totalorder %s18, 1
    %p108 = por %p106, %p107
    %p110 = scmp.ne.s32.totalorder %s93, %s109
    %p111 = scmp.eq.s32.totalorder %s18, 0
    %p112 = por %p110, %p111
    %s113 = smul.u32 %s19, 2
    %s114 = ssub.s32 1, %s113
    %s115 = smul.u32 %s114, %s20
    %s116 = smul.u32 %s31, 2
    %s117 = ssub.s32 1, %s116
    %s118 = smul.u32 %s117, %s27
    %s119 = ssub.s32 %s19, %s31
    %s120 = ssub.s32 %s115, %s118
    %s121 = sor.u32 %s119, %s120
    %p122 = scmp.eq.s32.totalorder %s121, 0
    %s124 = sadd.s32 %s123, 1
    %s125 = scalar_select %p122, %s123, %s124
    %p128 = pneg %p122
    %p129 = scmp.eq.s32.totalorder %s12, 1
    %p130 = por %p128, %p129
    %p131 = scmp.ne.s32.totalorder %s123, %s126
    %p132 = scmp.eq.s32.totalorder %s12, 0
    %p133 = por %p131, %p132
    %p134 = scmp.ne.s32.totalorder %s123, %s126
    %p135 = scmp.eq.s32.totalorder %s17, 1
    %p136 = por %p134, %p135
    %p137 = scmp.ne.s32.totalorder %s126, %s127
    %p138 = scmp.eq.s32.totalorder %s17, 0
    %p139 = por %p137, %p138
    %p140 = scmp.ne.s32.totalorder %s126, %s127
    %p141 = scmp.eq.s32.totalorder %s18, 1
    %p142 = por %p140, %p141
    %p144 = scmp.ne.s32.totalorder %s127, %s143
    %p145 = scmp.eq.s32.totalorder %s18, 0
    %p146 = por %p144, %p145
    %s147 = ssub.s32 %s19, %s31
    %p148 = scmp.eq.s32.totalorder %s147, 0
    %s150 = sadd.s32 %s149, 1
    %s151 = scalar_select %p148, %s149, %s150
    %p154 = pneg %p148
    %p155 = scmp.eq.s32.totalorder %s12, 1
    %p156 = por %p154, %p155
    %p157 = scmp.ne.s32.totalorder %s149, %s152
    %p158 = scmp.eq.s32.totalorder %s12, 0
    %p159 = por %p157, %p158
    %p160 = scmp.ne.s32.totalorder %s149, %s152
    %p161 = scmp.eq.s32.totalorder %s17, 1
    %p162 = por %p160, %p161
    %p163 = scmp.ne.s32.totalorder %s152, %s153
    %p164 = scmp.eq.s32.totalorder %s17, 0
    %p165 = por %p163, %p164
    %p166 = scmp.ne.s32.totalorder %s152, %s153
    %p167 = scmp.eq.s32.totalorder %s18, 1
    %p168 = por %p166, %p167
    %p170 = scmp.ne.s32.totalorder %s153, %s169
    %p171 = scmp.eq.s32.totalorder %s18, 0
    %p172 = por %p170, %p171
    %s173 = ssub.s32 %s19, %s31
    %p174 = scmp.eq.s32.totalorder %s173, 0
    %s176 = sadd.s32 %s175, 1
    %s177 = scalar_select %p174, %s175, %s176
    %p180 = pneg %p174
    %p181 = scmp.eq.s32.totalorder %s12, 1
    %p182 = por %p180, %p181
    %p183 = scmp.ne.s32.totalorder %s175, %s178
    %p184 = scmp.eq.s32.totalorder %s12, 0
    %p185 = por %p183, %p184
    %p186 = scmp.ne.s32.totalorder %s175, %s178
    %p187 = scmp.eq.s32.totalorder %s17, 1
    %p188 = por %p186, %p187
    %p189 = scmp.ne.s32.totalorder %s178, %s179
    %p190 = scmp.eq.s32.totalorder %s17, 0
    %p191 = por %p189, %p190
    %p192 = scmp.ne.s32.totalorder %s178, %s179
    %p193 = scmp.eq.s32.totalorder %s18, 1
    %p194 = por %p192, %p193
    %p196 = scmp.ne.s32.totalorder %s179, %s195
    %p197 = scmp.eq.s32.totalorder %s18, 0
    %p198 = por %p196, %p197
    %p199 = scmp.le.s32.totalorder 1, %s12
    %p200 = scmp.lt.s32.totalorder %s12, 3
    %p201 = pnand %p199, %p200
    %p202 = pneg %p201
    // Predicated region
    $region9: #{lstm_forward.5} parent=5 // pred_check
      _
    $region10: #{lstm_forward.5} parent=5 // pred_check_branch
      %204 = sbr.rel (%p201) target = $region12
    $region11: #{lstm_forward.5} parent=5 // pred_region
      %s205 = ssub.s32 %s12, 1
      // Predicated region
      $region13: #{lstm_forward.5} parent=11 // pred_check
        %p206 = pneg %p45
      $region14: #{lstm_forward.5} parent=11 // pred_check_branch
        %208 = sbr.rel (%p206) target = $region16
      $region15: #{lstm_forward.5} parent=11 // pred_region
        _
      $region16: #{lstm_forward.5} parent=11 // pred_fallthru
        _
    $region12: #{lstm_forward.5} parent=5 // pred_fallthru
      _
    %p209 = scmp.lt.s32.totalorder %s12, 2
    // Predicated region
    $region17: #{lstm_forward.5} parent=5 // pred_check
      %p210 = pneg %p209
    $region18: #{lstm_forward.5} parent=5 // pred_check_branch
      %212 = sbr.rel (%p210) target = $region20
    $region19: #{lstm_forward.5} parent=5 // pred_region
      // Predicated region
      $region21: #{lstm_forward.5} parent=19 // pred_check
        %p213 = pneg %p73
      $region22: #{lstm_forward.5} parent=19 // pred_check_branch
        %215 = sbr.rel (%p213) target = $region24
      $region23: #{lstm_forward.5} parent=19 // pred_region
        %s216 = smul.u32 %s19, 2
        %s217 = ssub.s32 1, %s216
        %s218 = smul.u32 %s217, %s20
        %s219 = smul.u32 8, %s218
        %p220 = scmp.lt.s32.totalorder %s19, 1
        %s221 = scalar_select %p220, %s19, 1
        %p222 = scmp.lt.s32.totalorder %s219, 7
        %s223 = scalar_select %p222, %s219, 7
        %s224 = smul.addr %s221, 8
        %s225 = sadd.s32 %s223, %s224
        %s226 = smul.addr %s225, 4
        %s227 = scalar_lea.vmem %s1, %s226
        %s228 = smul.u32 %s19, 2
        %s229 = ssub.s32 1, %s228
        %s230 = smul.u32 %s229, %s20
        %s231 = smul.u32 8, %s230
      $region24: #{lstm_forward.5} parent=19 // pred_fallthru
        _
      // Predicated region
      $region25: #{lstm_forward.5} parent=19 // pred_check
        %p232 = pneg %p99
      $region26: #{lstm_forward.5} parent=19 // pred_check_branch
        %234 = sbr.rel (%p232) target = $region28
      $region27: #{lstm_forward.5} parent=19 // pred_region
        %p235 = scmp.lt.s32.totalorder %s19, 1
        %s236 = scalar_select %p235, %s19, 1
        %s237 = smul.addr %s236, 4
        %s238 = smul.addr %s237, 4
        %s239 = scalar_lea.vmem %s2, %s238
      $region28: #{lstm_forward.5} parent=19 // pred_fallthru
        _
    $region20: #{lstm_forward.5} parent=5 // pred_fallthru
      _
    %p240 = scmp.le.s32.totalorder 1, %s12
    %p241 = scmp.lt.s32.totalorder %s12, 3
    %p242 = pnand %p240, %p241
    %p243 = pneg %p242
    // Predicated region
    $region29: #{lstm_forward.5} parent=5 // pred_check
      _
    $region30: #{lstm_forward.5} parent=5 // pred_check_branch
      %245 = sbr.rel (%p242) target = $region32
    $region31: #{lstm_forward.5} parent=5 // pred_region
      %s246 = ssub.s32 %s12, 1
      %p247 = pneg %p45
      %p248 = pneg %p42
      %s249 = smul.u32 %s21, 2
      %s250 = ssub.s32 1, %s249
      %s251 = smul.u32 %s250, %s22
      %s252 = smul.u32 8, %s251
      %p253 = scmp.lt.s32.totalorder %s21, 1
      %s254 = scalar_select %p253, %s21, 1
      %p255 = scmp.lt.s32.totalorder %s252, 7
      %s256 = scalar_select %p255, %s252, 7
      %s257 = smul.addr %s254, 8
      %s258 = sadd.s32 %s256, %s257
      %s259 = smul.addr %s258, 4
      %s260 = scalar_lea.vmem %s1, %s259
      %p261 = pneg %p79
      %p262 = pneg %p76
      %p263 = scmp.lt.s32.totalorder %s21, 1
      %s264 = scalar_select %p263, %s21, 1
      %s265 = smul.addr %s264, 4
      %s266 = smul.addr %s265, 4
      %s267 = scalar_lea.vmem %s2, %s266
      %p268 = pneg %p105
      %p269 = pneg %p102
      %p270 = pneg %p139
      %p271 = pneg %p136
      %s272 = smul.u32 %s21, 2
      %s273 = ssub.s32 1, %s272
      %s274 = smul.u32 %s273, %s22
      %s275 = smul.u32 8, %s274
      %p276 = scmp.lt.s32.totalorder %s21, 1
      %s277 = scalar_select %p276, %s21, 1
      %p278 = scmp.lt.s32.totalorder %s275, 7
      %s279 = scalar_select %p278, %s275, 7
      %s280 = smul.addr %s277, 8
      %s281 = sadd.s32 %s279, %s280
      %s282 = smul.addr %s281, 4
      %s283 = scalar_lea.vmem %s3, %s282
      %p284 = pneg %p165
      %p285 = pneg %p162
      %p286 = scmp.lt.s32.totalorder %s21, 1
      %s287 = scalar_select %p286, %s21, 1
      %s288 = smul.addr %s287, 8
      %s289 = scalar_lea.vmem %s4, %s288
      %p290 = pneg %p191
      %p291 = pneg %p188
      %p292 = scmp.lt.s32.totalorder %s21, 1
      %s293 = scalar_select %p292, %s21, 1
      %s294 = smul.addr %s293, 8
      %s295 = scalar_lea.vmem %s5, %s294
      %s296 = smul.u32 %s21, 2
      %s297 = ssub.s32 1, %s296
      %s298 = smul.u32 %s297, %s22
      %s299 = smul.u32 8, %s298
      %p300 = scmp.lt.s32.totalorder %s21, 1
      %s301 = scalar_select %p300, %s21, 1
      %p302 = scmp.lt.s32.totalorder %s299, 7
      %s303 = scalar_select %p302, %s299, 7
      %s304 = smul.addr %s301, 8
      %s305 = sadd.s32 %s303, %s304
      %s306 = smul.addr %s305, 4
      %s307 = scalar_lea.vmem %s1, %s306
      %s308 = smul.u32 %s21, 2
      %s309 = ssub.s32 1, %s308
      %s310 = smul.u32 %s309, %s22
      %s311 = smul.u32 8, %s310
      %p312 = scmp.lt.s32.totalorder %s21, 1
      %s313 = scalar_select %p312, %s21, 1
      %s314 = smul.addr %s313, 4
      %s315 = smul.addr %s314, 4
      %s316 = scalar_lea.vmem %s2, %s315
      %s317 = smul.u32 %s21, 2
      %s318 = ssub.s32 1, %s317
      %s319 = smul.u32 %s318, %s22
      %s320 = smul.u32 8, %s319
      %p321 = scmp.lt.s32.totalorder %s21, 1
      %s322 = scalar_select %p321, %s21, 1
      %p323 = scmp.lt.s32.totalorder %s320, 7
      %s324 = scalar_select %p323, %s320, 7
      %s325 = smul.addr %s322, 8
      %s326 = sadd.s32 %s324, %s325
      %s327 = smul.addr %s326, 4
      %s328 = scalar_lea.vmem %s3, %s327
      %s329 = smul.u32 %s21, 2
      %s330 = ssub.s32 1, %s329
      %s331 = smul.u32 %s330, %s22
      %s332 = smul.u32 8, %s331
      %p333 = scmp.lt.s32.totalorder %s21, 1
      %s334 = scalar_select %p333, %s21, 1
      %s335 = smul.addr %s334, 8
      %s336 = scalar_lea.vmem %s4, %s335
      %p337 = scmp.lt.s32.totalorder %s21, 1
      %s338 = scalar_select %p337, %s21, 1
      %s339 = smul.addr %s338, 8
      %s340 = scalar_lea.vmem %s5, %s339
      %p342 = scmp.eq.s32.totalorder %s22, 0
      // Predicated region
      $region33: #{lstm_forward.5} parent=31 // pred_check
        %p343 = pneg %p342
      $region34: #{lstm_forward.5} parent=31 // pred_check_branch
        %345 = sbr.rel (%p343) target = $region36
      $region35: #{lstm_forward.5} parent=31 // pred_region
        %vm346 = vcmask 261120
        %347 = vst.msk [vmem:[#allocation2] sm:$0xff] %vm346, 0.0
        %348 = vst.msk [vmem:[#allocation3] sm:$0xff] %vm346, 0.0
      $region36: #{lstm_forward.5} parent=31 // pred_fallthru
        _
      %v349 = vld [vmem:[%s0] sm:$0xff]
      %v350 = vld [vmem:[%s316] sm:$0xf]
      %v351 = vld [vmem:[%s316 + $0x4] sm:$0xf]
      %v352 = vld [vmem:[%s316 + $0x8] sm:$0xf]
      %v353 = vld [vmem:[%s316 + $0xc] sm:$0xf]
      %p354 = scmp.eq.s32.totalorder %s21, 1
      %s355 = ssub.s32 0, %s22
      %s356 = scalar_select %p354, %s355, %s22
      %s357 = smul.u32 %s356, 8
      %s358 = scalar_select %p354, 7, 0
      %s359 = smul.addr %s358, 4
      %s360 = scalar_lea.vmem %s307, %s359
      %v361 = vld [vmem:[%s360] sm:$0xf]
      %v362 = vld [vmem:[#allocation2] sm:$0xff]
      %v363 = vld [vmem:[#allocation3] sm:$0xff]
      %v364 = vpack.c.bf16 %v362, %v362
      %v369 = vunpack.c.l.b16 %v350
      %v370 = vunpack.c.l.b16 %v351
      %v371 = vunpack.c.l.b16 %v352
      %v372 = vunpack.c.l.b16 %v353
      %v373 = vpack.c.b16 %v370, %v369
      %v374 = vpack.c.b16 %v372, %v371
      %vm377 = vcmask 261120
      %v379 = vsel %vm377, %v364, 0
      %381 = vmatprep.subr.bf16.mxu0 0
      %382 = vmatpush1.bf16.msra.mxu0 0
      %383 = vmatprep.subr.bf16.mxu0 0
      %384 = vmatpush1.bf16.msra.mxu0 0
      %385 = vmatprep.subr.bf16.mxu0 0
      %386 = vmatpush1.bf16.msra.mxu0 0
      %387 = vmatprep.subr.bf16.mxu0 0
      %388 = vmatpush1.bf16.msra.mxu0 0
      %389 = vmatprep.subr.bf16.mxu0 0
      %390 = vmatpush1.bf16.msra.mxu0 0
      %391 = vmatprep.subr.bf16.mxu0 0
      %392 = vmatpush1.bf16.msra.mxu0 0
      %393 = vmatprep.subr.bf16.mxu0 0
      %394 = vmatpush1.bf16.msra.mxu0 %v374
      %395 = vmatprep.subr.bf16.mxu0 0
      %396 = vmatpush1.bf16.msra.mxu0 %v373
      %397 = vmatprep.subr.bf16.mxu0 0
      %398 = vmatpush2.bf16.msra.mxu0 0
      %399 = vmatprep.subr.bf16.mxu0 0
      %400 = vmatpush2.bf16.msra.mxu0 0
      %401 = vmatprep.subr.bf16.mxu0 0
      %402 = vmatpush2.bf16.msra.mxu0 0
      %403 = vmatprep.subr.bf16.mxu0 0
      %404 = vmatpush2.bf16.msra.mxu0 0
      %405 = vmatprep.subr.bf16.mxu0 0
      %406 = vmatpush2.bf16.msra.mxu0 0
      %407 = vmatprep.subr.bf16.mxu0 0
      %408 = vmatpush2.bf16.msra.mxu0 0
      %409 = vmatprep.subr.bf16.mxu0 0
      %410 = vmatpush2.bf16.msra.mxu0 0
      %411 = vmatprep.subr.bf16.mxu0 0
      %412 = vmatpush2.bf16.msra.mxu0 0
      %413 = vmatprep.mubr.bf16.mxu0 0
      %414 = vmatmul.mubr.bf16.gmra.mxu0 %v379
      %v415 = vpop.f32.mrf.mxu0
      %v416 = vadd.f32 0.0, %v415
      %v417 = vpop.f32.mrf.mxu0
      %v418 = vpop.f32.mrf.mxu0
      %v419 = vpop.f32.mrf.mxu0
      %420 = vdwg.mxu0
      %v421 = vunpack.c.l.bf16 %v361
      %v422 = vadd.f32 %v421, %v416
      %v423 = vxor.u32 %v422, 2147483648
      %v424 = vmul.f32 %v423, 1.442695
      %v425 = vpow.pop %v424
      %v426 = vadd.f32 %v425, 1.0
      %v427 = vrcp.pop %v426
      %v428 = vmul.f32 1.0, %v427
      %v429 = vtanh.pop %v422
      %431 = vrot.lane.b32.xlu0 %v363, 32
      %v432 = vpop.permute.xlu0 %431
      %v434 = vmul.f32 %v428, %v432
      %436 = vrot.lane.b32.xlu0 %v429, 64
      %v437 = vpop.permute.xlu0 %436
      %v439 = vmul.f32 %v428, %v437
      %441 = vrot.lane.b32.xlu0 %v439, 32
      %v442 = vpop.permute.xlu0 %441
      %v444 = vadd.f32 %v434, %v442
      %v445 = vtanh.pop %v444
      %447 = vrot.lane.b32.xlu0 %v445, 64
      %v448 = vpop.permute.xlu0 %447
      %v450 = vmul.f32 %v428, %v448
      %s451 = sadd.s32 %s357, %s358
      %v452 = vstv %s451
      %vm453 = vcmp.lt.s32.totalorder %v452, %v349
      %v454 = vsel %vm453, 1, 0
      %455 = vset.pattern.permute.xlu0 0
      %456 = vperm.xlu0 %455, %v454
      %v457 = vpop.permute.xlu0 %456
      %vm458 = vcmp.eq.s32.totalorder %v457, 1
      %460 = vrot.lane.b32.xlu0 %v362, 96
      %v461 = vpop.permute.xlu0 %460
      %v463 = vsel %vm458, %v450, %v461
      %465 = vrot.lane.b32.xlu0 %v463, 32
      %v466 = vpop.permute.xlu0 %465
      %468 = vst.msk [vmem:[#allocation2] sm:$0xff] %vm377, %v466
      %v469 = vsel %vm458, %v444, %v432
      %471 = vrot.lane.b32.xlu0 %v469, 96
      %v472 = vpop.permute.xlu0 %471
      %474 = vst.msk [vmem:[#allocation3] sm:$0xff] %vm377, %v472
      %v475 = vsel %vm458, %v450, 0.0
      %v476 = vpack.c.bf16 %v475, %v475
      %v478 = vunpack.c.l.b16 %v476
      %v479 = vpack.c.b16 %v478, %v478
      %480 = vrot.lane.b32.xlu0 %v479, 32
      %v481 = vpop.permute.xlu0 %480
      %s483 = smul.addr %s358, 4
      %s484 = scalar_lea.vmem %s328, %s483
      %vm485 = vcmask 257024
      %486 = vst.msk [vmem:[%s484] sm:$0xf] %vm485, %v481
      %s487 = scalar_select %p354, 6, 1
      %s488 = smul.addr %s487, 4
      %s489 = scalar_lea.vmem %s307, %s488
      %v490 = vld [vmem:[%s489] sm:$0xf]
      %v491 = vld [vmem:[#allocation2] sm:$0xff]
      %v492 = vld [vmem:[#allocation3] sm:$0xff]
      %v493 = vpack.c.bf16 %v491, %v491
      %v495 = vsel %vm377, %v493, 0
      %497 = vmatprep.subr.bf16.mxu0 0
      %498 = vmatpush1.bf16.msra.mxu0 0
      %499 = vmatprep.subr.bf16.mxu0 0
      %500 = vmatpush1.bf16.msra.mxu0 0
      %501 = vmatprep.subr.bf16.mxu0 0
      %502 = vmatpush1.bf16.msra.mxu0 0
      %503 = vmatprep.subr.bf16.mxu0 0
      %504 = vmatpush1.bf16.msra.mxu0 0
      %505 = vmatprep.subr.bf16.mxu0 0
      %506 = vmatpush1.bf16.msra.mxu0 0
      %507 = vmatprep.subr.bf16.mxu0 0
      %508 = vmatpush1.bf16.msra.mxu0 0
      %509 = vmatprep.subr.bf16.mxu0 0
      %510 = vmatpush1.bf16.msra.mxu0 %v374
      %511 = vmatprep.subr.bf16.mxu0 0
      %512 = vmatpush1.bf16.msra.mxu0 %v373
      %513 = vmatprep.subr.bf16.mxu0 0
      %514 = vmatpush2.bf16.msra.mxu0 0
      %515 = vmatprep.subr.bf16.mxu0 0
      %516 = vmatpush2.bf16.msra.mxu0 0
      %517 = vmatprep.subr.bf16.mxu0 0
      %518 = vmatpush2.bf16.msra.mxu0 0
      %519 = vmatprep.subr.bf16.mxu0 0
      %520 = vmatpush2.bf16.msra.mxu0 0
      %521 = vmatprep.subr.bf16.mxu0 0
      %522 = vmatpush2.bf16.msra.mxu0 0
      %523 = vmatprep.subr.bf16.mxu0 0
      %524 = vmatpush2.bf16.msra.mxu0 0
      %525 = vmatprep.subr.bf16.mxu0 0
      %526 = vmatpush2.bf16.msra.mxu0 0
      %527 = vmatprep.subr.bf16.mxu0 0
      %528 = vmatpush2.bf16.msra.mxu0 0
      %529 = vmatprep.mubr.bf16.mxu0 0
      %530 = vmatmul.mubr.bf16.gmra.mxu0 %v495
      %v531 = vpop.f32.mrf.mxu0
      %v532 = vadd.f32 0.0, %v531
      %v533 = vpop.f32.mrf.mxu0
      %v534 = vpop.f32.mrf.mxu0
      %v535 = vpop.f32.mrf.mxu0
      %536 = vdwg.mxu0
      %v537 = vunpack.c.l.bf16 %v490
      %v538 = vadd.f32 %v537, %v532
      %v539 = vxor.u32 %v538, 2147483648
      %v540 = vmul.f32 %v539, 1.442695
      %v541 = vpow.pop %v540
      %v542 = vadd.f32 %v541, 1.0
      %v543 = vrcp.pop %v542
      %v544 = vmul.f32 1.0, %v543
      %v545 = vtanh.pop %v538
      %547 = vrot.lane.b32.xlu0 %v492, 32
      %v548 = vpop.permute.xlu0 %547
      %v550 = vmul.f32 %v544, %v548
      %552 = vrot.lane.b32.xlu0 %v545, 64
      %v553 = vpop.permute.xlu0 %552
      %v555 = vmul.f32 %v544, %v553
      %557 = vrot.lane.b32.xlu0 %v555, 32
      %v558 = vpop.permute.xlu0 %557
      %v560 = vadd.f32 %v550, %v558
      %v561 = vtanh.pop %v560
      %563 = vrot.lane.b32.xlu0 %v561, 64
      %v564 = vpop.permute.xlu0 %563
      %v566 = vmul.f32 %v544, %v564
      %s567 = sadd.s32 %s357, %s487
      %v568 = vstv %s567
      %vm569 = vcmp.lt.s32.totalorder %v568, %v349
      %v570 = vsel %vm569, 1, 0
      %571 = vset.pattern.permute.xlu0 0
      %572 = vperm.xlu0 %571, %v570
      %v573 = vpop.permute.xlu0 %572
      %vm574 = vcmp.eq.s32.totalorder %v573, 1
      %576 = vrot.lane.b32.xlu0 %v491, 96
      %v577 = vpop.permute.xlu0 %576
      %v579 = vsel %vm574, %v566, %v577
      %581 = vrot.lane.b32.xlu0 %v579, 32
      %v582 = vpop.permute.xlu0 %581
      %584 = vst.msk [vmem:[#allocation2] sm:$0xff] %vm377, %v582
      %v585 = vsel %vm574, %v560, %v548
      %587 = vrot.lane.b32.xlu0 %v585, 96
      %v588 = vpop.permute.xlu0 %587
      %590 = vst.msk [vmem:[#allocation3] sm:$0xff] %vm377, %v588
      %v591 = vsel %vm574, %v566, 0.0
      %v592 = vpack.c.bf16 %v591, %v591
      %v594 = vunpack.c.l.b16 %v592
      %v595 = vpack.c.b16 %v594, %v594
      %596 = vrot.lane.b32.xlu0 %v595, 32
      %v597 = vpop.permute.xlu0 %596
      %s599 = smul.addr %s487, 4
      %s600 = scalar_lea.vmem %s328, %s599
      %601 = vst.msk [vmem:[%s600] sm:$0xf] %vm485, %v597
      %s602 = scalar_select %p354, 5, 2
      %s603 = smul.addr %s602, 4
      %s604 = scalar_lea.vmem %s307, %s603
      %v605 = vld [vmem:[%s604] sm:$0xf]
      %v606 = vld [vmem:[#allocation2] sm:$0xff]
      %v607 = vld [vmem:[#allocation3] sm:$0xff]
      %v608 = vpack.c.bf16 %v606, %v606
      %v610 = vsel %vm377, %v608, 0
      %612 = vmatprep.subr.bf16.mxu0 0
      %613 = vmatpush1.bf16.msra.mxu0 0
      %614 = vmatprep.subr.bf16.mxu0 0
      %615 = vmatpush1.bf16.msra.mxu0 0
      %616 = vmatprep.subr.bf16.mxu0 0
      %617 = vmatpush1.bf16.msra.mxu0 0
      %618 = vmatprep.subr.bf16.mxu0 0
      %619 = vmatpush1.bf16.msra.mxu0 0
      %620 = vmatprep.subr.bf16.mxu0 0
      %621 = vmatpush1.bf16.msra.mxu0 0
      %622 = vmatprep.subr.bf16.mxu0 0
      %623 = vmatpush1.bf16.msra.mxu0 0
      %624 = vmatprep.subr.bf16.mxu0 0
      %625 = vmatpush1.bf16.msra.mxu0 %v374
      %626 = vmatprep.subr.bf16.mxu0 0
      %627 = vmatpush1.bf16.msra.mxu0 %v373
      %628 = vmatprep.subr.bf16.mxu0 0
      %629 = vmatpush2.bf16.msra.mxu0 0
      %630 = vmatprep.subr.bf16.mxu0 0
      %631 = vmatpush2.bf16.msra.mxu0 0
      %632 = vmatprep.subr.bf16.mxu0 0
      %633 = vmatpush2.bf16.msra.mxu0 0
      %634 = vmatprep.subr.bf16.mxu0 0
      %635 = vmatpush2.bf16.msra.mxu0 0
      %636 = vmatprep.subr.bf16.mxu0 0
      %637 = vmatpush2.bf16.msra.mxu0 0
      %638 = vmatprep.subr.bf16.mxu0 0
      %639 = vmatpush2.bf16.msra.mxu0 0
      %640 = vmatprep.subr.bf16.mxu0 0
      %641 = vmatpush2.bf16.msra.mxu0 0
      %642 = vmatprep.subr.bf16.mxu0 0
      %643 = vmatpush2.bf16.msra.mxu0 0
      %644 = vmatprep.mubr.bf16.mxu0 0
      %645 = vmatmul.mubr.bf16.gmra.mxu0 %v610
      %v646 = vpop.f32.mrf.mxu0
      %v647 = vadd.f32 0.0, %v646
      %v648 = vpop.f32.mrf.mxu0
      %v649 = vpop.f32.mrf.mxu0
      %v650 = vpop.f32.mrf.mxu0
      %651 = vdwg.mxu0
      %v652 = vunpack.c.l.bf16 %v605
      %v653 = vadd.f32 %v652, %v647
      %v654 = vxor.u32 %v653, 2147483648
      %v655 = vmul.f32 %v654, 1.442695
      %v656 = vpow.pop %v655
      %v657 = vadd.f32 %v656, 1.0
      %v658 = vrcp.pop %v657
      %v659 = vmul.f32 1.0, %v658
      %v660 = vtanh.pop %v653
      %662 = vrot.lane.b32.xlu0 %v607, 32
      %v663 = vpop.permute.xlu0 %662
      %v665 = vmul.f32 %v659, %v663
      %667 = vrot.lane.b32.xlu0 %v660, 64
      %v668 = vpop.permute.xlu0 %667
      %v670 = vmul.f32 %v659, %v668
      %672 = vrot.lane.b32.xlu0 %v670, 32
      %v673 = vpop.permute.xlu0 %672
      %v675 = vadd.f32 %v665, %v673
      %v676 = vtanh.pop %v675
      %678 = vrot.lane.b32.xlu0 %v676, 64
      %v679 = vpop.permute.xlu0 %678
      %v681 = vmul.f32 %v659, %v679
      %s682 = sadd.s32 %s357, %s602
      %v683 = vstv %s682
      %vm684 = vcmp.lt.s32.totalorder %v683, %v349
      %v685 = vsel %vm684, 1, 0
      %686 = vset.pattern.permute.xlu0 0
      %687 = vperm.xlu0 %686, %v685
      %v688 = vpop.permute.xlu0 %687
      %vm689 = vcmp.eq.s32.totalorder %v688, 1
      %691 = vrot.lane.b32.xlu0 %v606, 96
      %v692 = vpop.permute.xlu0 %691
      %v694 = vsel %vm689, %v681, %v692
      %696 = vrot.lane.b32.xlu0 %v694, 32
      %v697 = vpop.permute.xlu0 %696
      %699 = vst.msk [vmem:[#allocation2] sm:$0xff] %vm377, %v697
      %v700 = vsel %vm689, %v675, %v663
      %702 = vrot.lane.b32.xlu0 %v700, 96
      %v703 = vpop.permute.xlu0 %702
      %705 = vst.msk [vmem:[#allocation3] sm:$0xff] %vm377, %v703
      %v706 = vsel %vm689, %v681, 0.0
      %v707 = vpack.c.bf16 %v706, %v706
      %v709 = vunpack.c.l.b16 %v707
      %v710 = vpack.c.b16 %v709, %v709
      %711 = vrot.lane.b32.xlu0 %v710, 32
      %v712 = vpop.permute.xlu0 %711
      %s714 = smul.addr %s602, 4
      %s715 = scalar_lea.vmem %s328, %s714
      %716 = vst.msk [vmem:[%s715] sm:$0xf] %vm485, %v712
      %s717 = scalar_select %p354, 4, 3
      %s718 = smul.addr %s717, 4
      %s719 = scalar_lea.vmem %s307, %s718
      %v720 = vld [vmem:[%s719] sm:$0xf]
      %v721 = vld [vmem:[#allocation2] sm:$0xff]
      %v722 = vld [vmem:[#allocation3] sm:$0xff]
      %v723 = vpack.c.bf16 %v721, %v721
      %v725 = vsel %vm377, %v723, 0
      %727 = vmatprep.subr.bf16.mxu0 0
      %728 = vmatpush1.bf16.msra.mxu0 0
      %729 = vmatprep.subr.bf16.mxu0 0
      %730 = vmatpush1.bf16.msra.mxu0 0
      %731 = vmatprep.subr.bf16.mxu0 0
      %732 = vmatpush1.bf16.msra.mxu0 0
      %733 = vmatprep.subr.bf16.mxu0 0
      %734 = vmatpush1.bf16.msra.mxu0 0
      %735 = vmatprep.subr.bf16.mxu0 0
      %736 = vmatpush1.bf16.msra.mxu0 0
      %737 = vmatprep.subr.bf16.mxu0 0
      %738 = vmatpush1.bf16.msra.mxu0 0
      %739 = vmatprep.subr.bf16.mxu0 0
      %740 = vmatpush1.bf16.msra.mxu0 %v374
      %741 = vmatprep.subr.bf16.mxu0 0
      %742 = vmatpush1.bf16.msra.mxu0 %v373
      %743 = vmatprep.subr.bf16.mxu0 0
      %744 = vmatpush2.bf16.msra.mxu0 0
      %745 = vmatprep.subr.bf16.mxu0 0
      %746 = vmatpush2.bf16.msra.mxu0 0
      %747 = vmatprep.subr.bf16.mxu0 0
      %748 = vmatpush2.bf16.msra.mxu0 0
      %749 = vmatprep.subr.bf16.mxu0 0
      %750 = vmatpush2.bf16.msra.mxu0 0
      %751 = vmatprep.subr.bf16.mxu0 0
      %752 = vmatpush2.bf16.msra.mxu0 0
      %753 = vmatprep.subr.bf16.mxu0 0
      %754 = vmatpush2.bf16.msra.mxu0 0
      %755 = vmatprep.subr.bf16.mxu0 0
      %756 = vmatpush2.bf16.msra.mxu0 0
      %757 = vmatprep.subr.bf16.mxu0 0
      %758 = vmatpush2.bf16.msra.mxu0 0
      %759 = vmatprep.mubr.bf16.mxu0 0
      %760 = vmatmul.mubr.bf16.gmra.mxu0 %v725
      %v761 = vpop.f32.mrf.mxu0
      %v762 = vadd.f32 0.0, %v761
      %v763 = vpop.f32.mrf.mxu0
      %v764 = vpop.f32.mrf.mxu0
      %v765 = vpop.f32.mrf.mxu0
      %766 = vdwg.mxu0
      %v767 = vunpack.c.l.bf16 %v720
      %v768 = vadd.f32 %v767, %v762
      %v769 = vxor.u32 %v768, 2147483648
      %v770 = vmul.f32 %v769, 1.442695
      %v771 = vpow.pop %v770
      %v772 = vadd.f32 %v771, 1.0
      %v773 = vrcp.pop %v772
      %v774 = vmul.f32 1.0, %v773
      %v775 = vtanh.pop %v768
      %777 = vrot.lane.b32.xlu0 %v722, 32
      %v778 = vpop.permute.xlu0 %777
      %v780 = vmul.f32 %v774, %v778
      %782 = vrot.lane.b32.xlu0 %v775, 64
      %v783 = vpop.permute.xlu0 %782
      %v785 = vmul.f32 %v774, %v783
      %787 = vrot.lane.b32.xlu0 %v785, 32
      %v788 = vpop.permute.xlu0 %787
      %v790 = vadd.f32 %v780, %v788
      %v791 = vtanh.pop %v790
      %793 = vrot.lane.b32.xlu0 %v791, 64
      %v794 = vpop.permute.xlu0 %793
      %v796 = vmul.f32 %v774, %v794
      %s797 = sadd.s32 %s357, %s717
      %v798 = vstv %s797
      %vm799 = vcmp.lt.s32.totalorder %v798, %v349
      %v800 = vsel %vm799, 1, 0
      %801 = vset.pattern.permute.xlu0 0
      %802 = vperm.xlu0 %801, %v800
      %v803 = vpop.permute.xlu0 %802
      %vm804 = vcmp.eq.s32.totalorder %v803, 1
      %806 = vrot.lane.b32.xlu0 %v721, 96
      %v807 = vpop.permute.xlu0 %806
      %v809 = vsel %vm804, %v796, %v807
      %811 = vrot.lane.b32.xlu0 %v809, 32
      %v812 = vpop.permute.xlu0 %811
      %814 = vst.msk [vmem:[#allocation2] sm:$0xff] %vm377, %v812
      %v815 = vsel %vm804, %v790, %v778
      %817 = vrot.lane.b32.xlu0 %v815, 96
      %v818 = vpop.permute.xlu0 %817
      %820 = vst.msk [vmem:[#allocation3] sm:$0xff] %vm377, %v818
      %v821 = vsel %vm804, %v796, 0.0
      %v822 = vpack.c.bf16 %v821, %v821
      %v824 = vunpack.c.l.b16 %v822
      %v825 = vpack.c.b16 %v824, %v824
      %826 = vrot.lane.b32.xlu0 %v825, 32
      %v827 = vpop.permute.xlu0 %826
      %s829 = smul.addr %s717, 4
      %s830 = scalar_lea.vmem %s328, %s829
      %831 = vst.msk [vmem:[%s830] sm:$0xf] %vm485, %v827
      %s832 = scalar_select %p354, 3, 4
      %s833 = smul.addr %s832, 4
      %s834 = scalar_lea.vmem %s307, %s833
      %v835 = vld [vmem:[%s834] sm:$0xf]
      %v836 = vld [vmem:[#allocation2] sm:$0xff]
      %v837 = vld [vmem:[#allocation3] sm:$0xff]
      %v838 = vpack.c.bf16 %v836, %v836
      %v840 = vsel %vm377, %v838, 0
      %842 = vmatprep.subr.bf16.mxu0 0
      %843 = vmatpush1.bf16.msra.mxu0 0
      %844 = vmatprep.subr.bf16.mxu0 0
      %845 = vmatpush1.bf16.msra.mxu0 0
      %846 = vmatprep.subr.bf16.mxu0 0
      %847 = vmatpush1.bf16.msra.mxu0 0
      %848 = vmatprep.subr.bf16.mxu0 0
      %849 = vmatpush1.bf16.msra.mxu0 0
      %850 = vmatprep.subr.bf16.mxu0 0
      %851 = vmatpush1.bf16.msra.mxu0 0
      %852 = vmatprep.subr.bf16.mxu0 0
      %853 = vmatpush1.bf16.msra.mxu0 0
      %854 = vmatprep.subr.bf16.mxu0 0
      %855 = vmatpush1.bf16.msra.mxu0 %v374
      %856 = vmatprep.subr.bf16.mxu0 0
      %857 = vmatpush1.bf16.msra.mxu0 %v373
      %858 = vmatprep.subr.bf16.mxu0 0
      %859 = vmatpush2.bf16.msra.mxu0 0
      %860 = vmatprep.subr.bf16.mxu0 0
      %861 = vmatpush2.bf16.msra.mxu0 0
      %862 = vmatprep.subr.bf16.mxu0 0
      %863 = vmatpush2.bf16.msra.mxu0 0
      %864 = vmatprep.subr.bf16.mxu0 0
      %865 = vmatpush2.bf16.msra.mxu0 0
      %866 = vmatprep.subr.bf16.mxu0 0
      %867 = vmatpush2.bf16.msra.mxu0 0
      %868 = vmatprep.subr.bf16.mxu0 0
      %869 = vmatpush2.bf16.msra.mxu0 0
      %870 = vmatprep.subr.bf16.mxu0 0
      %871 = vmatpush2.bf16.msra.mxu0 0
      %872 = vmatprep.subr.bf16.mxu0 0
      %873 = vmatpush2.bf16.msra.mxu0 0
      %874 = vmatprep.mubr.bf16.mxu0 0
      %875 = vmatmul.mubr.bf16.gmra.mxu0 %v840
      %v876 = vpop.f32.mrf.mxu0
      %v877 = vadd.f32 0.0, %v876
      %v878 = vpop.f32.mrf.mxu0
      %v879 = vpop.f32.mrf.mxu0
      %v880 = vpop.f32.mrf.mxu0
      %881 = vdwg.mxu0
      %v882 = vunpack.c.l.bf16 %v835
      %v883 = vadd.f32 %v882, %v877
      %v884 = vxor.u32 %v883, 2147483648
      %v885 = vmul.f32 %v884, 1.442695
      %v886 = vpow.pop %v885
      %v887 = vadd.f32 %v886, 1.0
      %v888 = vrcp.pop %v887
      %v889 = vmul.f32 1.0, %v888
      %v890 = vtanh.pop %v883
      %892 = vrot.lane.b32.xlu0 %v837, 32
      %v893 = vpop.permute.xlu0 %892
      %v895 = vmul.f32 %v889, %v893
      %897 = vrot.lane.b32.xlu0 %v890, 64
      %v898 = vpop.permute.xlu0 %897
      %v900 = vmul.f32 %v889, %v898
      %902 = vrot.lane.b32.xlu0 %v900, 32
      %v903 = vpop.permute.xlu0 %902
      %v905 = vadd.f32 %v895, %v903
      %v906 = vtanh.pop %v905
      %908 = vrot.lane.b32.xlu0 %v906, 64
      %v909 = vpop.permute.xlu0 %908
      %v911 = vmul.f32 %v889, %v909
      %s912 = sadd.s32 %s357, %s832
      %v913 = vstv %s912
      %vm914 = vcmp.lt.s32.totalorder %v913, %v349
      %v915 = vsel %vm914, 1, 0
      %916 = vset.pattern.permute.xlu0 0
      %917 = vperm.xlu0 %916, %v915
      %v918 = vpop.permute.xlu0 %917
      %vm919 = vcmp.eq.s32.totalorder %v918, 1
      %921 = vrot.lane.b32.xlu0 %v836, 96
      %v922 = vpop.permute.xlu0 %921
      %v924 = vsel %vm919, %v911, %v922
      %926 = vrot.lane.b32.xlu0 %v924, 32
      %v927 = vpop.permute.xlu0 %926
      %929 = vst.msk [vmem:[#allocation2] sm:$0xff] %vm377, %v927
      %v930 = vsel %vm919, %v905, %v893
      %932 = vrot.lane.b32.xlu0 %v930, 96
      %v933 = vpop.permute.xlu0 %932
      %935 = vst.msk [vmem:[#allocation3] sm:$0xff] %vm377, %v933
      %v936 = vsel %vm919, %v911, 0.0
      %v937 = vpack.c.bf16 %v936, %v936
      %v939 = vunpack.c.l.b16 %v937
      %v940 = vpack.c.b16 %v939, %v939
      %941 = vrot.lane.b32.xlu0 %v940, 32
      %v942 = vpop.permute.xlu0 %941
      %s944 = smul.addr %s832, 4
      %s945 = scalar_lea.vmem %s328, %s944
      %946 = vst.msk [vmem:[%s945] sm:$0xf] %vm485, %v942
      %s947 = scalar_select %p354, 2, 5
      %s948 = smul.addr %s947, 4
      %s949 = scalar_lea.vmem %s307, %s948
      %v950 = vld [vmem:[%s949] sm:$0xf]
      %v951 = vld [vmem:[#allocation2] sm:$0xff]
      %v952 = vld [vmem:[#allocation3] sm:$0xff]
      %v953 = vpack.c.bf16 %v951, %v951
      %v955 = vsel %vm377, %v953, 0
      %957 = vmatprep.subr.bf16.mxu0 0
      %958 = vmatpush1.bf16.msra.mxu0 0
      %959 = vmatprep.subr.bf16.mxu0 0
      %960 = vmatpush1.bf16.msra.mxu0 0
      %961 = vmatprep.subr.bf16.mxu0 0
      %962 = vmatpush1.bf16.msra.mxu0 0
      %963 = vmatprep.subr.bf16.mxu0 0
      %964 = vmatpush1.bf16.msra.mxu0 0
      %965 = vmatprep.subr.bf16.mxu0 0
      %966 = vmatpush1.bf16.msra.mxu0 0
      %967 = vmatprep.subr.bf16.mxu0 0
      %968 = vmatpush1.bf16.msra.mxu0 0
      %969 = vmatprep.subr.bf16.mxu0 0
      %970 = vmatpush1.bf16.msra.mxu0 %v374
      %971 = vmatprep.subr.bf16.mxu0 0
      %972 = vmatpush1.bf16.msra.mxu0 %v373
      %973 = vmatprep.subr.bf16.mxu0 0
      %974 = vmatpush2.bf16.msra.mxu0 0
      %975 = vmatprep.subr.bf16.mxu0 0
      %976 = vmatpush2.bf16.msra.mxu0 0
      %977 = vmatprep.subr.bf16.mxu0 0
      %978 = vmatpush2.bf16.msra.mxu0 0
      %979 = vmatprep.subr.bf16.mxu0 0
      %980 = vmatpush2.bf16.msra.mxu0 0
      %981 = vmatprep.subr.bf16.mxu0 0
      %982 = vmatpush2.bf16.msra.mxu0 0
      %983 = vmatprep.subr.bf16.mxu0 0
      %984 = vmatpush2.bf16.msra.mxu0 0
      %985 = vmatprep.subr.bf16.mxu0 0
      %986 = vmatpush2.bf16.msra.mxu0 0
      %987 = vmatprep.subr.bf16.mxu0 0
      %988 = vmatpush2.bf16.msra.mxu0 0
      %989 = vmatprep.mubr.bf16.mxu0 0
      %990 = vmatmul.mubr.bf16.gmra.mxu0 %v955
      %v991 = vpop.f32.mrf.mxu0
      %v992 = vadd.f32 0.0, %v991
      %v993 = vpop.f32.mrf.mxu0
      %v994 = vpop.f32.mrf.mxu0
      %v995 = vpop.f32.mrf.mxu0
      %996 = vdwg.mxu0
      %v997 = vunpack.c.l.bf16 %v950
      %v998 = vadd.f32 %v997, %v992
      %v999 = vxor.u32 %v998, 2147483648
      %v1000 = vmul.f32 %v999, 1.442695
      %v1001 = vpow.pop %v1000
      %v1002 = vadd.f32 %v1001, 1.0
      %v1003 = vrcp.pop %v1002
      %v1004 = vmul.f32 1.0, %v1003
      %v1005 = vtanh.pop %v998
      %1007 = vrot.lane.b32.xlu0 %v952, 32
      %v1008 = vpop.permute.xlu0 %1007
      %v1010 = vmul.f32 %v1004, %v1008
      %1012 = vrot.lane.b32.xlu0 %v1005, 64
      %v1013 = vpop.permute.xlu0 %1012
      %v1015 = vmul.f32 %v1004, %v1013
      %1017 = vrot.lane.b32.xlu0 %v1015, 32
      %v1018 = vpop.permute.xlu0 %1017
      %v1020 = vadd.f32 %v1010, %v1018
      %v1021 = vtanh.pop %v1020
      %1023 = vrot.lane.b32.xlu0 %v1021, 64
      %v1024 = vpop.permute.xlu0 %1023
      %v1026 = vmul.f32 %v1004, %v1024
      %s1027 = sadd.s32 %s357, %s947
      %v1028 = vstv %s1027
      %vm1029 = vcmp.lt.s32.totalorder %v1028, %v349
      %v1030 = vsel %vm1029, 1, 0
      %1031 = vset.pattern.permute.xlu0 0
      %1032 = vperm.xlu0 %1031, %v1030
      %v1033 = vpop.permute.xlu0 %1032
      %vm1034 = vcmp.eq.s32.totalorder %v1033, 1
      %1036 = vrot.lane.b32.xlu0 %v951, 96
      %v1037 = vpop.permute.xlu0 %1036
      %v1039 = vsel %vm1034, %v1026, %v1037
      %1041 = vrot.lane.b32.xlu0 %v1039, 32
      %v1042 = vpop.permute.xlu0 %1041
      %1044 = vst.msk [vmem:[#allocation2] sm:$0xff] %vm377, %v1042
      %v1045 = vsel %vm1034, %v1020, %v1008
      %1047 = vrot.lane.b32.xlu0 %v1045, 96
      %v1048 = vpop.permute.xlu0 %1047
      %1050 = vst.msk [vmem:[#allocation3] sm:$0xff] %vm377, %v1048
      %v1051 = vsel %vm1034, %v1026, 0.0
      %v1052 = vpack.c.bf16 %v1051, %v1051
      %v1054 = vunpack.c.l.b16 %v1052
      %v1055 = vpack.c.b16 %v1054, %v1054
      %1056 = vrot.lane.b32.xlu0 %v1055, 32
      %v1057 = vpop.permute.xlu0 %1056
      %s1059 = smul.addr %s947, 4
      %s1060 = scalar_lea.vmem %s328, %s1059
      %1061 = vst.msk [vmem:[%s1060] sm:$0xf] %vm485, %v1057
      %s1062 = scalar_select %p354, 1, 6
      %s1063 = smul.addr %s1062, 4
      %s1064 = scalar_lea.vmem %s307, %s1063
      %v1065 = vld [vmem:[%s1064] sm:$0xf]
      %v1066 = vld [vmem:[#allocation2] sm:$0xff]
      %v1067 = vld [vmem:[#allocation3] sm:$0xff]
      %v1068 = vpack.c.bf16 %v1066, %v1066
      %v1070 = vsel %vm377, %v1068, 0
      %1072 = vmatprep.subr.bf16.mxu0 0
      %1073 = vmatpush1.bf16.msra.mxu0 0
      %1074 = vmatprep.subr.bf16.mxu0 0
      %1075 = vmatpush1.bf16.msra.mxu0 0
      %1076 = vmatprep.subr.bf16.mxu0 0
      %1077 = vmatpush1.bf16.msra.mxu0 0
      %1078 = vmatprep.subr.bf16.mxu0 0
      %1079 = vmatpush1.bf16.msra.mxu0 0
      %1080 = vmatprep.subr.bf16.mxu0 0
      %1081 = vmatpush1.bf16.msra.mxu0 0
      %1082 = vmatprep.subr.bf16.mxu0 0
      %1083 = vmatpush1.bf16.msra.mxu0 0
      %1084 = vmatprep.subr.bf16.mxu0 0
      %1085 = vmatpush1.bf16.msra.mxu0 %v374
      %1086 = vmatprep.subr.bf16.mxu0 0
      %1087 = vmatpush1.bf16.msra.mxu0 %v373
      %1088 = vmatprep.subr.bf16.mxu0 0
      %1089 = vmatpush2.bf16.msra.mxu0 0
      %1090 = vmatprep.subr.bf16.mxu0 0
      %1091 = vmatpush2.bf16.msra.mxu0 0
      %1092 = vmatprep.subr.bf16.mxu0 0
      %1093 = vmatpush2.bf16.msra.mxu0 0
      %1094 = vmatprep.subr.bf16.mxu0 0
      %1095 = vmatpush2.bf16.msra.mxu0 0
      %1096 = vmatprep.subr.bf16.mxu0 0
      %1097 = vmatpush2.bf16.msra.mxu0 0
      %1098 = vmatprep.subr.bf16.mxu0 0
      %1099 = vmatpush2.bf16.msra.mxu0 0
      %1100 = vmatprep.subr.bf16.mxu0 0
      %1101 = vmatpush2.bf16.msra.mxu0 0
      %1102 = vmatprep.subr.bf16.mxu0 0
      %1103 = vmatpush2.bf16.msra.mxu0 0
      %1104 = vmatprep.mubr.bf16.mxu0 0
      %1105 = vmatmul.mubr.bf16.gmra.mxu0 %v1070
      %v1106 = vpop.f32.mrf.mxu0
      %v1107 = vadd.f32 0.0, %v1106
      %v1108 = vpop.f32.mrf.mxu0
      %v1109 = vpop.f32.mrf.mxu0
      %v1110 = vpop.f32.mrf.mxu0
      %1111 = vdwg.mxu0
      %v1112 = vunpack.c.l.bf16 %v1065
      %v1113 = vadd.f32 %v1112, %v1107
      %v1114 = vxor.u32 %v1113, 2147483648
      %v1115 = vmul.f32 %v1114, 1.442695
      %v1116 = vpow.pop %v1115
      %v1117 = vadd.f32 %v1116, 1.0
      %v1118 = vrcp.pop %v1117
      %v1119 = vmul.f32 1.0, %v1118
      %v1120 = vtanh.pop %v1113
      %1122 = vrot.lane.b32.xlu0 %v1067, 32
      %v1123 = vpop.permute.xlu0 %1122
      %v1125 = vmul.f32 %v1119, %v1123
      %1127 = vrot.lane.b32.xlu0 %v1120, 64
      %v1128 = vpop.permute.xlu0 %1127
      %v1130 = vmul.f32 %v1119, %v1128
      %1132 = vrot.lane.b32.xlu0 %v1130, 32
      %v1133 = vpop.permute.xlu0 %1132
      %v1135 = vadd.f32 %v1125, %v1133
      %v1136 = vtanh.pop %v1135
      %1138 = vrot.lane.b32.xlu0 %v1136, 64
      %v1139 = vpop.permute.xlu0 %1138
      %v1141 = vmul.f32 %v1119, %v1139
      %s1142 = sadd.s32 %s357, %s1062
      %v1143 = vstv %s1142
      %vm1144 = vcmp.lt.s32.totalorder %v1143, %v349
      %v1145 = vsel %vm1144, 1, 0
      %1146 = vset.pattern.permute.xlu0 0
      %1147 = vperm.xlu0 %1146, %v1145
      %v1148 = vpop.permute.xlu0 %1147
      %vm1149 = vcmp.eq.s32.totalorder %v1148, 1
      %1151 = vrot.lane.b32.xlu0 %v1066, 96
      %v1152 = vpop.permute.xlu0 %1151
      %v1154 = vsel %vm1149, %v1141, %v1152
      %1156 = vrot.lane.b32.xlu0 %v1154, 32
      %v1157 = vpop.permute.xlu0 %1156
      %1159 = vst.msk [vmem:[#allocation2] sm:$0xff] %vm377, %v1157
      %v1160 = vsel %vm1149, %v1135, %v1123
      %1162 = vrot.lane.b32.xlu0 %v1160, 96
      %v1163 = vpop.permute.xlu0 %1162
      %1165 = vst.msk [vmem:[#allocation3] sm:$0xff] %vm377, %v1163
      %v1166 = vsel %vm1149, %v1141, 0.0
      %v1167 = vpack.c.bf16 %v1166, %v1166
      %v1169 = vunpack.c.l.b16 %v1167
      %v1170 = vpack.c.b16 %v1169, %v1169
      %1171 = vrot.lane.b32.xlu0 %v1170, 32
      %v1172 = vpop.permute.xlu0 %1171
      %s1174 = smul.addr %s1062, 4
      %s1175 = scalar_lea.vmem %s328, %s1174
      %1176 = vst.msk [vmem:[%s1175] sm:$0xf] %vm485, %v1172
      %s1177 = scalar_select %p354, 0, 7
      %s1178 = smul.addr %s1177, 4
      %s1179 = scalar_lea.vmem %s307, %s1178
      %v1180 = vld [vmem:[%s1179] sm:$0xf]
      %v1181 = vld [vmem:[#allocation2] sm:$0xff]
      %v1182 = vld [vmem:[#allocation3] sm:$0xff]
      %v1183 = vpack.c.bf16 %v1181, %v1181
      %v1185 = vsel %vm377, %v1183, 0
      %1187 = vmatprep.subr.bf16.mxu0 0
      %1188 = vmatpush1.bf16.msra.mxu0 0
      %1189 = vmatprep.subr.bf16.mxu0 0
      %1190 = vmatpush1.bf16.msra.mxu0 0
      %1191 = vmatprep.subr.bf16.mxu0 0
      %1192 = vmatpush1.bf16.msra.mxu0 0
      %1193 = vmatprep.subr.bf16.mxu0 0
      %1194 = vmatpush1.bf16.msra.mxu0 0
      %1195 = vmatprep.subr.bf16.mxu0 0
      %1196 = vmatpush1.bf16.msra.mxu0 0
      %1197 = vmatprep.subr.bf16.mxu0 0
      %1198 = vmatpush1.bf16.msra.mxu0 0
      %1199 = vmatprep.subr.bf16.mxu0 0
      %1200 = vmatpush1.bf16.msra.mxu0 %v374
      %1201 = vmatprep.subr.bf16.mxu0 0
      %1202 = vmatpush1.bf16.msra.mxu0 %v373
      %1203 = vmatprep.subr.bf16.mxu0 0
      %1204 = vmatpush2.bf16.msra.mxu0 0
      %1205 = vmatprep.subr.bf16.mxu0 0
      %1206 = vmatpush2.bf16.msra.mxu0 0
      %1207 = vmatprep.subr.bf16.mxu0 0
      %1208 = vmatpush2.bf16.msra.mxu0 0
      %1209 = vmatprep.subr.bf16.mxu0 0
      %1210 = vmatpush2.bf16.msra.mxu0 0
      %1211 = vmatprep.subr.bf16.mxu0 0
      %1212 = vmatpush2.bf16.msra.mxu0 0
      %1213 = vmatprep.subr.bf16.mxu0 0
      %1214 = vmatpush2.bf16.msra.mxu0 0
      %1215 = vmatprep.subr.bf16.mxu0 0
      %1216 = vmatpush2.bf16.msra.mxu0 0
      %1217 = vmatprep.subr.bf16.mxu0 0
      %1218 = vmatpush2.bf16.msra.mxu0 0
      %1219 = vmatprep.mubr.bf16.mxu0 0
      %1220 = vmatmul.mubr.bf16.gmra.mxu0 %v1185
      %v1221 = vpop.f32.mrf.mxu0
      %v1222 = vadd.f32 0.0, %v1221
      %v1223 = vpop.f32.mrf.mxu0
      %v1224 = vpop.f32.mrf.mxu0
      %v1225 = vpop.f32.mrf.mxu0
      %1226 = vdwg.mxu0
      %v1227 = vunpack.c.l.bf16 %v1180
      %v1228 = vadd.f32 %v1227, %v1222
      %v1229 = vxor.u32 %v1228, 2147483648
      %v1230 = vmul.f32 %v1229, 1.442695
      %v1231 = vpow.pop %v1230
      %v1232 = vadd.f32 %v1231, 1.0
      %v1233 = vrcp.pop %v1232
      %v1234 = vmul.f32 1.0, %v1233
      %v1235 = vtanh.pop %v1228
      %1237 = vrot.lane.b32.xlu0 %v1182, 32
      %v1238 = vpop.permute.xlu0 %1237
      %v1240 = vmul.f32 %v1234, %v1238
      %1242 = vrot.lane.b32.xlu0 %v1235, 64
      %v1243 = vpop.permute.xlu0 %1242
      %v1245 = vmul.f32 %v1234, %v1243
      %1247 = vrot.lane.b32.xlu0 %v1245, 32
      %v1248 = vpop.permute.xlu0 %1247
      %v1250 = vadd.f32 %v1240, %v1248
      %v1251 = vtanh.pop %v1250
      %1253 = vrot.lane.b32.xlu0 %v1251, 64
      %v1254 = vpop.permute.xlu0 %1253
      %v1256 = vmul.f32 %v1234, %v1254
      %s1257 = sadd.s32 %s357, %s1177
      %v1258 = vstv %s1257
      %vm1259 = vcmp.lt.s32.totalorder %v1258, %v349
      %v1260 = vsel %vm1259, 1, 0
      %1261 = vset.pattern.permute.xlu0 0
      %1262 = vperm.xlu0 %1261, %v1260
      %v1263 = vpop.permute.xlu0 %1262
      %vm1264 = vcmp.eq.s32.totalorder %v1263, 1
      %1266 = vrot.lane.b32.xlu0 %v1181, 96
      %v1267 = vpop.permute.xlu0 %1266
      %v1269 = vsel %vm1264, %v1256, %v1267
      %1271 = vrot.lane.b32.xlu0 %v1269, 32
      %v1272 = vpop.permute.xlu0 %1271
      %1274 = vst.msk [vmem:[#allocation2] sm:$0xff] %vm377, %v1272
      %v1275 = vsel %vm1264, %v1250, %v1238
      %1277 = vrot.lane.b32.xlu0 %v1275, 96
      %v1278 = vpop.permute.xlu0 %1277
      %1280 = vst.msk [vmem:[#allocation3] sm:$0xff] %vm377, %v1278
      %v1281 = vsel %vm1264, %v1256, 0.0
      %v1282 = vpack.c.bf16 %v1281, %v1281
      %v1284 = vunpack.c.l.b16 %v1282
      %v1285 = vpack.c.b16 %v1284, %v1284
      %1286 = vrot.lane.b32.xlu0 %v1285, 32
      %v1287 = vpop.permute.xlu0 %1286
      %s1289 = smul.addr %s1177, 4
      %s1290 = scalar_lea.vmem %s328, %s1289
      %1291 = vst.msk [vmem:[%s1290] sm:$0xf] %vm485, %v1287
      // Predicated region
      $region37: #{lstm_forward.5} parent=31 // pred_check
        %p1292 = pneg %p342
      $region38: #{lstm_forward.5} parent=31 // pred_check_branch
        %1294 = sbr.rel (%p1292) target = $region40
      $region39: #{lstm_forward.5} parent=31 // pred_region
        %v1295 = vld [vmem:[#allocation2] sm:$0xff]
        %1296 = vst.msk [vmem:[%s336] sm:$0xff] %vm377, %v1295
        %v1297 = vld [vmem:[#allocation3] sm:$0xff]
        %1298 = vst.msk [vmem:[%s340] sm:$0xff] %vm377, %v1297
      $region40: #{lstm_forward.5} parent=31 // pred_fallthru
        _
      %s1299 = smul.u32 %s21, 2
      %s1300 = ssub.s32 1, %s1299
      %s1301 = smul.u32 %s1300, %s22
      %s1302 = smul.u32 8, %s1301
      %p1303 = scmp.lt.s32.totalorder %s21, 1
      %s1304 = scalar_select %p1303, %s21, 1
      %p1305 = scmp.lt.s32.totalorder %s1302, 7
      %s1306 = scalar_select %p1305, %s1302, 7
      %s1307 = smul.addr %s1304, 8
      %s1308 = sadd.s32 %s1306, %s1307
      %s1309 = smul.addr %s1308, 4
      %s1310 = scalar_lea.vmem %s3, %s1309
      %p1311 = scmp.lt.s32.totalorder %s21, 1
      %s1312 = scalar_select %p1311, %s21, 1
      %s1313 = smul.addr %s1312, 8
      %s1314 = scalar_lea.vmem %s4, %s1313
      %p1315 = scmp.lt.s32.totalorder %s21, 1
      %s1316 = scalar_select %p1315, %s21, 1
      %s1317 = smul.addr %s1316, 8
      %s1318 = scalar_lea.vmem %s5, %s1317
      // Predicated region
      $region41: #{lstm_forward.5} parent=31 // pred_check
        %p1319 = pneg %p136
      $region42: #{lstm_forward.5} parent=31 // pred_check_branch
        %1321 = sbr.rel (%p1319) target = $region44
      $region43: #{lstm_forward.5} parent=31 // pred_region
        %s1322 = smul.u32 %s21, 2
        %s1323 = ssub.s32 1, %s1322
        %s1324 = smul.u32 %s1323, %s22
        %s1325 = smul.u32 8, %s1324
      $region44: #{lstm_forward.5} parent=31 // pred_fallthru
        _
      // Predicated region
      $region45: #{lstm_forward.5} parent=31 // pred_check
        %p1326 = pneg %p162
      $region46: #{lstm_forward.5} parent=31 // pred_check_branch
        %1328 = sbr.rel (%p1326) target = $region48
      $region47: #{lstm_forward.5} parent=31 // pred_region
        _
      $region48: #{lstm_forward.5} parent=31 // pred_fallthru
        _
      // Predicated region
      $region49: #{lstm_forward.5} parent=31 // pred_check
        %p1329 = pneg %p188
      $region50: #{lstm_forward.5} parent=31 // pred_check_branch
        %1331 = sbr.rel (%p1329) target = $region52
      $region51: #{lstm_forward.5} parent=31 // pred_region
        _
      $region52: #{lstm_forward.5} parent=31 // pred_fallthru
        _
    $region32: #{lstm_forward.5} parent=5 // pred_fallthru
      _
    %p1332 = scmp.le.s32.totalorder 2, %s12
    // Predicated region
    $region53: #{lstm_forward.5} parent=5 // pred_check
      %p1333 = pneg %p1332
    $region54: #{lstm_forward.5} parent=5 // pred_check_branch
      %1335 = sbr.rel (%p1333) target = $region56
    $region55: #{lstm_forward.5} parent=5 // pred_region
      %s1336 = ssub.s32 %s12, 2
      // Predicated region
      $region57: #{lstm_forward.5} parent=55 // pred_check
        %p1337 = pneg %p142
      $region58: #{lstm_forward.5} parent=55 // pred_check_branch
        %1339 = sbr.rel (%p1337) target = $region60
      $region59: #{lstm_forward.5} parent=55 // pred_region
        %s1340 = smul.u32 %s23, 2
        %s1341 = ssub.s32 1, %s1340
        %s1342 = smul.u32 %s1341, %s24
        %s1343 = smul.u32 8, %s1342
        %p1344 = scmp.lt.s32.totalorder %s23, 1
        %s1345 = scalar_select %p1344, %s23, 1
        %p1346 = scmp.lt.s32.totalorder %s1343, 7
        %s1347 = scalar_select %p1346, %s1343, 7
        %s1348 = smul.addr %s1345, 8
        %s1349 = sadd.s32 %s1347, %s1348
        %s1350 = smul.addr %s1349, 4
        %s1351 = scalar_lea.vmem %s3, %s1350
      $region60: #{lstm_forward.5} parent=55 // pred_fallthru
        _
      // Predicated region
      $region61: #{lstm_forward.5} parent=55 // pred_check
        %p1352 = pneg %p168
      $region62: #{lstm_forward.5} parent=55 // pred_check_branch
        %1354 = sbr.rel (%p1352) target = $region64
      $region63: #{lstm_forward.5} parent=55 // pred_region
        %p1355 = scmp.lt.s32.totalorder %s23, 1
        %s1356 = scalar_select %p1355, %s23, 1
        %s1357 = smul.addr %s1356, 8
        %s1358 = scalar_lea.vmem %s4, %s1357
      $region64: #{lstm_forward.5} parent=55 // pred_fallthru
        _
      // Predicated region
      $region65: #{lstm_forward.5} parent=55 // pred_check
        %p1359 = pneg %p194
      $region66: #{lstm_forward.5} parent=55 // pred_check_branch
        %1361 = sbr.rel (%p1359) target = $region68
      $region67: #{lstm_forward.5} parent=55 // pred_region
        %p1362 = scmp.lt.s32.totalorder %s23, 1
        %s1363 = scalar_select %p1362, %s23, 1
        %s1364 = smul.addr %s1363, 8
        %s1365 = scalar_lea.vmem %s5, %s1364
      $region68: #{lstm_forward.5} parent=55 // pred_fallthru
        _
    $region56: #{lstm_forward.5} parent=5 // pred_fallthru
      _
  $region6: #{lstm_forward.5} parent=0 // loop_footer
    %s16 = sadd.s32 1, %s12
  $region7: #{lstm_forward.5} parent=0 // loop_footer_branch
    %11 = sbr.rel target = $region3
  $region8: #{lstm_forward.5} parent=0 // loop_exit
    _

// kernel: lstm_forward.7
$region0: #{lstm_forward.7}
  #allocation0 [shape = 'u32[]', space=smem, size = 0x4, offset = 0x4, fixed_abs, tag = 'smem constant byte address 0x4 - core index']
  #allocation1 [shape = 'u32[144,128]{1,0:T(1,128)}', space=vmem, size = 0x12000, scoped, tag = 'internal scratch']
  #allocation2 [shape = 'f32[8,32]{1,0:T(8,128)}', space=vmem, size = 0x1000, scoped, tag = 'scratch operand']
  #allocation3 [shape = 'f32[8,32]{1,0:T(8,128)}', space=vmem, size = 0x1000, scoped, tag = 'scratch operand']
  %s0 = inlined_call_operand.vmem [shape: s32[8,1], index: 0, kind: input, shape index: {}]
  %s1 = inlined_call_operand.vmem [shape: bf16[2,8,8,128], index: 1, kind: input, shape index: {}]
  %s2 = inlined_call_operand.vmem [shape: bf16[2,32,128], index: 2, kind: input, shape index: {}]
  %s3 = inlined_call_operand.vmem [shape: f32[2,8,8,32], index: 3, kind: output, shape index: {0}]
  %s4 = inlined_call_operand.vmem [shape: f32[2,8,32], index: 4, kind: output, shape index: {1}]
  %s5 = inlined_call_operand.vmem [shape: f32[2,8,32], index: 5, kind: output, shape index: {2}]
  %6 = xla_tuple %s3, %s4, %s5
  %s7 = sld [smem:[#allocation0]]
  $region69: #{lstm_forward.7} parent=0
    _
  %s9 = ssub.s32 1, %s7
  %s10 = scalar_select 0, %s9, %s7
  loop: start=0, step=1, limit=4
  $region2: #{lstm_forward.7} parent=0 // loop_pre_header
    _
  $region3: #{lstm_forward.7} parent=0 // loop_header
    %s12 = sphi 0, %s16
    %p13 = scmp.ge.s32.totalorder %s12, 4
    %s19 = sphi 0, %s31
    %s20 = sphi 0, %s27
    %s21 = sphi 0, %s19
    %s22 = sphi 0, %s20
    %s23 = sphi 0, %s21
    %s24 = sphi 0, %s22
    %s32 = sphi 0, %s32
    %s34 = sphi 0, %s32
    %s35 = sphi 0, %s34
    %s49 = sphi 0, %s35
    %s63 = sphi 0, %s65
    %s66 = sphi 0, %s63
    %s67 = sphi 0, %s66
    %s83 = sphi 0, %s67
    %s89 = sphi 0, %s91
    %s92 = sphi 0, %s89
    %s93 = sphi 0, %s92
    %s109 = sphi 0, %s93
    %s123 = sphi 0, %s125
    %s126 = sphi 0, %s123
    %s127 = sphi 0, %s126
    %s143 = sphi 0, %s127
    %s149 = sphi 0, %s151
    %s152 = sphi 0, %s149
    %s153 = sphi 0, %s152
    %s169 = sphi 0, %s153
    %s175 = sphi 0, %s177
    %s178 = sphi 0, %s175
    %s179 = sphi 0, %s178
    %s195 = sphi 0, %s179
  $region4: #{lstm_forward.7} parent=0 // loop_header_branch
    %15 = sbr.rel (%p13) target = $region8
  $region5: #{lstm_forward.7} parent=0 // loop_body
    %s17 = ssub.s32 %s12, 1
    %s18 = ssub.s32 %s12, 2
    %s25 = sadd.s32 1, %s20
    %p26 = scmp.ge.s32.totalorder %s25, 1
    %s27 = scalar_select %p26, 0, %s25
    %s28 = sadd.s32 1, %s19
    %s29 = scalar_select %p26, %s28, %s19
    %p30 = scmp.ge.s32.totalorder %s29, 2
    %s31 = scalar_select %p30, 0, %s29
    %s33 = sadd.s32 %s32, 1
    %p36 = scmp.eq.s32.totalorder %s12, 1
    %p37 = scmp.ne.s32.totalorder %s32, %s34
    %p38 = scmp.eq.s32.totalorder %s12, 0
    %p39 = por %p37, %p38
    %p40 = scmp.ne.s32.totalorder %s32, %s34
    %p41 = scmp.eq.s32.totalorder %s17, 1
    %p42 = por %p40, %p41
    %p43 = scmp.ne.s32.totalorder %s34, %s35
    %p44 = scmp.eq.s32.totalorder %s17, 0
    %p45 = por %p43, %p44
    %p46 = scmp.ne.s32.totalorder %s34, %s35
    %p47 = scmp.eq.s32.totalorder %s18, 1
    %p48 = por %p46, %p47
    %p50 = scmp.ne.s32.totalorder %s35, %s49
    %p51 = scmp.eq.s32.totalorder %s18, 0
    %p52 = por %p50, %p51
    %s53 = smul.u32 %s19, 2
    %s54 = ssub.s32 1, %s53
    %s55 = smul.u32 %s54, %s20
    %s56 = smul.u32 %s31, 2
    %s57 = ssub.s32 1, %s56
    %s58 = smul.u32 %s57, %s27
    %s59 = ssub.s32 %s19, %s31
    %s60 = ssub.s32 %s55, %s58
    %s61 = sor.u32 %s59, %s60
    %p62 = scmp.eq.s32.totalorder %s61, 0
    %s64 = sadd.s32 %s63, 1
    %s65 = scalar_select %p62, %s63, %s64
    %p68 = pneg %p62
    %p69 = scmp.eq.s32.totalorder %s12, 1
    %p70 = por %p68, %p69
    %p71 = scmp.ne.s32.totalorder %s63, %s66
    %p72 = scmp.eq.s32.totalorder %s12, 0
    %p73 = por %p71, %p72
    %p74 = scmp.ne.s32.totalorder %s63, %s66
    %p75 = scmp.eq.s32.totalorder %s17, 1
    %p76 = por %p74, %p75
    %p77 = scmp.ne.s32.totalorder %s66, %s67
    %p78 = scmp.eq.s32.totalorder %s17, 0
    %p79 = por %p77, %p78
    %p80 = scmp.ne.s32.totalorder %s66, %s67
    %p81 = scmp.eq.s32.totalorder %s18, 1
    %p82 = por %p80, %p81
    %p84 = scmp.ne.s32.totalorder %s67, %s83
    %p85 = scmp.eq.s32.totalorder %s18, 0
    %p86 = por %p84, %p85
    %s87 = ssub.s32 %s19, %s31
    %p88 = scmp.eq.s32.totalorder %s87, 0
    %s90 = sadd.s32 %s89, 1
    %s91 = scalar_select %p88, %s89, %s90
    %p94 = pneg %p88
    %p95 = scmp.eq.s32.totalorder %s12, 1
    %p96 = por %p94, %p95
    %p97 = scmp.ne.s32.totalorder %s89, %s92
    %p98 = scmp.eq.s32.totalorder %s12, 0
    %p99 = por %p97, %p98
    %p100 = scmp.ne.s32.totalorder %s89, %s92
    %p101 = scmp.eq.s32.totalorder %s17, 1
    %p102 = por %p100, %p101
    %p103 = scmp.ne.s32.totalorder %s92, %s93
    %p104 = scmp.eq.s32.totalorder %s17, 0
    %p105 = por %p103, %p104
    %p106 = scmp.ne.s32.totalorder %s92, %s93
    %p107 = scmp.eq.s32.totalorder %s18, 1
    %p108 = por %p106, %p107
    %p110 = scmp.ne.s32.totalorder %s93, %s109
    %p111 = scmp.eq.s32.totalorder %s18, 0
    %p112 = por %p110, %p111
    %s113 = smul.u32 %s19, 2
    %s114 = ssub.s32 1, %s113
    %s115 = smul.u32 %s114, %s20
    %s116 = smul.u32 %s31, 2
    %s117 = ssub.s32 1, %s116
    %s118 = smul.u32 %s117, %s27
    %s119 = ssub.s32 %s19, %s31
    %s120 = ssub.s32 %s115, %s118
    %s121 = sor.u32 %s119, %s120
    %p122 = scmp.eq.s32.totalorder %s121, 0
    %s124 = sadd.s32 %s123, 1
    %s125 = scalar_select %p122, %s123, %s124
    %p128 = pneg %p122
    %p129 = scmp.eq.s32.totalorder %s12, 1
    %p130 = por %p128, %p129
    %p131 = scmp.ne.s32.totalorder %s123, %s126
    %p132 = scmp.eq.s32.totalorder %s12, 0
    %p133 = por %p131, %p132
    %p134 = scmp.ne.s32.totalorder %s123, %s126
    %p135 = scmp.eq.s32.totalorder %s17, 1
    %p136 = por %p134, %p135
    %p137 = scmp.ne.s32.totalorder %s126, %s127
    %p138 = scmp.eq.s32.totalorder %s17, 0
    %p139 = por %p137, %p138
    %p140 = scmp.ne.s32.totalorder %s126, %s127
    %p141 = scmp.eq.s32.totalorder %s18, 1
    %p142 = por %p140, %p141
    %p144 = scmp.ne.s32.totalorder %s127, %s143
    %p145 = scmp.eq.s32.totalorder %s18, 0
    %p146 = por %p144, %p145
    %s147 = ssub.s32 %s19, %s31
    %p148 = scmp.eq.s32.totalorder %s147, 0
    %s150 = sadd.s32 %s149, 1
    %s151 = scalar_select %p148, %s149, %s150
    %p154 = pneg %p148
    %p155 = scmp.eq.s32.totalorder %s12, 1
    %p156 = por %p154, %p155
    %p157 = scmp.ne.s32.totalorder %s149, %s152
    %p158 = scmp.eq.s32.totalorder %s12, 0
    %p159 = por %p157, %p158
    %p160 = scmp.ne.s32.totalorder %s149, %s152
    %p161 = scmp.eq.s32.totalorder %s17, 1
    %p162 = por %p160, %p161
    %p163 = scmp.ne.s32.totalorder %s152, %s153
    %p164 = scmp.eq.s32.totalorder %s17, 0
    %p165 = por %p163, %p164
    %p166 = scmp.ne.s32.totalorder %s152, %s153
    %p167 = scmp.eq.s32.totalorder %s18, 1
    %p168 = por %p166, %p167
    %p170 = scmp.ne.s32.totalorder %s153, %s169
    %p171 = scmp.eq.s32.totalorder %s18, 0
    %p172 = por %p170, %p171
    %s173 = ssub.s32 %s19, %s31
    %p174 = scmp.eq.s32.totalorder %s173, 0
    %s176 = sadd.s32 %s175, 1
    %s177 = scalar_select %p174, %s175, %s176
    %p180 = pneg %p174
    %p181 = scmp.eq.s32.totalorder %s12, 1
    %p182 = por %p180, %p181
    %p183 = scmp.ne.s32.totalorder %s175, %s178
    %p184 = scmp.eq.s32.totalorder %s12, 0
    %p185 = por %p183, %p184
    %p186 = scmp.ne.s32.totalorder %s175, %s178
    %p187 = scmp.eq.s32.totalorder %s17, 1
    %p188 = por %p186, %p187
    %p189 = scmp.ne.s32.totalorder %s178, %s179
    %p190 = scmp.eq.s32.totalorder %s17, 0
    %p191 = por %p189, %p190
    %p192 = scmp.ne.s32.totalorder %s178, %s179
    %p193 = scmp.eq.s32.totalorder %s18, 1
    %p194 = por %p192, %p193
    %p196 = scmp.ne.s32.totalorder %s179, %s195
    %p197 = scmp.eq.s32.totalorder %s18, 0
    %p198 = por %p196, %p197
    %p199 = scmp.le.s32.totalorder 1, %s12
    %p200 = scmp.lt.s32.totalorder %s12, 3
    %p201 = pnand %p199, %p200
    %p202 = pneg %p201
    // Predicated region
    $region9: #{lstm_forward.7} parent=5 // pred_check
      _
    $region10: #{lstm_forward.7} parent=5 // pred_check_branch
      %204 = sbr.rel (%p201) target = $region12
    $region11: #{lstm_forward.7} parent=5 // pred_region
      %s205 = ssub.s32 %s12, 1
      // Predicated region
      $region13: #{lstm_forward.7} parent=11 // pred_check
        %p206 = pneg %p45
      $region14: #{lstm_forward.7} parent=11 // pred_check_branch
        %208 = sbr.rel (%p206) target = $region16
      $region15: #{lstm_forward.7} parent=11 // pred_region
        _
      $region16: #{lstm_forward.7} parent=11 // pred_fallthru
        _
    $region12: #{lstm_forward.7} parent=5 // pred_fallthru
      _
    %p209 = scmp.lt.s32.totalorder %s12, 2
    // Predicated region
    $region17: #{lstm_forward.7} parent=5 // pred_check
      %p210 = pneg %p209
    $region18: #{lstm_forward.7} parent=5 // pred_check_branch
      %212 = sbr.rel (%p210) target = $region20
    $region19: #{lstm_forward.7} parent=5 // pred_region
      // Predicated region
      $region21: #{lstm_forward.7} parent=19 // pred_check
        %p213 = pneg %p73
      $region22: #{lstm_forward.7} parent=19 // pred_check_branch
        %215 = sbr.rel (%p213) target = $region24
      $region23: #{lstm_forward.7} parent=19 // pred_region
        %s216 = smul.u32 %s19, 2
        %s217 = ssub.s32 1, %s216
        %s218 = smul.u32 %s217, %s20
        %s219 = smul.u32 8, %s218
        %p220 = scmp.lt.s32.totalorder %s19, 1
        %s221 = scalar_select %p220, %s19, 1
        %p222 = scmp.lt.s32.totalorder %s219, 7
        %s223 = scalar_select %p222, %s219, 7
        %s224 = smul.addr %s221, 8
        %s225 = sadd.s32 %s223, %s224
        %s226 = smul.addr %s225, 4
        %s227 = scalar_lea.vmem %s1, %s226
        %s228 = smul.u32 %s19, 2
        %s229 = ssub.s32 1, %s228
        %s230 = smul.u32 %s229, %s20
        %s231 = smul.u32 8, %s230
      $region24: #{lstm_forward.7} parent=19 // pred_fallthru
        _
      // Predicated region
      $region25: #{lstm_forward.7} parent=19 // pred_check
        %p232 = pneg %p99
      $region26: #{lstm_forward.7} parent=19 // pred_check_branch
        %234 = sbr.rel (%p232) target = $region28
      $region27: #{lstm_forward.7} parent=19 // pred_region
        %p235 = scmp.lt.s32.totalorder %s19, 1
        %s236 = scalar_select %p235, %s19, 1
        %s237 = smul.addr %s236, 4
        %s238 = smul.addr %s237, 4
        %s239 = scalar_lea.vmem %s2, %s238
      $region28: #{lstm_forward.7} parent=19 // pred_fallthru
        _
    $region20: #{lstm_forward.7} parent=5 // pred_fallthru
      _
    %p240 = scmp.le.s32.totalorder 1, %s12
    %p241 = scmp.lt.s32.totalorder %s12, 3
    %p242 = pnand %p240, %p241
    %p243 = pneg %p242
    // Predicated region
    $region29: #{lstm_forward.7} parent=5 // pred_check
      _
    $region30: #{lstm_forward.7} parent=5 // pred_check_branch
      %245 = sbr.rel (%p242) target = $region32
    $region31: #{lstm_forward.7} parent=5 // pred_region
      %s246 = ssub.s32 %s12, 1
      %p247 = pneg %p45
      %p248 = pneg %p42
      %s249 = smul.u32 %s21, 2
      %s250 = ssub.s32 1, %s249
      %s251 = smul.u32 %s250, %s22
      %s252 = smul.u32 8, %s251
      %p253 = scmp.lt.s32.totalorder %s21, 1
      %s254 = scalar_select %p253, %s21, 1
      %p255 = scmp.lt.s32.totalorder %s252, 7
      %s256 = scalar_select %p255, %s252, 7
      %s257 = smul.addr %s254, 8
      %s258 = sadd.s32 %s256, %s257
      %s259 = smul.addr %s258, 4
      %s260 = scalar_lea.vmem %s1, %s259
      %p261 = pneg %p79
      %p262 = pneg %p76
      %p263 = scmp.lt.s32.totalorder %s21, 1
      %s264 = scalar_select %p263, %s21, 1
      %s265 = smul.addr %s264, 4
      %s266 = smul.addr %s265, 4
      %s267 = scalar_lea.vmem %s2, %s266
      %p268 = pneg %p105
      %p269 = pneg %p102
      %p270 = pneg %p139
      %p271 = pneg %p136
      %s272 = smul.u32 %s21, 2
      %s273 = ssub.s32 1, %s272
      %s274 = smul.u32 %s273, %s22
      %s275 = smul.u32 8, %s274
      %p276 = scmp.lt.s32.totalorder %s21, 1
      %s277 = scalar_select %p276, %s21, 1
      %p278 = scmp.lt.s32.totalorder %s275, 7
      %s279 = scalar_select %p278, %s275, 7
      %s280 = smul.addr %s277, 8
      %s281 = sadd.s32 %s279, %s280
      %s282 = smul.addr %s281, 8
      %s283 = scalar_lea.vmem %s3, %s282
      %p284 = pneg %p165
      %p285 = pneg %p162
      %p286 = scmp.lt.s32.totalorder %s21, 1
      %s287 = scalar_select %p286, %s21, 1
      %s288 = smul.addr %s287, 8
      %s289 = scalar_lea.vmem %s4, %s288
      %p290 = pneg %p191
      %p291 = pneg %p188
      %p292 = scmp.lt.s32.totalorder %s21, 1
      %s293 = scalar_select %p292, %s21, 1
      %s294 = smul.addr %s293, 8
      %s295 = scalar_lea.vmem %s5, %s294
      %s296 = smul.u32 %s21, 2
      %s297 = ssub.s32 1, %s296
      %s298 = smul.u32 %s297, %s22
      %s299 = smul.u32 8, %s298
      %p300 = scmp.lt.s32.totalorder %s21, 1
      %s301 = scalar_select %p300, %s21, 1
      %p302 = scmp.lt.s32.totalorder %s299, 7
      %s303 = scalar_select %p302, %s299, 7
      %s304 = smul.addr %s301, 8
      %s305 = sadd.s32 %s303, %s304
      %s306 = smul.addr %s305, 4
      %s307 = scalar_lea.vmem %s1, %s306
      %s308 = smul.u32 %s21, 2
      %s309 = ssub.s32 1, %s308
      %s310 = smul.u32 %s309, %s22
      %s311 = smul.u32 8, %s310
      %p312 = scmp.lt.s32.totalorder %s21, 1
      %s313 = scalar_select %p312, %s21, 1
      %s314 = smul.addr %s313, 4
      %s315 = smul.addr %s314, 4
      %s316 = scalar_lea.vmem %s2, %s315
      %s317 = smul.u32 %s21, 2
      %s318 = ssub.s32 1, %s317
      %s319 = smul.u32 %s318, %s22
      %s320 = smul.u32 8, %s319
      %p321 = scmp.lt.s32.totalorder %s21, 1
      %s322 = scalar_select %p321, %s21, 1
      %p323 = scmp.lt.s32.totalorder %s320, 7
      %s324 = scalar_select %p323, %s320, 7
      %s325 = smul.addr %s322, 8
      %s326 = sadd.s32 %s324, %s325
      %s327 = smul.addr %s326, 8
      %s328 = scalar_lea.vmem %s3, %s327
      %s329 = smul.u32 %s21, 2
      %s330 = ssub.s32 1, %s329
      %s331 = smul.u32 %s330, %s22
      %s332 = smul.u32 8, %s331
      %p333 = scmp.lt.s32.totalorder %s21, 1
      %s334 = scalar_select %p333, %s21, 1
      %s335 = smul.addr %s334, 8
      %s336 = scalar_lea.vmem %s4, %s335
      %p337 = scmp.lt.s32.totalorder %s21, 1
      %s338 = scalar_select %p337, %s21, 1
      %s339 = smul.addr %s338, 8
      %s340 = scalar_lea.vmem %s5, %s339
      %p342 = scmp.eq.s32.totalorder %s22, 0
      // Predicated region
      $region33: #{lstm_forward.7} parent=31 // pred_check
        %p343 = pneg %p342
      $region34: #{lstm_forward.7} parent=31 // pred_check_branch
        %345 = sbr.rel (%p343) target = $region36
      $region35: #{lstm_forward.7} parent=31 // pred_region
        %vm346 = vcmask 261120
        %347 = vst.msk [vmem:[#allocation2] sm:$0xff] %vm346, 0.0
        %348 = vst.msk [vmem:[#allocation3] sm:$0xff] %vm346, 0.0
      $region36: #{lstm_forward.7} parent=31 // pred_fallthru
        _
      %v349 = vld [vmem:[%s0] sm:$0xff]
      %v350 = vld [vmem:[%s316] sm:$0xf]
      %v351 = vld [vmem:[%s316 + $0x4] sm:$0xf]
      %v352 = vld [vmem:[%s316 + $0x8] sm:$0xf]
      %v353 = vld [vmem:[%s316 + $0xc] sm:$0xf]
      %p354 = scmp.eq.s32.totalorder %s21, 1
      %s355 = ssub.s32 0, %s22
      %s356 = scalar_select %p354, %s355, %s22
      %s357 = smul.u32 %s356, 8
      %s358 = scalar_select %p354, 7, 0
      %s359 = smul.addr %s358, 4
      %s360 = scalar_lea.vmem %s307, %s359
      %v361 = vld [vmem:[%s360] sm:$0xf]
      %v362 = vld [vmem:[#allocation2] sm:$0xff]
      %v363 = vld [vmem:[#allocation3] sm:$0xff]
      %v364 = vpack.c.bf16 %v362, %v362
      %v369 = vunpack.c.l.b16 %v350
      %v370 = vunpack.c.l.b16 %v351
      %v371 = vunpack.c.l.b16 %v352
      %v372 = vunpack.c.l.b16 %v353
      %v373 = vpack.c.b16 %v370, %v369
      %v374 = vpack.c.b16 %v372, %v371
      %vm377 = vcmask 261120
      %v379 = vsel %vm377, %v364, 0
      %381 = vmatprep.subr.bf16.mxu0 0
      %382 = vmatpush1.bf16.msra.mxu0 0
      %383 = vmatprep.subr.bf16.mxu0 0
      %384 = vmatpush1.bf16.msra.mxu0 0
      %385 = vmatprep.subr.bf16.mxu0 0
      %386 = vmatpush1.bf16.msra.mxu0 0
      %387 = vmatprep.subr.bf16.mxu0 0
      %388 = vmatpush1.bf16.msra.mxu0 0
      %389 = vmatprep.subr.bf16.mxu0 0
      %390 = vmatpush1.bf16.msra.mxu0 0
      %391 = vmatprep.subr.bf16.mxu0 0
      %392 = vmatpush1.bf16.msra.mxu0 0
      %393 = vmatprep.subr.bf16.mxu0 0
      %394 = vmatpush1.bf16.msra.mxu0 %v374
      %395 = vmatprep.subr.bf16.mxu0 0
      %396 = vmatpush1.bf16.msra.mxu0 %v373
      %397 = vmatprep.subr.bf16.mxu0 0
      %398 = vmatpush2.bf16.msra.mxu0 0
      %399 = vmatprep.subr.bf16.mxu0 0
      %400 = vmatpush2.bf16.msra.mxu0 0
      %401 = vmatprep.subr.bf16.mxu0 0
      %402 = vmatpush2.bf16.msra.mxu0 0
      %403 = vmatprep.subr.bf16.mxu0 0
      %404 = vmatpush2.bf16.msra.mxu0 0
      %405 = vmatprep.subr.bf16.mxu0 0
      %406 = vmatpush2.bf16.msra.mxu0 0
      %407 = vmatprep.subr.bf16.mxu0 0
      %408 = vmatpush2.bf16.msra.mxu0 0
      %409 = vmatprep.subr.bf16.mxu0 0
      %410 = vmatpush2.bf16.msra.mxu0 0
      %411 = vmatprep.subr.bf16.mxu0 0
      %412 = vmatpush2.bf16.msra.mxu0 0
      %413 = vmatprep.mubr.bf16.mxu0 0
      %414 = vmatmul.mubr.bf16.gmra.mxu0 %v379
      %v415 = vpop.f32.mrf.mxu0
      %v416 = vadd.f32 0.0, %v415
      %v417 = vpop.f32.mrf.mxu0
      %v418 = vpop.f32.mrf.mxu0
      %v419 = vpop.f32.mrf.mxu0
      %420 = vdwg.mxu0
      %v421 = vunpack.c.l.bf16 %v361
      %v422 = vadd.f32 %v421, %v416
      %v423 = vxor.u32 %v422, 2147483648
      %v424 = vmul.f32 %v423, 1.442695
      %v425 = vpow.pop %v424
      %v426 = vadd.f32 %v425, 1.0
      %v427 = vrcp.pop %v426
      %v428 = vmul.f32 1.0, %v427
      %v429 = vtanh.pop %v422
      %431 = vrot.lane.b32.xlu0 %v363, 32
      %v432 = vpop.permute.xlu0 %431
      %v434 = vmul.f32 %v428, %v432
      %436 = vrot.lane.b32.xlu0 %v429, 64
      %v437 = vpop.permute.xlu0 %436
      %v439 = vmul.f32 %v428, %v437
      %441 = vrot.lane.b32.xlu0 %v439, 32
      %v442 = vpop.permute.xlu0 %441
      %v444 = vadd.f32 %v434, %v442
      %v445 = vtanh.pop %v444
      %447 = vrot.lane.b32.xlu0 %v445, 64
      %v448 = vpop.permute.xlu0 %447
      %v450 = vmul.f32 %v428, %v448
      %s451 = sadd.s32 %s357, %s358
      %v452 = vstv %s451
      %vm453 = vcmp.lt.s32.totalorder %v452, %v349
      %v454 = vsel %vm453, 1, 0
      %455 = vset.pattern.permute.xlu0 0
      %456 = vperm.xlu0 %455, %v454
      %v457 = vpop.permute.xlu0 %456
      %vm458 = vcmp.eq.s32.totalorder %v457, 1
      %460 = vrot.lane.b32.xlu0 %v362, 96
      %v461 = vpop.permute.xlu0 %460
      %v463 = vsel %vm458, %v450, %v461
      %465 = vrot.lane.b32.xlu0 %v463, 32
      %v466 = vpop.permute.xlu0 %465
      %468 = vst.msk [vmem:[#allocation2] sm:$0xff] %vm377, %v466
      %v469 = vsel %vm458, %v444, %v432
      %471 = vrot.lane.b32.xlu0 %v469, 96
      %v472 = vpop.permute.xlu0 %471
      %474 = vst.msk [vmem:[#allocation3] sm:$0xff] %vm377, %v472
      %v475 = vsel %vm458, %v450, 0.0
      %477 = vrot.lane.b32.xlu0 %v475, 32
      %v478 = vpop.permute.xlu0 %477
      %s480 = smul.u32 %s358, 8
      %s481 = scalar_lea.vmem %s328, %s480
      %482 = vst.msk [vmem:[%s481] sm:$0xff] %vm377, %v478
      %s483 = scalar_select %p354, 6, 1
      %s484 = smul.addr %s483, 4
      %s485 = scalar_lea.vmem %s307, %s484
      %v486 = vld [vmem:[%s485] sm:$0xf]
      %v487 = vld [vmem:[#allocation2] sm:$0xff]
      %v488 = vld [vmem:[#allocation3] sm:$0xff]
      %v489 = vpack.c.bf16 %v487, %v487
      %v491 = vsel %vm377, %v489, 0
      %493 = vmatprep.subr.bf16.mxu0 0
      %494 = vmatpush1.bf16.msra.mxu0 0
      %495 = vmatprep.subr.bf16.mxu0 0
      %496 = vmatpush1.bf16.msra.mxu0 0
      %497 = vmatprep.subr.bf16.mxu0 0
      %498 = vmatpush1.bf16.msra.mxu0 0
      %499 = vmatprep.subr.bf16.mxu0 0
      %500 = vmatpush1.bf16.msra.mxu0 0
      %501 = vmatprep.subr.bf16.mxu0 0
      %502 = vmatpush1.bf16.msra.mxu0 0
      %503 = vmatprep.subr.bf16.mxu0 0
      %504 = vmatpush1.bf16.msra.mxu0 0
      %505 = vmatprep.subr.bf16.mxu0 0
      %506 = vmatpush1.bf16.msra.mxu0 %v374
      %507 = vmatprep.subr.bf16.mxu0 0
      %508 = vmatpush1.bf16.msra.mxu0 %v373
      %509 = vmatprep.subr.bf16.mxu0 0
      %510 = vmatpush2.bf16.msra.mxu0 0
      %511 = vmatprep.subr.bf16.mxu0 0
      %512 = vmatpush2.bf16.msra.mxu0 0
      %513 = vmatprep.subr.bf16.mxu0 0
      %514 = vmatpush2.bf16.msra.mxu0 0
      %515 = vmatprep.subr.bf16.mxu0 0
      %516 = vmatpush2.bf16.msra.mxu0 0
      %517 = vmatprep.subr.bf16.mxu0 0
      %518 = vmatpush2.bf16.msra.mxu0 0
      %519 = vmatprep.subr.bf16.mxu0 0
      %520 = vmatpush2.bf16.msra.mxu0 0
      %521 = vmatprep.subr.bf16.mxu0 0
      %522 = vmatpush2.bf16.msra.mxu0 0
      %523 = vmatprep.subr.bf16.mxu0 0
      %524 = vmatpush2.bf16.msra.mxu0 0
      %525 = vmatprep.mubr.bf16.mxu0 0
      %526 = vmatmul.mubr.bf16.gmra.mxu0 %v491
      %v527 = vpop.f32.mrf.mxu0
      %v528 = vadd.f32 0.0, %v527
      %v529 = vpop.f32.mrf.mxu0
      %v530 = vpop.f32.mrf.mxu0
      %v531 = vpop.f32.mrf.mxu0
      %532 = vdwg.mxu0
      %v533 = vunpack.c.l.bf16 %v486
      %v534 = vadd.f32 %v533, %v528
      %v535 = vxor.u32 %v534, 2147483648
      %v536 = vmul.f32 %v535, 1.442695
      %v537 = vpow.pop %v536
      %v538 = vadd.f32 %v537, 1.0
      %v539 = vrcp.pop %v538
      %v540 = vmul.f32 1.0, %v539
      %v541 = vtanh.pop %v534
      %543 = vrot.lane.b32.xlu0 %v488, 32
      %v544 = vpop.permute.xlu0 %543
      %v546 = vmul.f32 %v540, %v544
      %548 = vrot.lane.b32.xlu0 %v541, 64
      %v549 = vpop.permute.xlu0 %548
      %v551 = vmul.f32 %v540, %v549
      %553 = vrot.lane.b32.xlu0 %v551, 32
      %v554 = vpop.permute.xlu0 %553
      %v556 = vadd.f32 %v546, %v554
      %v557 = vtanh.pop %v556
      %559 = vrot.lane.b32.xlu0 %v557, 64
      %v560 = vpop.permute.xlu0 %559
      %v562 = vmul.f32 %v540, %v560
      %s563 = sadd.s32 %s357, %s483
      %v564 = vstv %s563
      %vm565 = vcmp.lt.s32.totalorder %v564, %v349
      %v566 = vsel %vm565, 1, 0
      %567 = vset.pattern.permute.xlu0 0
      %568 = vperm.xlu0 %567, %v566
      %v569 = vpop.permute.xlu0 %568
      %vm570 = vcmp.eq.s32.totalorder %v569, 1
      %572 = vrot.lane.b32.xlu0 %v487, 96
      %v573 = vpop.permute.xlu0 %572
      %v575 = vsel %vm570, %v562, %v573
      %577 = vrot.lane.b32.xlu0 %v575, 32
      %v578 = vpop.permute.xlu0 %577
      %580 = vst.msk [vmem:[#allocation2] sm:$0xff] %vm377, %v578
      %v581 = vsel %vm570, %v556, %v544
      %583 = vrot.lane.b32.xlu0 %v581, 96
      %v584 = vpop.permute.xlu0 %583
      %586 = vst.msk [vmem:[#allocation3] sm:$0xff] %vm377, %v584
      %v587 = vsel %vm570, %v562, 0.0
      %589 = vrot.lane.b32.xlu0 %v587, 32
      %v590 = vpop.permute.xlu0 %589
      %s592 = smul.u32 %s483, 8
      %s593 = scalar_lea.vmem %s328, %s592
      %594 = vst.msk [vmem:[%s593] sm:$0xff] %vm377, %v590
      %s595 = scalar_select %p354, 5, 2
      %s596 = smul.addr %s595, 4
      %s597 = scalar_lea.vmem %s307, %s596
      %v598 = vld [vmem:[%s597] sm:$0xf]
      %v599 = vld [vmem:[#allocation2] sm:$0xff]
      %v600 = vld [vmem:[#allocation3] sm:$0xff]
      %v601 = vpack.c.bf16 %v599, %v599
      %v603 = vsel %vm377, %v601, 0
      %605 = vmatprep.subr.bf16.mxu0 0
      %606 = vmatpush1.bf16.msra.mxu0 0
      %607 = vmatprep.subr.bf16.mxu0 0
      %608 = vmatpush1.bf16.msra.mxu0 0
      %609 = vmatprep.subr.bf16.mxu0 0
      %610 = vmatpush1.bf16.msra.mxu0 0
      %611 = vmatprep.subr.bf16.mxu0 0
      %612 = vmatpush1.bf16.msra.mxu0 0
      %613 = vmatprep.subr.bf16.mxu0 0
      %614 = vmatpush1.bf16.msra.mxu0 0
      %615 = vmatprep.subr.bf16.mxu0 0
      %616 = vmatpush1.bf16.msra.mxu0 0
      %617 = vmatprep.subr.bf16.mxu0 0
      %618 = vmatpush1.bf16.msra.mxu0 %v374
      %619 = vmatprep.subr.bf16.mxu0 0
      %620 = vmatpush1.bf16.msra.mxu0 %v373
      %621 = vmatprep.subr.bf16.mxu0 0
      %622 = vmatpush2.bf16.msra.mxu0 0
      %623 = vmatprep.subr.bf16.mxu0 0
      %624 = vmatpush2.bf16.msra.mxu0 0
      %625 = vmatprep.subr.bf16.mxu0 0
      %626 = vmatpush2.bf16.msra.mxu0 0
      %627 = vmatprep.subr.bf16.mxu0 0
      %628 = vmatpush2.bf16.msra.mxu0 0
      %629 = vmatprep.subr.bf16.mxu0 0
      %630 = vmatpush2.bf16.msra.mxu0 0
      %631 = vmatprep.subr.bf16.mxu0 0
      %632 = vmatpush2.bf16.msra.mxu0 0
      %633 = vmatprep.subr.bf16.mxu0 0
      %634 = vmatpush2.bf16.msra.mxu0 0
      %635 = vmatprep.subr.bf16.mxu0 0
      %636 = vmatpush2.bf16.msra.mxu0 0
      %637 = vmatprep.mubr.bf16.mxu0 0
      %638 = vmatmul.mubr.bf16.gmra.mxu0 %v603
      %v639 = vpop.f32.mrf.mxu0
      %v640 = vadd.f32 0.0, %v639
      %v641 = vpop.f32.mrf.mxu0
      %v642 = vpop.f32.mrf.mxu0
      %v643 = vpop.f32.mrf.mxu0
      %644 = vdwg.mxu0
      %v645 = vunpack.c.l.bf16 %v598
      %v646 = vadd.f32 %v645, %v640
      %v647 = vxor.u32 %v646, 2147483648
      %v648 = vmul.f32 %v647, 1.442695
      %v649 = vpow.pop %v648
      %v650 = vadd.f32 %v649, 1.0
      %v651 = vrcp.pop %v650
      %v652 = vmul.f32 1.0, %v651
      %v653 = vtanh.pop %v646
      %655 = vrot.lane.b32.xlu0 %v600, 32
      %v656 = vpop.permute.xlu0 %655
      %v658 = vmul.f32 %v652, %v656
      %660 = vrot.lane.b32.xlu0 %v653, 64
      %v661 = vpop.permute.xlu0 %660
      %v663 = vmul.f32 %v652, %v661
      %665 = vrot.lane.b32.xlu0 %v663, 32
      %v666 = vpop.permute.xlu0 %665
      %v668 = vadd.f32 %v658, %v666
      %v669 = vtanh.pop %v668
      %671 = vrot.lane.b32.xlu0 %v669, 64
      %v672 = vpop.permute.xlu0 %671
      %v674 = vmul.f32 %v652, %v672
      %s675 = sadd.s32 %s357, %s595
      %v676 = vstv %s675
      %vm677 = vcmp.lt.s32.totalorder %v676, %v349
      %v678 = vsel %vm677, 1, 0
      %679 = vset.pattern.permute.xlu0 0
      %680 = vperm.xlu0 %679, %v678
      %v681 = vpop.permute.xlu0 %680
      %vm682 = vcmp.eq.s32.totalorder %v681, 1
      %684 = vrot.lane.b32.xlu0 %v599, 96
      %v685 = vpop.permute.xlu0 %684
      %v687 = vsel %vm682, %v674, %v685
      %689 = vrot.lane.b32.xlu0 %v687, 32
      %v690 = vpop.permute.xlu0 %689
      %692 = vst.msk [vmem:[#allocation2] sm:$0xff] %vm377, %v690
      %v693 = vsel %vm682, %v668, %v656
      %695 = vrot.lane.b32.xlu0 %v693, 96
      %v696 = vpop.permute.xlu0 %695
      %698 = vst.msk [vmem:[#allocation3] sm:$0xff] %vm377, %v696
      %v699 = vsel %vm682, %v674, 0.0
      %701 = vrot.lane.b32.xlu0 %v699, 32
      %v702 = vpop.permute.xlu0 %701
      %s704 = smul.u32 %s595, 8
      %s705 = scalar_lea.vmem %s328, %s704
      %706 = vst.msk [vmem:[%s705] sm:$0xff] %vm377, %v702
      %s707 = scalar_select %p354, 4, 3
      %s708 = smul.addr %s707, 4
      %s709 = scalar_lea.vmem %s307, %s708
      %v710 = vld [vmem:[%s709] sm:$0xf]
      %v711 = vld [vmem:[#allocation2] sm:$0xff]
      %v712 = vld [vmem:[#allocation3] sm:$0xff]
      %v713 = vpack.c.bf16 %v711, %v711
      %v715 = vsel %vm377, %v713, 0
      %717 = vmatprep.subr.bf16.mxu0 0
      %718 = vmatpush1.bf16.msra.mxu0 0
      %719 = vmatprep.subr.bf16.mxu0 0
      %720 = vmatpush1.bf16.msra.mxu0 0
      %721 = vmatprep.subr.bf16.mxu0 0
      %722 = vmatpush1.bf16.msra.mxu0 0
      %723 = vmatprep.subr.bf16.mxu0 0
      %724 = vmatpush1.bf16.msra.mxu0 0
      %725 = vmatprep.subr.bf16.mxu0 0
      %726 = vmatpush1.bf16.msra.mxu0 0
      %727 = vmatprep.subr.bf16.mxu0 0
      %728 = vmatpush1.bf16.msra.mxu0 0
      %729 = vmatprep.subr.bf16.mxu0 0
      %730 = vmatpush1.bf16.msra.mxu0 %v374
      %731 = vmatprep.subr.bf16.mxu0 0
      %732 = vmatpush1.bf16.msra.mxu0 %v373
      %733 = vmatprep.subr.bf16.mxu0 0
      %734 = vmatpush2.bf16.msra.mxu0 0
      %735 = vmatprep.subr.bf16.mxu0 0
      %736 = vmatpush2.bf16.msra.mxu0 0
      %737 = vmatprep.subr.bf16.mxu0 0
      %738 = vmatpush2.bf16.msra.mxu0 0
      %739 = vmatprep.subr.bf16.mxu0 0
      %740 = vmatpush2.bf16.msra.mxu0 0
      %741 = vmatprep.subr.bf16.mxu0 0
      %742 = vmatpush2.bf16.msra.mxu0 0
      %743 = vmatprep.subr.bf16.mxu0 0
      %744 = vmatpush2.bf16.msra.mxu0 0
      %745 = vmatprep.subr.bf16.mxu0 0
      %746 = vmatpush2.bf16.msra.mxu0 0
      %747 = vmatprep.subr.bf16.mxu0 0
      %748 = vmatpush2.bf16.msra.mxu0 0
      %749 = vmatprep.mubr.bf16.mxu0 0
      %750 = vmatmul.mubr.bf16.gmra.mxu0 %v715
      %v751 = vpop.f32.mrf.mxu0
      %v752 = vadd.f32 0.0, %v751
      %v753 = vpop.f32.mrf.mxu0
      %v754 = vpop.f32.mrf.mxu0
      %v755 = vpop.f32.mrf.mxu0
      %756 = vdwg.mxu0
      %v757 = vunpack.c.l.bf16 %v710
      %v758 = vadd.f32 %v757, %v752
      %v759 = vxor.u32 %v758, 2147483648
      %v760 = vmul.f32 %v759, 1.442695
      %v761 = vpow.pop %v760
      %v762 = vadd.f32 %v761, 1.0
      %v763 = vrcp.pop %v762
      %v764 = vmul.f32 1.0, %v763
      %v765 = vtanh.pop %v758
      %767 = vrot.lane.b32.xlu0 %v712, 32
      %v768 = vpop.permute.xlu0 %767
      %v770 = vmul.f32 %v764, %v768
      %772 = vrot.lane.b32.xlu0 %v765, 64
      %v773 = vpop.permute.xlu0 %772
      %v775 = vmul.f32 %v764, %v773
      %777 = vrot.lane.b32.xlu0 %v775, 32
      %v778 = vpop.permute.xlu0 %777
      %v780 = vadd.f32 %v770, %v778
      %v781 = vtanh.pop %v780
      %783 = vrot.lane.b32.xlu0 %v781, 64
      %v784 = vpop.permute.xlu0 %783
      %v786 = vmul.f32 %v764, %v784
      %s787 = sadd.s32 %s357, %s707
      %v788 = vstv %s787
      %vm789 = vcmp.lt.s32.totalorder %v788, %v349
      %v790 = vsel %vm789, 1, 0
      %791 = vset.pattern.permute.xlu0 0
      %792 = vperm.xlu0 %791, %v790
      %v793 = vpop.permute.xlu0 %792
      %vm794 = vcmp.eq.s32.totalorder %v793, 1
      %796 = vrot.lane.b32.xlu0 %v711, 96
      %v797 = vpop.permute.xlu0 %796
      %v799 = vsel %vm794, %v786, %v797
      %801 = vrot.lane.b32.xlu0 %v799, 32
      %v802 = vpop.permute.xlu0 %801
      %804 = vst.msk [vmem:[#allocation2] sm:$0xff] %vm377, %v802
      %v805 = vsel %vm794, %v780, %v768
      %807 = vrot.lane.b32.xlu0 %v805, 96
      %v808 = vpop.permute.xlu0 %807
      %810 = vst.msk [vmem:[#allocation3] sm:$0xff] %vm377, %v808
      %v811 = vsel %vm794, %v786, 0.0
      %813 = vrot.lane.b32.xlu0 %v811, 32
      %v814 = vpop.permute.xlu0 %813
      %s816 = smul.u32 %s707, 8
      %s817 = scalar_lea.vmem %s328, %s816
      %818 = vst.msk [vmem:[%s817] sm:$0xff] %vm377, %v814
      %s819 = scalar_select %p354, 3, 4
      %s820 = smul.addr %s819, 4
      %s821 = scalar_lea.vmem %s307, %s820
      %v822 = vld [vmem:[%s821] sm:$0xf]
      %v823 = vld [vmem:[#allocation2] sm:$0xff]
      %v824 = vld [vmem:[#allocation3] sm:$0xff]
      %v825 = vpack.c.bf16 %v823, %v823
      %v827 = vsel %vm377, %v825, 0
      %829 = vmatprep.subr.bf16.mxu0 0
      %830 = vmatpush1.bf16.msra.mxu0 0
      %831 = vmatprep.subr.bf16.mxu0 0
      %832 = vmatpush1.bf16.msra.mxu0 0
      %833 = vmatprep.subr.bf16.mxu0 0
      %834 = vmatpush1.bf16.msra.mxu0 0
      %835 = vmatprep.subr.bf16.mxu0 0
      %836 = vmatpush1.bf16.msra.mxu0 0
      %837 = vmatprep.subr.bf16.mxu0 0
      %838 = vmatpush1.bf16.msra.mxu0 0
      %839 = vmatprep.subr.bf16.mxu0 0
      %840 = vmatpush1.bf16.msra.mxu0 0
      %841 = vmatprep.subr.bf16.mxu0 0
      %842 = vmatpush1.bf16.msra.mxu0 %v374
      %843 = vmatprep.subr.bf16.mxu0 0
      %844 = vmatpush1.bf16.msra.mxu0 %v373
      %845 = vmatprep.subr.bf16.mxu0 0
      %846 = vmatpush2.bf16.msra.mxu0 0
      %847 = vmatprep.subr.bf16.mxu0 0
      %848 = vmatpush2.bf16.msra.mxu0 0
      %849 = vmatprep.subr.bf16.mxu0 0
      %850 = vmatpush2.bf16.msra.mxu0 0
      %851 = vmatprep.subr.bf16.mxu0 0
      %852 = vmatpush2.bf16.msra.mxu0 0
      %853 = vmatprep.subr.bf16.mxu0 0
      %854 = vmatpush2.bf16.msra.mxu0 0
      %855 = vmatprep.subr.bf16.mxu0 0
      %856 = vmatpush2.bf16.msra.mxu0 0
      %857 = vmatprep.subr.bf16.mxu0 0
      %858 = vmatpush2.bf16.msra.mxu0 0
      %859 = vmatprep.subr.bf16.mxu0 0
      %860 = vmatpush2.bf16.msra.mxu0 0
      %861 = vmatprep.mubr.bf16.mxu0 0
      %862 = vmatmul.mubr.bf16.gmra.mxu0 %v827
      %v863 = vpop.f32.mrf.mxu0
      %v864 = vadd.f32 0.0, %v863
      %v865 = vpop.f32.mrf.mxu0
      %v866 = vpop.f32.mrf.mxu0
      %v867 = vpop.f32.mrf.mxu0
      %868 = vdwg.mxu0
      %v869 = vunpack.c.l.bf16 %v822
      %v870 = vadd.f32 %v869, %v864
      %v871 = vxor.u32 %v870, 2147483648
      %v872 = vmul.f32 %v871, 1.442695
      %v873 = vpow.pop %v872
      %v874 = vadd.f32 %v873, 1.0
      %v875 = vrcp.pop %v874
      %v876 = vmul.f32 1.0, %v875
      %v877 = vtanh.pop %v870
      %879 = vrot.lane.b32.xlu0 %v824, 32
      %v880 = vpop.permute.xlu0 %879
      %v882 = vmul.f32 %v876, %v880
      %884 = vrot.lane.b32.xlu0 %v877, 64
      %v885 = vpop.permute.xlu0 %884
      %v887 = vmul.f32 %v876, %v885
      %889 = vrot.lane.b32.xlu0 %v887, 32
      %v890 = vpop.permute.xlu0 %889
      %v892 = vadd.f32 %v882, %v890
      %v893 = vtanh.pop %v892
      %895 = vrot.lane.b32.xlu0 %v893, 64
      %v896 = vpop.permute.xlu0 %895
      %v898 = vmul.f32 %v876, %v896
      %s899 = sadd.s32 %s357, %s819
      %v900 = vstv %s899
      %vm901 = vcmp.lt.s32.totalorder %v900, %v349
      %v902 = vsel %vm901, 1, 0
      %903 = vset.pattern.permute.xlu0 0
      %904 = vperm.xlu0 %903, %v902
      %v905 = vpop.permute.xlu0 %904
      %vm906 = vcmp.eq.s32.totalorder %v905, 1
      %908 = vrot.lane.b32.xlu0 %v823, 96
      %v909 = vpop.permute.xlu0 %908
      %v911 = vsel %vm906, %v898, %v909
      %913 = vrot.lane.b32.xlu0 %v911, 32
      %v914 = vpop.permute.xlu0 %913
      %916 = vst.msk [vmem:[#allocation2] sm:$0xff] %vm377, %v914
      %v917 = vsel %vm906, %v892, %v880
      %919 = vrot.lane.b32.xlu0 %v917, 96
      %v920 = vpop.permute.xlu0 %919
      %922 = vst.msk [vmem:[#allocation3] sm:$0xff] %vm377, %v920
      %v923 = vsel %vm906, %v898, 0.0
      %925 = vrot.lane.b32.xlu0 %v923, 32
      %v926 = vpop.permute.xlu0 %925
      %s928 = smul.u32 %s819, 8
      %s929 = scalar_lea.vmem %s328, %s928
      %930 = vst.msk [vmem:[%s929] sm:$0xff] %vm377, %v926
      %s931 = scalar_select %p354, 2, 5
      %s932 = smul.addr %s931, 4
      %s933 = scalar_lea.vmem %s307, %s932
      %v934 = vld [vmem:[%s933] sm:$0xf]
      %v935 = vld [vmem:[#allocation2] sm:$0xff]
      %v936 = vld [vmem:[#allocation3] sm:$0xff]
      %v937 = vpack.c.bf16 %v935, %v935
      %v939 = vsel %vm377, %v937, 0
      %941 = vmatprep.subr.bf16.mxu0 0
      %942 = vmatpush1.bf16.msra.mxu0 0
      %943 = vmatprep.subr.bf16.mxu0 0
      %944 = vmatpush1.bf16.msra.mxu0 0
      %945 = vmatprep.subr.bf16.mxu0 0
      %946 = vmatpush1.bf16.msra.mxu0 0
      %947 = vmatprep.subr.bf16.mxu0 0
      %948 = vmatpush1.bf16.msra.mxu0 0
      %949 = vmatprep.subr.bf16.mxu0 0
      %950 = vmatpush1.bf16.msra.mxu0 0
      %951 = vmatprep.subr.bf16.mxu0 0
      %952 = vmatpush1.bf16.msra.mxu0 0
      %953 = vmatprep.subr.bf16.mxu0 0
      %954 = vmatpush1.bf16.msra.mxu0 %v374
      %955 = vmatprep.subr.bf16.mxu0 0
      %956 = vmatpush1.bf16.msra.mxu0 %v373
      %957 = vmatprep.subr.bf16.mxu0 0
      %958 = vmatpush2.bf16.msra.mxu0 0
      %959 = vmatprep.subr.bf16.mxu0 0
      %960 = vmatpush2.bf16.msra.mxu0 0
      %961 = vmatprep.subr.bf16.mxu0 0
      %962 = vmatpush2.bf16.msra.mxu0 0
      %963 = vmatprep.subr.bf16.mxu0 0
      %964 = vmatpush2.bf16.msra.mxu0 0
      %965 = vmatprep.subr.bf16.mxu0 0
      %966 = vmatpush2.bf16.msra.mxu0 0
      %967 = vmatprep.subr.bf16.mxu0 0
      %968 = vmatpush2.bf16.msra.mxu0 0
      %969 = vmatprep.subr.bf16.mxu0 0
      %970 = vmatpush2.bf16.msra.mxu0 0
      %971 = vmatprep.subr.bf16.mxu0 0
      %972 = vmatpush2.bf16.msra.mxu0 0
      %973 = vmatprep.mubr.bf16.mxu0 0
      %974 = vmatmul.mubr.bf16.gmra.mxu0 %v939
      %v975 = vpop.f32.mrf.mxu0
      %v976 = vadd.f32 0.0, %v975
      %v977 = vpop.f32.mrf.mxu0
      %v978 = vpop.f32.mrf.mxu0
      %v979 = vpop.f32.mrf.mxu0
      %980 = vdwg.mxu0
      %v981 = vunpack.c.l.bf16 %v934
      %v982 = vadd.f32 %v981, %v976
      %v983 = vxor.u32 %v982, 2147483648
      %v984 = vmul.f32 %v983, 1.442695
      %v985 = vpow.pop %v984
      %v986 = vadd.f32 %v985, 1.0
      %v987 = vrcp.pop %v986
      %v988 = vmul.f32 1.0, %v987
      %v989 = vtanh.pop %v982
      %991 = vrot.lane.b32.xlu0 %v936, 32
      %v992 = vpop.permute.xlu0 %991
      %v994 = vmul.f32 %v988, %v992
      %996 = vrot.lane.b32.xlu0 %v989, 64
      %v997 = vpop.permute.xlu0 %996
      %v999 = vmul.f32 %v988, %v997
      %1001 = vrot.lane.b32.xlu0 %v999, 32
      %v1002 = vpop.permute.xlu0 %1001
      %v1004 = vadd.f32 %v994, %v1002
      %v1005 = vtanh.pop %v1004
      %1007 = vrot.lane.b32.xlu0 %v1005, 64
      %v1008 = vpop.permute.xlu0 %1007
      %v1010 = vmul.f32 %v988, %v1008
      %s1011 = sadd.s32 %s357, %s931
      %v1012 = vstv %s1011
      %vm1013 = vcmp.lt.s32.totalorder %v1012, %v349
      %v1014 = vsel %vm1013, 1, 0
      %1015 = vset.pattern.permute.xlu0 0
      %1016 = vperm.xlu0 %1015, %v1014
      %v1017 = vpop.permute.xlu0 %1016
      %vm1018 = vcmp.eq.s32.totalorder %v1017, 1
      %1020 = vrot.lane.b32.xlu0 %v935, 96
      %v1021 = vpop.permute.xlu0 %1020
      %v1023 = vsel %vm1018, %v1010, %v1021
      %1025 = vrot.lane.b32.xlu0 %v1023, 32
      %v1026 = vpop.permute.xlu0 %1025
      %1028 = vst.msk [vmem:[#allocation2] sm:$0xff] %vm377, %v1026
      %v1029 = vsel %vm1018, %v1004, %v992
      %1031 = vrot.lane.b32.xlu0 %v1029, 96
      %v1032 = vpop.permute.xlu0 %1031
      %1034 = vst.msk [vmem:[#allocation3] sm:$0xff] %vm377, %v1032
      %v1035 = vsel %vm1018, %v1010, 0.0
      %1037 = vrot.lane.b32.xlu0 %v1035, 32
      %v1038 = vpop.permute.xlu0 %1037
      %s1040 = smul.u32 %s931, 8
      %s1041 = scalar_lea.vmem %s328, %s1040
      %1042 = vst.msk [vmem:[%s1041] sm:$0xff] %vm377, %v1038
      %s1043 = scalar_select %p354, 1, 6
      %s1044 = smul.addr %s1043, 4
      %s1045 = scalar_lea.vmem %s307, %s1044
      %v1046 = vld [vmem:[%s1045] sm:$0xf]
      %v1047 = vld [vmem:[#allocation2] sm:$0xff]
      %v1048 = vld [vmem:[#allocation3] sm:$0xff]
      %v1049 = vpack.c.bf16 %v1047, %v1047
      %v1051 = vsel %vm377, %v1049, 0
      %1053 = vmatprep.subr.bf16.mxu0 0
      %1054 = vmatpush1.bf16.msra.mxu0 0
      %1055 = vmatprep.subr.bf16.mxu0 0
      %1056 = vmatpush1.bf16.msra.mxu0 0
      %1057 = vmatprep.subr.bf16.mxu0 0
      %1058 = vmatpush1.bf16.msra.mxu0 0
      %1059 = vmatprep.subr.bf16.mxu0 0
      %1060 = vmatpush1.bf16.msra.mxu0 0
      %1061 = vmatprep.subr.bf16.mxu0 0
      %1062 = vmatpush1.bf16.msra.mxu0 0
      %1063 = vmatprep.subr.bf16.mxu0 0
      %1064 = vmatpush1.bf16.msra.mxu0 0
      %1065 = vmatprep.subr.bf16.mxu0 0
      %1066 = vmatpush1.bf16.msra.mxu0 %v374
      %1067 = vmatprep.subr.bf16.mxu0 0
      %1068 = vmatpush1.bf16.msra.mxu0 %v373
      %1069 = vmatprep.subr.bf16.mxu0 0
      %1070 = vmatpush2.bf16.msra.mxu0 0
      %1071 = vmatprep.subr.bf16.mxu0 0
      %1072 = vmatpush2.bf16.msra.mxu0 0
      %1073 = vmatprep.subr.bf16.mxu0 0
      %1074 = vmatpush2.bf16.msra.mxu0 0
      %1075 = vmatprep.subr.bf16.mxu0 0
      %1076 = vmatpush2.bf16.msra.mxu0 0
      %1077 = vmatprep.subr.bf16.mxu0 0
      %1078 = vmatpush2.bf16.msra.mxu0 0
      %1079 = vmatprep.subr.bf16.mxu0 0
      %1080 = vmatpush2.bf16.msra.mxu0 0
      %1081 = vmatprep.subr.bf16.mxu0 0
      %1082 = vmatpush2.bf16.msra.mxu0 0
      %1083 = vmatprep.subr.bf16.mxu0 0
      %1084 = vmatpush2.bf16.msra.mxu0 0
      %1085 = vmatprep.mubr.bf16.mxu0 0
      %1086 = vmatmul.mubr.bf16.gmra.mxu0 %v1051
      %v1087 = vpop.f32.mrf.mxu0
      %v1088 = vadd.f32 0.0, %v1087
      %v1089 = vpop.f32.mrf.mxu0
      %v1090 = vpop.f32.mrf.mxu0
      %v1091 = vpop.f32.mrf.mxu0
      %1092 = vdwg.mxu0
      %v1093 = vunpack.c.l.bf16 %v1046
      %v1094 = vadd.f32 %v1093, %v1088
      %v1095 = vxor.u32 %v1094, 2147483648
      %v1096 = vmul.f32 %v1095, 1.442695
      %v1097 = vpow.pop %v1096
      %v1098 = vadd.f32 %v1097, 1.0
      %v1099 = vrcp.pop %v1098
      %v1100 = vmul.f32 1.0, %v1099
      %v1101 = vtanh.pop %v1094
      %1103 = vrot.lane.b32.xlu0 %v1048, 32
      %v1104 = vpop.permute.xlu0 %1103
      %v1106 = vmul.f32 %v1100, %v1104
      %1108 = vrot.lane.b32.xlu0 %v1101, 64
      %v1109 = vpop.permute.xlu0 %1108
      %v1111 = vmul.f32 %v1100, %v1109
      %1113 = vrot.lane.b32.xlu0 %v1111, 32
      %v1114 = vpop.permute.xlu0 %1113
      %v1116 = vadd.f32 %v1106, %v1114
      %v1117 = vtanh.pop %v1116
      %1119 = vrot.lane.b32.xlu0 %v1117, 64
      %v1120 = vpop.permute.xlu0 %1119
      %v1122 = vmul.f32 %v1100, %v1120
      %s1123 = sadd.s32 %s357, %s1043
      %v1124 = vstv %s1123
      %vm1125 = vcmp.lt.s32.totalorder %v1124, %v349
      %v1126 = vsel %vm1125, 1, 0
      %1127 = vset.pattern.permute.xlu0 0
      %1128 = vperm.xlu0 %1127, %v1126
      %v1129 = vpop.permute.xlu0 %1128
      %vm1130 = vcmp.eq.s32.totalorder %v1129, 1
      %1132 = vrot.lane.b32.xlu0 %v1047, 96
      %v1133 = vpop.permute.xlu0 %1132
      %v1135 = vsel %vm1130, %v1122, %v1133
      %1137 = vrot.lane.b32.xlu0 %v1135, 32
      %v1138 = vpop.permute.xlu0 %1137
      %1140 = vst.msk [vmem:[#allocation2] sm:$0xff] %vm377, %v1138
      %v1141 = vsel %vm1130, %v1116, %v1104
      %1143 = vrot.lane.b32.xlu0 %v1141, 96
      %v1144 = vpop.permute.xlu0 %1143
      %1146 = vst.msk [vmem:[#allocation3] sm:$0xff] %vm377, %v1144
      %v1147 = vsel %vm1130, %v1122, 0.0
      %1149 = vrot.lane.b32.xlu0 %v1147, 32
      %v1150 = vpop.permute.xlu0 %1149
      %s1152 = smul.u32 %s1043, 8
      %s1153 = scalar_lea.vmem %s328, %s1152
      %1154 = vst.msk [vmem:[%s1153] sm:$0xff] %vm377, %v1150
      %s1155 = scalar_select %p354, 0, 7
      %s1156 = smul.addr %s1155, 4
      %s1157 = scalar_lea.vmem %s307, %s1156
      %v1158 = vld [vmem:[%s1157] sm:$0xf]
      %v1159 = vld [vmem:[#allocation2] sm:$0xff]
      %v1160 = vld [vmem:[#allocation3] sm:$0xff]
      %v1161 = vpack.c.bf16 %v1159, %v1159
      %v1163 = vsel %vm377, %v1161, 0
      %1165 = vmatprep.subr.bf16.mxu0 0
      %1166 = vmatpush1.bf16.msra.mxu0 0
      %1167 = vmatprep.subr.bf16.mxu0 0
      %1168 = vmatpush1.bf16.msra.mxu0 0
      %1169 = vmatprep.subr.bf16.mxu0 0
      %1170 = vmatpush1.bf16.msra.mxu0 0
      %1171 = vmatprep.subr.bf16.mxu0 0
      %1172 = vmatpush1.bf16.msra.mxu0 0
      %1173 = vmatprep.subr.bf16.mxu0 0
      %1174 = vmatpush1.bf16.msra.mxu0 0
      %1175 = vmatprep.subr.bf16.mxu0 0
      %1176 = vmatpush1.bf16.msra.mxu0 0
      %1177 = vmatprep.subr.bf16.mxu0 0
      %1178 = vmatpush1.bf16.msra.mxu0 %v374
      %1179 = vmatprep.subr.bf16.mxu0 0
      %1180 = vmatpush1.bf16.msra.mxu0 %v373
      %1181 = vmatprep.subr.bf16.mxu0 0
      %1182 = vmatpush2.bf16.msra.mxu0 0
      %1183 = vmatprep.subr.bf16.mxu0 0
      %1184 = vmatpush2.bf16.msra.mxu0 0
      %1185 = vmatprep.subr.bf16.mxu0 0
      %1186 = vmatpush2.bf16.msra.mxu0 0
      %1187 = vmatprep.subr.bf16.mxu0 0
      %1188 = vmatpush2.bf16.msra.mxu0 0
      %1189 = vmatprep.subr.bf16.mxu0 0
      %1190 = vmatpush2.bf16.msra.mxu0 0
      %1191 = vmatprep.subr.bf16.mxu0 0
      %1192 = vmatpush2.bf16.msra.mxu0 0
      %1193 = vmatprep.subr.bf16.mxu0 0
      %1194 = vmatpush2.bf16.msra.mxu0 0
      %1195 = vmatprep.subr.bf16.mxu0 0
      %1196 = vmatpush2.bf16.msra.mxu0 0
      %1197 = vmatprep.mubr.bf16.mxu0 0
      %1198 = vmatmul.mubr.bf16.gmra.mxu0 %v1163
      %v1199 = vpop.f32.mrf.mxu0
      %v1200 = vadd.f32 0.0, %v1199
      %v1201 = vpop.f32.mrf.mxu0
      %v1202 = vpop.f32.mrf.mxu0
      %v1203 = vpop.f32.mrf.mxu0
      %1204 = vdwg.mxu0
      %v1205 = vunpack.c.l.bf16 %v1158
      %v1206 = vadd.f32 %v1205, %v1200
      %v1207 = vxor.u32 %v1206, 2147483648
      %v1208 = vmul.f32 %v1207, 1.442695
      %v1209 = vpow.pop %v1208
      %v1210 = vadd.f32 %v1209, 1.0
      %v1211 = vrcp.pop %v1210
      %v1212 = vmul.f32 1.0, %v1211
      %v1213 = vtanh.pop %v1206
      %1215 = vrot.lane.b32.xlu0 %v1160, 32
      %v1216 = vpop.permute.xlu0 %1215
      %v1218 = vmul.f32 %v1212, %v1216
      %1220 = vrot.lane.b32.xlu0 %v1213, 64
      %v1221 = vpop.permute.xlu0 %1220
      %v1223 = vmul.f32 %v1212, %v1221
      %1225 = vrot.lane.b32.xlu0 %v1223, 32
      %v1226 = vpop.permute.xlu0 %1225
      %v1228 = vadd.f32 %v1218, %v1226
      %v1229 = vtanh.pop %v1228
      %1231 = vrot.lane.b32.xlu0 %v1229, 64
      %v1232 = vpop.permute.xlu0 %1231
      %v1234 = vmul.f32 %v1212, %v1232
      %s1235 = sadd.s32 %s357, %s1155
      %v1236 = vstv %s1235
      %vm1237 = vcmp.lt.s32.totalorder %v1236, %v349
      %v1238 = vsel %vm1237, 1, 0
      %1239 = vset.pattern.permute.xlu0 0
      %1240 = vperm.xlu0 %1239, %v1238
      %v1241 = vpop.permute.xlu0 %1240
      %vm1242 = vcmp.eq.s32.totalorder %v1241, 1
      %1244 = vrot.lane.b32.xlu0 %v1159, 96
      %v1245 = vpop.permute.xlu0 %1244
      %v1247 = vsel %vm1242, %v1234, %v1245
      %1249 = vrot.lane.b32.xlu0 %v1247, 32
      %v1250 = vpop.permute.xlu0 %1249
      %1252 = vst.msk [vmem:[#allocation2] sm:$0xff] %vm377, %v1250
      %v1253 = vsel %vm1242, %v1228, %v1216
      %1255 = vrot.lane.b32.xlu0 %v1253, 96
      %v1256 = vpop.permute.xlu0 %1255
      %1258 = vst.msk [vmem:[#allocation3] sm:$0xff] %vm377, %v1256
      %v1259 = vsel %vm1242, %v1234, 0.0
      %1261 = vrot.lane.b32.xlu0 %v1259, 32
      %v1262 = vpop.permute.xlu0 %1261
      %s1264 = smul.u32 %s1155, 8
      %s1265 = scalar_lea.vmem %s328, %s1264
      %1266 = vst.msk [vmem:[%s1265] sm:$0xff] %vm377, %v1262
      // Predicated region
      $region37: #{lstm_forward.7} parent=31 // pred_check
        %p1267 = pneg %p342
      $region38: #{lstm_forward.7} parent=31 // pred_check_branch
        %1269 = sbr.rel (%p1267) target = $region40
      $region39: #{lstm_forward.7} parent=31 // pred_region
        %v1270 = vld [vmem:[#allocation2] sm:$0xff]
        %1271 = vst.msk [vmem:[%s336] sm:$0xff] %vm377, %v1270
        %v1272 = vld [vmem:[#allocation3] sm:$0xff]
        %1273 = vst.msk [vmem:[%s340] sm:$0xff] %vm377, %v1272
      $region40: #{lstm_forward.7} parent=31 // pred_fallthru
        _
      %s1274 = smul.u32 %s21, 2
      %s1275 = ssub.s32 1, %s1274
      %s1276 = smul.u32 %s1275, %s22
      %s1277 = smul.u32 8, %s1276
      %p1278 = scmp.lt.s32.totalorder %s21, 1
      %s1279 = scalar_select %p1278, %s21, 1
      %p1280 = scmp.lt.s32.totalorder %s1277, 7
      %s1281 = scalar_select %p1280, %s1277, 7
      %s1282 = smul.addr %s1279, 8
      %s1283 = sadd.s32 %s1281, %s1282
      %s1284 = smul.addr %s1283, 8
      %s1285 = scalar_lea.vmem %s3, %s1284
      %p1286 = scmp.lt.s32.totalorder %s21, 1
      %s1287 = scalar_select %p1286, %s21, 1
      %s1288 = smul.addr %s1287, 8
      %s1289 = scalar_lea.vmem %s4, %s1288
      %p1290 = scmp.lt.s32.totalorder %s21, 1
      %s1291 = scalar_select %p1290, %s21, 1
      %s1292 = smul.addr %s1291, 8
      %s1293 = scalar_lea.vmem %s5, %s1292
      // Predicated region
      $region41: #{lstm_forward.7} parent=31 // pred_check
        %p1294 = pneg %p136
      $region42: #{lstm_forward.7} parent=31 // pred_check_branch
        %1296 = sbr.rel (%p1294) target = $region44
      $region43: #{lstm_forward.7} parent=31 // pred_region
        %s1297 = smul.u32 %s21, 2
        %s1298 = ssub.s32 1, %s1297
        %s1299 = smul.u32 %s1298, %s22
        %s1300 = smul.u32 8, %s1299
      $region44: #{lstm_forward.7} parent=31 // pred_fallthru
        _
      // Predicated region
      $region45: #{lstm_forward.7} parent=31 // pred_check
        %p1301 = pneg %p162
      $region46: #{lstm_forward.7} parent=31 // pred_check_branch
        %1303 = sbr.rel (%p1301) target = $region48
      $region47: #{lstm_forward.7} parent=31 // pred_region
        _
      $region48: #{lstm_forward.7} parent=31 // pred_fallthru
        _
      // Predicated region
      $region49: #{lstm_forward.7} parent=31 // pred_check
        %p1304 = pneg %p188
      $region50: #{lstm_forward.7} parent=31 // pred_check_branch
        %1306 = sbr.rel (%p1304) target = $region52
      $region51: #{lstm_forward.7} parent=31 // pred_region
        _
      $region52: #{lstm_forward.7} parent=31 // pred_fallthru
        _
    $region32: #{lstm_forward.7} parent=5 // pred_fallthru
      _
    %p1307 = scmp.le.s32.totalorder 2, %s12
    // Predicated region
    $region53: #{lstm_forward.7} parent=5 // pred_check
      %p1308 = pneg %p1307
    $region54: #{lstm_forward.7} parent=5 // pred_check_branch
      %1310 = sbr.rel (%p1308) target = $region56
    $region55: #{lstm_forward.7} parent=5 // pred_region
      %s1311 = ssub.s32 %s12, 2
      // Predicated region
      $region57: #{lstm_forward.7} parent=55 // pred_check
        %p1312 = pneg %p142
      $region58: #{lstm_forward.7} parent=55 // pred_check_branch
        %1314 = sbr.rel (%p1312) target = $region60
      $region59: #{lstm_forward.7} parent=55 // pred_region
        %s1315 = smul.u32 %s23, 2
        %s1316 = ssub.s32 1, %s1315
        %s1317 = smul.u32 %s1316, %s24
        %s1318 = smul.u32 8, %s1317
        %p1319 = scmp.lt.s32.totalorder %s23, 1
        %s1320 = scalar_select %p1319, %s23, 1
        %p1321 = scmp.lt.s32.totalorder %s1318, 7
        %s1322 = scalar_select %p1321, %s1318, 7
        %s1323 = smul.addr %s1320, 8
        %s1324 = sadd.s32 %s1322, %s1323
        %s1325 = smul.addr %s1324, 8
        %s1326 = scalar_lea.vmem %s3, %s1325
      $region60: #{lstm_forward.7} parent=55 // pred_fallthru
        _
      // Predicated region
      $region61: #{lstm_forward.7} parent=55 // pred_check
        %p1327 = pneg %p168
      $region62: #{lstm_forward.7} parent=55 // pred_check_branch
        %1329 = sbr.rel (%p1327) target = $region64
      $region63: #{lstm_forward.7} parent=55 // pred_region
        %p1330 = scmp.lt.s32.totalorder %s23, 1
        %s1331 = scalar_select %p1330, %s23, 1
        %s1332 = smul.addr %s1331, 8
        %s1333 = scalar_lea.vmem %s4, %s1332
      $region64: #{lstm_forward.7} parent=55 // pred_fallthru
        _
      // Predicated region
      $region65: #{lstm_forward.7} parent=55 // pred_check
        %p1334 = pneg %p194
      $region66: #{lstm_forward.7} parent=55 // pred_check_branch
        %1336 = sbr.rel (%p1334) target = $region68
      $region67: #{lstm_forward.7} parent=55 // pred_region
        %p1337 = scmp.lt.s32.totalorder %s23, 1
        %s1338 = scalar_select %p1337, %s23, 1
        %s1339 = smul.addr %s1338, 8
        %s1340 = scalar_lea.vmem %s5, %s1339
      $region68: #{lstm_forward.7} parent=55 // pred_fallthru
        _
    $region56: #{lstm_forward.7} parent=5 // pred_fallthru
      _
  $region6: #{lstm_forward.7} parent=0 // loop_footer
    %s16 = sadd.s32 1, %s12
  $region7: #{lstm_forward.7} parent=0 // loop_footer_branch
    %11 = sbr.rel target = $region3
  $region8: #{lstm_forward.7} parent=0 // loop_exit
    _

</llo_original>
